<compile_context>
chip_gen: v5e
topology: v5e:2x2
jax: 0.10.0
libtpu: 0.0.40
codegen_flags: <defaults>
</compile_context>

<pallas_src>
import functools

import jax
import jax.numpy as jnp
from jax.experimental import pallas as pl
from jax.experimental.pallas import tpu as pltpu


def _resblock_kernel(x_hbm, w1_ref, b1_ref, w2_ref, b2_ref, o_ref,
                     xbuf, mid_ref, dma_sem, *, ksize, res_scale, W, TH, LPAD):
    # x_hbm  : (B, H + 4p, Wbuf, Cp) zero-padded NHWC input, left in HBM (ANY)
    # w*_ref : (K*K, Cp, Cp) per-tap (Cin, Cout) matrices       (VMEM)
    # b*_ref : (1, Cp)
    # o_ref  : (1, TH, Wc, Cp) output row tile                  (VMEM)
    # xbuf   : (TH + 4p, Wbuf, Cp) scratch, haloed input rows
    # mid_ref: (TH + 2p, Wbuf, Cp) scratch, ReLU(conv1) rows (+ conv2 halo)
    p = ksize // 2
    R1 = TH + 2 * p                        # conv1 rows computed (tile + halo)
    _, _, Wc, Cp = o_ref.shape             # Wc = round_up(W, 8)
    Wm = mid_ref.shape[1]

    b = pl.program_id(0)
    r = pl.program_id(1)
    n_r = pl.num_programs(1)

    # ---- fetch the haloed input rows for this tile: padded rows
    #      [r*TH, r*TH + TH + 4p) of batch b.
    cp = pltpu.make_async_copy(
        x_hbm.at[b, pl.ds(r * TH, TH + 4 * p)], xbuf, dma_sem)
    cp.start()
    cp.wait()

    b1 = b1_ref[...].astype(jnp.float32)   # (1, Cp)
    b2 = b2_ref[...].astype(jnp.float32)

    def conv(src_ref, w_ref, out_rows):
        """KxK conv as K*K per-tap channel matmuls, f32 accumulation.

        One windowed (possibly sublane-realigning) load per dx; dy shifts are
        free outer-row slices of that plane; the (rows, Wc, Cp)->(rows*Wc, Cp)
        reshape is free because Wc % 8 == 0 and Cp fills the 128 lanes.
        """
        acc = jnp.zeros((out_rows * Wc, Cp), jnp.float32)
        for dx in range(ksize):
            cs = LPAD - p + dx
            plane = src_ref[:, cs:cs + Wc, :]
            for dy in range(ksize):
                tap = plane[dy:dy + out_rows].reshape(out_rows * Wc, Cp)
                acc = acc + jnp.dot(tap, w_ref[dy * ksize + dx],
                                    preferred_element_type=jnp.float32)
        return acc                           # (out_rows*Wc, Cp) f32

    # ---- conv1 + bias + ReLU over the tile rows plus conv2's row halo -------
    h = jnp.maximum(conv(xbuf, w1_ref, R1) + b1, 0.0)        # (R1*Wc, Cp) f32
    mid_ref[:, LPAD:LPAD + Wc, :] = h.reshape(R1, Wc, Cp).astype(mid_ref.dtype)

    # conv2's zero padding: p columns on each side of the W valid columns.
    mid_ref[:, LPAD - p:LPAD, :] = jnp.zeros((R1, p, Cp), mid_ref.dtype)
    mid_ref[:, LPAD + W:LPAD + W + p, :] = jnp.zeros((R1, p, Cp), mid_ref.dtype)

    # Rows outside the image (top of first tile / bottom of last tile) are
    # conv2 zero padding, not conv1 outputs.
    @pl.when(r == 0)
    def _():
        mid_ref[0:p, :, :] = jnp.zeros((p, Wm, Cp), mid_ref.dtype)

    @pl.when(r == n_r - 1)
    def _():
        mid_ref[R1 - p:R1, :, :] = jnp.zeros((p, Wm, Cp), mid_ref.dtype)

    # ---- conv2 + bias, residual scale + add ----------------------------------
    res = (conv(mid_ref, w2_ref, TH) + b2) * res_scale
    x_c = xbuf[2 * p:2 * p + TH, LPAD:LPAD + Wc, :].reshape(TH * Wc, Cp)
    o_ref[0] = (res + x_c.astype(jnp.float32)).reshape(TH, Wc, Cp).astype(o_ref.dtype)


def res_block(x_nchw, params, *, res_scale=1.0, row_tile=32):
    """x_nchw: (B, C, H, W).  params: dict from prepare_params()."""
    B, C, H, W = x_nchw.shape
    KK, Cp, _ = params["w1"].shape
    ksize = int(round(KK ** 0.5))
    p = ksize // 2
    LPAD = 8                                    # sublane-aligned left pad (>= p)
    Wc = ((W + 7) // 8) * 8                     # compute width (multiple of 8)
    Wbuf = LPAD + Wc + 8                        # buffer width (>= LPAD + Wc + p)

    TH = max(1, min(row_tile, H))               # row-tile height dividing H
    while H % TH:
        TH -= 1
    n_r = H // TH

    # NCHW -> NHWC; pad channels to Cp lanes, rows by the 2-conv halo (2p each
    # side), columns by LPAD zeros on the left and >= p zeros on the right.
    x = jnp.transpose(x_nchw, (0, 2, 3, 1))
    x = jnp.pad(x, ((0, 0), (2 * p, 2 * p), (LPAD, Wbuf - LPAD - W), (0, Cp - C)))

    kernel = functools.partial(_resblock_kernel, ksize=ksize,
                               res_scale=float(res_scale), W=W, TH=TH, LPAD=LPAD)

    flops = 4 * B * H * W * KK * Cp * Cp        # 2 convs, 2 flops per MAC
    bytes_accessed = int((x.size + B * H * Wc * Cp
                          + 2 * (KK * Cp * Cp + Cp)) * x.dtype.itemsize)

    out = pl.pallas_call(
        kernel,
        out_shape=jax.ShapeDtypeStruct((B, H, Wc, Cp), x_nchw.dtype),
        grid_spec=pltpu.PrefetchScalarGridSpec(
            num_scalar_prefetch=0,
            grid=(B, n_r),
            in_specs=[
                pl.BlockSpec(memory_space=pl.ANY),                     # x (HBM)
                pl.BlockSpec((KK, Cp, Cp), lambda b, r: (0, 0, 0)),    # w1
                pl.BlockSpec((1, Cp), lambda b, r: (0, 0)),            # b1
                pl.BlockSpec((KK, Cp, Cp), lambda b, r: (0, 0, 0)),    # w2
                pl.BlockSpec((1, Cp), lambda b, r: (0, 0)),            # b2
            ],
            out_specs=pl.BlockSpec((1, TH, Wc, Cp), lambda b, r: (b, r, 0, 0)),
            scratch_shapes=[
                pltpu.VMEM((TH + 4 * p, Wbuf, Cp), x_nchw.dtype),  # haloed input
                pltpu.VMEM((TH + 2 * p, Wbuf, Cp), x_nchw.dtype),  # ReLU(conv1)
                pltpu.SemaphoreType.DMA,
            ],
        ),
        compiler_params=pltpu.CompilerParams(
            dimension_semantics=("parallel", "parallel"),
            vmem_limit_bytes=32 * 1024 * 1024),
        cost_estimate=pl.CostEstimate(flops=flops, transcendentals=0,
                                      bytes_accessed=bytes_accessed),
    )(x, params["w1"], params["b1"], params["w2"], params["b2"])

    # drop alignment / channel padding, back to NCHW
    return jnp.transpose(out[:, :, :W, :C], (0, 3, 1, 2))


def prepare_params(w1, b1, w2, b2, *, lane_pad=128, param_dtype=None):
    """Convert PyTorch-layout conv weights into kernel layout.

    w*: (Cout, Cin, K, K), b*: (Cout,).  Returns taps as (K*K, Cin_p, Cout_p)
    so each tap is an `x @ W` matmul, with channels zero-padded to a multiple
    of `lane_pad` (padded bias entries are zero, so padded output channels
    stay exactly zero and are sliced off in the wrapper).  Pass
    param_dtype=jnp.bfloat16 (with bf16 activations) for bf16 MXU operands."""
    C = w1.shape[0]
    K = w1.shape[-1]
    Cp = max(lane_pad, ((C + lane_pad - 1) // lane_pad) * lane_pad)

    def conv_w(w):
        # (Cout, Cin, K, K) -> (K, K, Cin, Cout) -> (K*K, Cin, Cout), zero-pad.
        w = jnp.transpose(w, (2, 3, 1, 0)).reshape(K * K, C, C)
        w = jnp.pad(w, ((0, 0), (0, Cp - C), (0, Cp - C)))
        return w if param_dtype is None else w.astype(param_dtype)

    def conv_b(b):
        b = jnp.pad(b, (0, Cp - C)).reshape(1, Cp)
        return b if param_dtype is None else b.astype(param_dtype)

    return {"w1": conv_w(w1), "b1": conv_b(b1),
            "w2": conv_w(w2), "b2": conv_b(b2)}


def init_raw_params(key, n_feat, ksize, dtype=jnp.float32):
    """Deterministic synthetic init in PyTorch layout (Cout, Cin, K, K)."""
    k1, k2, k3, k4 = jax.random.split(key, 4)
    fan_in = n_feat * ksize * ksize
    scale = 1.0 / jnp.sqrt(jnp.float32(fan_in))
    shape = (n_feat, n_feat, ksize, ksize)
    return {
        "w1": (jax.random.normal(k1, shape) * scale).astype(dtype),
        "b1": (jax.random.normal(k2, (n_feat,)) * 0.1).astype(dtype),
        "w2": (jax.random.normal(k3, shape) * scale).astype(dtype),
        "b2": (jax.random.normal(k4, (n_feat,)) * 0.1).astype(dtype),
    }


def _reference(x, raw, res_scale):
    """Pure-JAX/XLA reference mirroring the PyTorch ResBlock forward."""
    def conv(inp, w, b):
        y = jax.lax.conv_general_dilated(
            inp.astype(jnp.float32), w.astype(jnp.float32),
            window_strides=(1, 1), padding="SAME",
            dimension_numbers=("NCHW", "OIHW", "NCHW"))
        return y + b.astype(jnp.float32)[None, :, None, None]

    h = jax.nn.relu(conv(x, raw["w1"], raw["b1"]))
    res = conv(h, raw["w2"], raw["b2"]) * res_scale
    return (res + x.astype(jnp.float32)).astype(x.dtype)


if __name__ == "__main__":
    key = jax.random.PRNGKey(0)
    kx, kp = jax.random.split(key)

    B, C, H, W = 2, 4, 16, 16
    ksize = 3
    res_scale = 0.5

    x = jax.random.normal(kx, (B, C, H, W), dtype=jnp.float32)
    raw = init_raw_params(kp, C, ksize)
    params = prepare_params(raw["w1"], raw["b1"], raw["w2"], raw["b2"])

    # row_tile=8 -> 2 row tiles per batch: exercises the halo recompute,
    # the top/bottom edge masking and the interior-halo paths.
    out = res_block(x, params, res_scale=res_scale, row_tile=8)
    out = jax.block_until_ready(out)

    ref = _reference(x, raw, res_scale)
    assert out.shape == (B, C, H, W)
    assert jnp.allclose(out, ref, atol=1e-4, rtol=1e-4), "mismatch vs reference"

    print("KERNEL_OK")
</pallas_src>

<mosaic_0001>
module attributes {stable_mosaic.version = 11 : i64} {
  func.func @_resblock_kernel(%arg0: i32, %arg1: i32, %arg2: memref<2x20x32x128xf32, #tpu.memory_space<any>>, %arg3: memref<9x128x128xf32, #tpu.memory_space<vmem>>, %arg4: memref<1x128xf32, #tpu.memory_space<vmem>>, %arg5: memref<9x128x128xf32, #tpu.memory_space<vmem>>, %arg6: memref<1x128xf32, #tpu.memory_space<vmem>>, %arg7: memref<1x8x16x128xf32, #tpu.memory_space<vmem>>, %arg8: memref<12x32x128xf32, #tpu.memory_space<vmem>>, %arg9: memref<10x32x128xf32, #tpu.memory_space<vmem>>, %arg10: memref<!tpu.dma_semaphore, #tpu.memory_space<semaphore_mem>>) attributes {dimension_semantics = [#tpu.dimension_semantics<parallel>, #tpu.dimension_semantics<parallel>], iteration_bounds = array<i64: 2, 2>, scalar_prefetch = 0 : i64, scratch_operands = 3 : i64, tpu.core_type = #tpu.core_type<tc>, window_params = [{}, {pipeline_mode = #tpu.pipeline_mode<synchronous>, transform_indices = @transform_1, window_bounds = array<i64: 9, 128, 128>}, {pipeline_mode = #tpu.pipeline_mode<synchronous>, transform_indices = @transform_2, window_bounds = array<i64: 1, 128>}, {pipeline_mode = #tpu.pipeline_mode<synchronous>, transform_indices = @transform_3, window_bounds = array<i64: 9, 128, 128>}, {pipeline_mode = #tpu.pipeline_mode<synchronous>, transform_indices = @transform_4, window_bounds = array<i64: 1, 128>}, {transform_indices = @transform_5, window_bounds = array<i64: 1, 8, 16, 128>}]} {
    %c8_i32 = arith.constant 8 : i32
    %0 = arith.muli %arg1, %c8_i32 : i32
    %c0_i32 = arith.constant 0 : i32
    %c0_i32_0 = arith.constant 0 : i32
    %1 = tpu.memref_slice %arg2[%arg0, %0, %c0_i32, %c0_i32_0] : memref<2x20x32x128xf32, #tpu.memory_space<any>> -> memref<1x12x32x128xf32, #tpu.memory_space<any>>
    %2 = tpu.memref_squeeze %1 : memref<1x12x32x128xf32, #tpu.memory_space<any>> -> memref<12x32x128xf32, #tpu.memory_space<any>>
    tpu.enqueue_dma source(%2 : memref<12x32x128xf32, #tpu.memory_space<any>>) target(%arg8 : memref<12x32x128xf32, #tpu.memory_space<vmem>>) target_semaphore(%arg10 : memref<!tpu.dma_semaphore, #tpu.memory_space<semaphore_mem>>)
    %c0_i32_1 = arith.constant 0 : i32
    %c0_i32_2 = arith.constant 0 : i32
    %3 = tpu.memref_slice %arg2[%arg0, %0, %c0_i32_1, %c0_i32_2] : memref<2x20x32x128xf32, #tpu.memory_space<any>> -> memref<1x12x32x128xf32, #tpu.memory_space<any>>
    %4 = tpu.memref_squeeze %3 : memref<1x12x32x128xf32, #tpu.memory_space<any>> -> memref<12x32x128xf32, #tpu.memory_space<any>>
    tpu.wait_dma2 semaphore(%arg10 : memref<!tpu.dma_semaphore, #tpu.memory_space<semaphore_mem>>) src(%4 : memref<12x32x128xf32, #tpu.memory_space<any>>) dst(%arg8 : memref<12x32x128xf32, #tpu.memory_space<vmem>>)
    %c0 = arith.constant 0 : index
    %c0_3 = arith.constant 0 : index
    %5 = vector.load %arg4[%c0, %c0_3] : memref<1x128xf32, #tpu.memory_space<vmem>>, vector<1x128xf32>
    %c0_4 = arith.constant 0 : index
    %c0_5 = arith.constant 0 : index
    %6 = vector.load %arg6[%c0_4, %c0_5] : memref<1x128xf32, #tpu.memory_space<vmem>>, vector<1x128xf32>
    %cst = arith.constant 0.000000e+00 : f32
    %7 = vector.broadcast %cst : f32 to vector<160x128xf32>
    %c0_6 = arith.constant 0 : index
    %c7 = arith.constant 7 : index
    %c0_7 = arith.constant 0 : index
    %8 = vector.load %arg8[%c0_6, %c7, %c0_7] : memref<12x32x128xf32, #tpu.memory_space<vmem>>, vector<12x16x128xf32>
    %9 = vector.extract_strided_slice %8 {offsets = [0, 0, 0], sizes = [10, 16, 128], strides = [1, 1, 1]} : vector<12x16x128xf32> to vector<10x16x128xf32>
    %10 = vector.shape_cast %9 : vector<10x16x128xf32> to vector<160x128xf32>
    %c0_8 = arith.constant 0 : index
    %c0_9 = arith.constant 0 : index
    %c0_10 = arith.constant 0 : index
    %11 = vector.load %arg3[%c0_8, %c0_9, %c0_10] : memref<9x128x128xf32, #tpu.memory_space<vmem>>, vector<1x128x128xf32>
    %12 = vector.shape_cast %11 : vector<1x128x128xf32> to vector<128x128xf32>
    %cst_11 = arith.constant dense<0.000000e+00> : vector<160x128xf32>
    %13 = tpu.matmul %10, %12, %cst_11 {dimension_numbers = #tpu.dot_dimension_numbers<[1], [0], [0], [1], [0, 0, 1, 1], [], []>} : vector<160x128xf32>, vector<128x128xf32>, vector<160x128xf32> -> vector<160x128xf32>
    %14 = arith.addf %7, %13 : vector<160x128xf32>
    %15 = vector.extract_strided_slice %8 {offsets = [1, 0, 0], sizes = [10, 16, 128], strides = [1, 1, 1]} : vector<12x16x128xf32> to vector<10x16x128xf32>
    %16 = vector.shape_cast %15 : vector<10x16x128xf32> to vector<160x128xf32>
    %c3 = arith.constant 3 : index
    %c0_12 = arith.constant 0 : index
    %c0_13 = arith.constant 0 : index
    %17 = vector.load %arg3[%c3, %c0_12, %c0_13] : memref<9x128x128xf32, #tpu.memory_space<vmem>>, vector<1x128x128xf32>
    %18 = vector.shape_cast %17 : vector<1x128x128xf32> to vector<128x128xf32>
    %cst_14 = arith.constant dense<0.000000e+00> : vector<160x128xf32>
    %19 = tpu.matmul %16, %18, %cst_14 {dimension_numbers = #tpu.dot_dimension_numbers<[1], [0], [0], [1], [0, 0, 1, 1], [], []>} : vector<160x128xf32>, vector<128x128xf32>, vector<160x128xf32> -> vector<160x128xf32>
    %20 = arith.addf %14, %19 : vector<160x128xf32>
    %21 = vector.extract_strided_slice %8 {offsets = [2, 0, 0], sizes = [10, 16, 128], strides = [1, 1, 1]} : vector<12x16x128xf32> to vector<10x16x128xf32>
    %22 = vector.shape_cast %21 : vector<10x16x128xf32> to vector<160x128xf32>
    %c6 = arith.constant 6 : index
    %c0_15 = arith.constant 0 : index
    %c0_16 = arith.constant 0 : index
    %23 = vector.load %arg3[%c6, %c0_15, %c0_16] : memref<9x128x128xf32, #tpu.memory_space<vmem>>, vector<1x128x128xf32>
    %24 = vector.shape_cast %23 : vector<1x128x128xf32> to vector<128x128xf32>
    %cst_17 = arith.constant dense<0.000000e+00> : vector<160x128xf32>
    %25 = tpu.matmul %22, %24, %cst_17 {dimension_numbers = #tpu.dot_dimension_numbers<[1], [0], [0], [1], [0, 0, 1, 1], [], []>} : vector<160x128xf32>, vector<128x128xf32>, vector<160x128xf32> -> vector<160x128xf32>
    %26 = arith.addf %20, %25 : vector<160x128xf32>
    %c0_18 = arith.constant 0 : index
    %c8 = arith.constant 8 : index
    %c0_19 = arith.constant 0 : index
    %27 = vector.load %arg8[%c0_18, %c8, %c0_19] : memref<12x32x128xf32, #tpu.memory_space<vmem>>, vector<12x16x128xf32>
    %28 = vector.extract_strided_slice %27 {offsets = [0, 0, 0], sizes = [10, 16, 128], strides = [1, 1, 1]} : vector<12x16x128xf32> to vector<10x16x128xf32>
    %29 = vector.shape_cast %28 : vector<10x16x128xf32> to vector<160x128xf32>
    %c1 = arith.constant 1 : index
    %c0_20 = arith.constant 0 : index
    %c0_21 = arith.constant 0 : index
    %30 = vector.load %arg3[%c1, %c0_20, %c0_21] : memref<9x128x128xf32, #tpu.memory_space<vmem>>, vector<1x128x128xf32>
    %31 = vector.shape_cast %30 : vector<1x128x128xf32> to vector<128x128xf32>
    %cst_22 = arith.constant dense<0.000000e+00> : vector<160x128xf32>
    %32 = tpu.matmul %29, %31, %cst_22 {dimension_numbers = #tpu.dot_dimension_numbers<[1], [0], [0], [1], [0, 0, 1, 1], [], []>} : vector<160x128xf32>, vector<128x128xf32>, vector<160x128xf32> -> vector<160x128xf32>
    %33 = arith.addf %26, %32 : vector<160x128xf32>
    %34 = vector.extract_strided_slice %27 {offsets = [1, 0, 0], sizes = [10, 16, 128], strides = [1, 1, 1]} : vector<12x16x128xf32> to vector<10x16x128xf32>
    %35 = vector.shape_cast %34 : vector<10x16x128xf32> to vector<160x128xf32>
    %c4 = arith.constant 4 : index
    %c0_23 = arith.constant 0 : index
    %c0_24 = arith.constant 0 : index
    %36 = vector.load %arg3[%c4, %c0_23, %c0_24] : memref<9x128x128xf32, #tpu.memory_space<vmem>>, vector<1x128x128xf32>
    %37 = vector.shape_cast %36 : vector<1x128x128xf32> to vector<128x128xf32>
    %cst_25 = arith.constant dense<0.000000e+00> : vector<160x128xf32>
    %38 = tpu.matmul %35, %37, %cst_25 {dimension_numbers = #tpu.dot_dimension_numbers<[1], [0], [0], [1], [0, 0, 1, 1], [], []>} : vector<160x128xf32>, vector<128x128xf32>, vector<160x128xf32> -> vector<160x128xf32>
    %39 = arith.addf %33, %38 : vector<160x128xf32>
    %40 = vector.extract_strided_slice %27 {offsets = [2, 0, 0], sizes = [10, 16, 128], strides = [1, 1, 1]} : vector<12x16x128xf32> to vector<10x16x128xf32>
    %41 = vector.shape_cast %40 : vector<10x16x128xf32> to vector<160x128xf32>
    %c7_26 = arith.constant 7 : index
    %c0_27 = arith.constant 0 : index
    %c0_28 = arith.constant 0 : index
    %42 = vector.load %arg3[%c7_26, %c0_27, %c0_28] : memref<9x128x128xf32, #tpu.memory_space<vmem>>, vector<1x128x128xf32>
    %43 = vector.shape_cast %42 : vector<1x128x128xf32> to vector<128x128xf32>
    %cst_29 = arith.constant dense<0.000000e+00> : vector<160x128xf32>
    %44 = tpu.matmul %41, %43, %cst_29 {dimension_numbers = #tpu.dot_dimension_numbers<[1], [0], [0], [1], [0, 0, 1, 1], [], []>} : vector<160x128xf32>, vector<128x128xf32>, vector<160x128xf32> -> vector<160x128xf32>
    %45 = arith.addf %39, %44 : vector<160x128xf32>
    %c0_30 = arith.constant 0 : index
    %c9 = arith.constant 9 : index
    %c0_31 = arith.constant 0 : index
    %46 = vector.load %arg8[%c0_30, %c9, %c0_31] : memref<12x32x128xf32, #tpu.memory_space<vmem>>, vector<12x16x128xf32>
    %47 = vector.extract_strided_slice %46 {offsets = [0, 0, 0], sizes = [10, 16, 128], strides = [1, 1, 1]} : vector<12x16x128xf32> to vector<10x16x128xf32>
    %48 = vector.shape_cast %47 : vector<10x16x128xf32> to vector<160x128xf32>
    %c2 = arith.constant 2 : index
    %c0_32 = arith.constant 0 : index
    %c0_33 = arith.constant 0 : index
    %49 = vector.load %arg3[%c2, %c0_32, %c0_33] : memref<9x128x128xf32, #tpu.memory_space<vmem>>, vector<1x128x128xf32>
    %50 = vector.shape_cast %49 : vector<1x128x128xf32> to vector<128x128xf32>
    %cst_34 = arith.constant dense<0.000000e+00> : vector<160x128xf32>
    %51 = tpu.matmul %48, %50, %cst_34 {dimension_numbers = #tpu.dot_dimension_numbers<[1], [0], [0], [1], [0, 0, 1, 1], [], []>} : vector<160x128xf32>, vector<128x128xf32>, vector<160x128xf32> -> vector<160x128xf32>
    %52 = arith.addf %45, %51 : vector<160x128xf32>
    %53 = vector.extract_strided_slice %46 {offsets = [1, 0, 0], sizes = [10, 16, 128], strides = [1, 1, 1]} : vector<12x16x128xf32> to vector<10x16x128xf32>
    %54 = vector.shape_cast %53 : vector<10x16x128xf32> to vector<160x128xf32>
    %c5 = arith.constant 5 : index
    %c0_35 = arith.constant 0 : index
    %c0_36 = arith.constant 0 : index
    %55 = vector.load %arg3[%c5, %c0_35, %c0_36] : memref<9x128x128xf32, #tpu.memory_space<vmem>>, vector<1x128x128xf32>
    %56 = vector.shape_cast %55 : vector<1x128x128xf32> to vector<128x128xf32>
    %cst_37 = arith.constant dense<0.000000e+00> : vector<160x128xf32>
    %57 = tpu.matmul %54, %56, %cst_37 {dimension_numbers = #tpu.dot_dimension_numbers<[1], [0], [0], [1], [0, 0, 1, 1], [], []>} : vector<160x128xf32>, vector<128x128xf32>, vector<160x128xf32> -> vector<160x128xf32>
    %58 = arith.addf %52, %57 : vector<160x128xf32>
    %59 = vector.extract_strided_slice %46 {offsets = [2, 0, 0], sizes = [10, 16, 128], strides = [1, 1, 1]} : vector<12x16x128xf32> to vector<10x16x128xf32>
    %60 = vector.shape_cast %59 : vector<10x16x128xf32> to vector<160x128xf32>
    %c8_38 = arith.constant 8 : index
    %c0_39 = arith.constant 0 : index
    %c0_40 = arith.constant 0 : index
    %61 = vector.load %arg3[%c8_38, %c0_39, %c0_40] : memref<9x128x128xf32, #tpu.memory_space<vmem>>, vector<1x128x128xf32>
    %62 = vector.shape_cast %61 : vector<1x128x128xf32> to vector<128x128xf32>
    %cst_41 = arith.constant dense<0.000000e+00> : vector<160x128xf32>
    %63 = tpu.matmul %60, %62, %cst_41 {dimension_numbers = #tpu.dot_dimension_numbers<[1], [0], [0], [1], [0, 0, 1, 1], [], []>} : vector<160x128xf32>, vector<128x128xf32>, vector<160x128xf32> -> vector<160x128xf32>
    %64 = arith.addf %58, %63 : vector<160x128xf32>
    %65 = vector.broadcast %5 : vector<1x128xf32> to vector<160x128xf32>
    %66 = arith.addf %64, %65 : vector<160x128xf32>
    %cst_42 = arith.constant 0.000000e+00 : f32
    %67 = vector.broadcast %cst_42 : f32 to vector<160x128xf32>
    %68 = arith.maximumf %66, %67 : vector<160x128xf32>
    %69 = vector.shape_cast %68 : vector<160x128xf32> to vector<10x16x128xf32>
    %c0_43 = arith.constant 0 : index
    %c8_44 = arith.constant 8 : index
    %c0_45 = arith.constant 0 : index
    %70 = vector.load %arg9[%c0_43, %c8_44, %c0_45] : memref<10x32x128xf32, #tpu.memory_space<vmem>>, vector<10x16x128xf32>
    tpu.vector_store %arg9[%c0_43, %c8_44, %c0_45], %69 {strides = array<i32>} : memref<10x32x128xf32, #tpu.memory_space<vmem>>, vector<10x16x128xf32>,
    %cst_46 = arith.constant 0.000000e+00 : f32
    %71 = vector.broadcast %cst_46 : f32 to vector<10x1x128xf32>
    %c0_47 = arith.constant 0 : index
    %c7_48 = arith.constant 7 : index
    %c0_49 = arith.constant 0 : index
    %72 = vector.load %arg9[%c0_47, %c7_48, %c0_49] : memref<10x32x128xf32, #tpu.memory_space<vmem>>, vector<10x1x128xf32>
    tpu.vector_store %arg9[%c0_47, %c7_48, %c0_49], %71 {strides = array<i32>} : memref<10x32x128xf32, #tpu.memory_space<vmem>>, vector<10x1x128xf32>,
    %cst_50 = arith.constant 0.000000e+00 : f32
    %73 = vector.broadcast %cst_50 : f32 to vector<10x1x128xf32>
    %c0_51 = arith.constant 0 : index
    %c24 = arith.constant 24 : index
    %c0_52 = arith.constant 0 : index
    %74 = vector.load %arg9[%c0_51, %c24, %c0_52] : memref<10x32x128xf32, #tpu.memory_space<vmem>>, vector<10x1x128xf32>
    tpu.vector_store %arg9[%c0_51, %c24, %c0_52], %73 {strides = array<i32>} : memref<10x32x128xf32, #tpu.memory_space<vmem>>, vector<10x1x128xf32>,
    %c0_i32_53 = arith.constant 0 : i32
    %75 = arith.cmpi eq, %arg1, %c0_i32_53 : i32
    %76 = arith.extui %75 : i1 to i32
    %c0_i32_54 = arith.constant 0 : i32
    %77 = arith.cmpi ne, %76, %c0_i32_54 : i32
    scf.if %77 {
      %cst_110 = arith.constant 0.000000e+00 : f32
      %150 = vector.broadcast %cst_110 : f32 to vector<1x32x128xf32>
      %c0_111 = arith.constant 0 : index
      %c0_112 = arith.constant 0 : index
      %c0_113 = arith.constant 0 : index
      %151 = vector.load %arg9[%c0_111, %c0_112, %c0_113] : memref<10x32x128xf32, #tpu.memory_space<vmem>>, vector<1x32x128xf32>
      tpu.vector_store %arg9[%c0_111, %c0_112, %c0_113], %150 {strides = array<i32>} : memref<10x32x128xf32, #tpu.memory_space<vmem>>, vector<1x32x128xf32>,
    } else {
    }
    %c1_i32 = arith.constant 1 : i32
    %78 = arith.cmpi eq, %arg1, %c1_i32 : i32
    %79 = arith.extui %78 : i1 to i32
    %c0_i32_55 = arith.constant 0 : i32
    %80 = arith.cmpi ne, %79, %c0_i32_55 : i32
    scf.if %80 {
      %cst_110 = arith.constant 0.000000e+00 : f32
      %150 = vector.broadcast %cst_110 : f32 to vector<1x32x128xf32>
      %c9_111 = arith.constant 9 : index
      %c0_112 = arith.constant 0 : index
      %c0_113 = arith.constant 0 : index
      %151 = vector.load %arg9[%c9_111, %c0_112, %c0_113] : memref<10x32x128xf32, #tpu.memory_space<vmem>>, vector<1x32x128xf32>
      tpu.vector_store %arg9[%c9_111, %c0_112, %c0_113], %150 {strides = array<i32>} : memref<10x32x128xf32, #tpu.memory_space<vmem>>, vector<1x32x128xf32>,
    } else {
    }
    %cst_56 = arith.constant 0.000000e+00 : f32
    %81 = vector.broadcast %cst_56 : f32 to vector<128x128xf32>
    %c0_57 = arith.constant 0 : index
    %c7_58 = arith.constant 7 : index
    %c0_59 = arith.constant 0 : index
    %82 = vector.load %arg9[%c0_57, %c7_58, %c0_59] : memref<10x32x128xf32, #tpu.memory_space<vmem>>, vector<10x16x128xf32>
    %83 = vector.extract_strided_slice %82 {offsets = [0, 0, 0], sizes = [8, 16, 128], strides = [1, 1, 1]} : vector<10x16x128xf32> to vector<8x16x128xf32>
    %84 = vector.shape_cast %83 : vector<8x16x128xf32> to vector<128x128xf32>
    %c0_60 = arith.constant 0 : index
    %c0_61 = arith.constant 0 : index
    %c0_62 = arith.constant 0 : index
    %85 = vector.load %arg5[%c0_60, %c0_61, %c0_62] : memref<9x128x128xf32, #tpu.memory_space<vmem>>, vector<1x128x128xf32>
    %86 = vector.shape_cast %85 : vector<1x128x128xf32> to vector<128x128xf32>
    %cst_63 = arith.constant dense<0.000000e+00> : vector<128x128xf32>
    %87 = tpu.matmul %84, %86, %cst_63 {dimension_numbers = #tpu.dot_dimension_numbers<[1], [0], [0], [1], [0, 0, 1, 1], [], []>} : vector<128x128xf32>, vector<128x128xf32>, vector<128x128xf32> -> vector<128x128xf32>
    %88 = arith.addf %81, %87 : vector<128x128xf32>
    %89 = vector.extract_strided_slice %82 {offsets = [1, 0, 0], sizes = [8, 16, 128], strides = [1, 1, 1]} : vector<10x16x128xf32> to vector<8x16x128xf32>
    %90 = vector.shape_cast %89 : vector<8x16x128xf32> to vector<128x128xf32>
    %c3_64 = arith.constant 3 : index
    %c0_65 = arith.constant 0 : index
    %c0_66 = arith.constant 0 : index
    %91 = vector.load %arg5[%c3_64, %c0_65, %c0_66] : memref<9x128x128xf32, #tpu.memory_space<vmem>>, vector<1x128x128xf32>
    %92 = vector.shape_cast %91 : vector<1x128x128xf32> to vector<128x128xf32>
    %cst_67 = arith.constant dense<0.000000e+00> : vector<128x128xf32>
    %93 = tpu.matmul %90, %92, %cst_67 {dimension_numbers = #tpu.dot_dimension_numbers<[1], [0], [0], [1], [0, 0, 1, 1], [], []>} : vector<128x128xf32>, vector<128x128xf32>, vector<128x128xf32> -> vector<128x128xf32>
    %94 = arith.addf %88, %93 : vector<128x128xf32>
    %95 = vector.extract_strided_slice %82 {offsets = [2, 0, 0], sizes = [8, 16, 128], strides = [1, 1, 1]} : vector<10x16x128xf32> to vector<8x16x128xf32>
    %96 = vector.shape_cast %95 : vector<8x16x128xf32> to vector<128x128xf32>
    %c6_68 = arith.constant 6 : index
    %c0_69 = arith.constant 0 : index
    %c0_70 = arith.constant 0 : index
    %97 = vector.load %arg5[%c6_68, %c0_69, %c0_70] : memref<9x128x128xf32, #tpu.memory_space<vmem>>, vector<1x128x128xf32>
    %98 = vector.shape_cast %97 : vector<1x128x128xf32> to vector<128x128xf32>
    %cst_71 = arith.constant dense<0.000000e+00> : vector<128x128xf32>
    %99 = tpu.matmul %96, %98, %cst_71 {dimension_numbers = #tpu.dot_dimension_numbers<[1], [0], [0], [1], [0, 0, 1, 1], [], []>} : vector<128x128xf32>, vector<128x128xf32>, vector<128x128xf32> -> vector<128x128xf32>
    %100 = arith.addf %94, %99 : vector<128x128xf32>
    %c0_72 = arith.constant 0 : index
    %c8_73 = arith.constant 8 : index
    %c0_74 = arith.constant 0 : index
    %101 = vector.load %arg9[%c0_72, %c8_73, %c0_74] : memref<10x32x128xf32, #tpu.memory_space<vmem>>, vector<10x16x128xf32>
    %102 = vector.extract_strided_slice %101 {offsets = [0, 0, 0], sizes = [8, 16, 128], strides = [1, 1, 1]} : vector<10x16x128xf32> to vector<8x16x128xf32>
    %103 = vector.shape_cast %102 : vector<8x16x128xf32> to vector<128x128xf32>
    %c1_75 = arith.constant 1 : index
    %c0_76 = arith.constant 0 : index
    %c0_77 = arith.constant 0 : index
    %104 = vector.load %arg5[%c1_75, %c0_76, %c0_77] : memref<9x128x128xf32, #tpu.memory_space<vmem>>, vector<1x128x128xf32>
    %105 = vector.shape_cast %104 : vector<1x128x128xf32> to vector<128x128xf32>
    %cst_78 = arith.constant dense<0.000000e+00> : vector<128x128xf32>
    %106 = tpu.matmul %103, %105, %cst_78 {dimension_numbers = #tpu.dot_dimension_numbers<[1], [0], [0], [1], [0, 0, 1, 1], [], []>} : vector<128x128xf32>, vector<128x128xf32>, vector<128x128xf32> -> vector<128x128xf32>
    %107 = arith.addf %100, %106 : vector<128x128xf32>
    %108 = vector.extract_strided_slice %101 {offsets = [1, 0, 0], sizes = [8, 16, 128], strides = [1, 1, 1]} : vector<10x16x128xf32> to vector<8x16x128xf32>
    %109 = vector.shape_cast %108 : vector<8x16x128xf32> to vector<128x128xf32>
    %c4_79 = arith.constant 4 : index
    %c0_80 = arith.constant 0 : index
    %c0_81 = arith.constant 0 : index
    %110 = vector.load %arg5[%c4_79, %c0_80, %c0_81] : memref<9x128x128xf32, #tpu.memory_space<vmem>>, vector<1x128x128xf32>
    %111 = vector.shape_cast %110 : vector<1x128x128xf32> to vector<128x128xf32>
    %cst_82 = arith.constant dense<0.000000e+00> : vector<128x128xf32>
    %112 = tpu.matmul %109, %111, %cst_82 {dimension_numbers = #tpu.dot_dimension_numbers<[1], [0], [0], [1], [0, 0, 1, 1], [], []>} : vector<128x128xf32>, vector<128x128xf32>, vector<128x128xf32> -> vector<128x128xf32>
    %113 = arith.addf %107, %112 : vector<128x128xf32>
    %114 = vector.extract_strided_slice %101 {offsets = [2, 0, 0], sizes = [8, 16, 128], strides = [1, 1, 1]} : vector<10x16x128xf32> to vector<8x16x128xf32>
    %115 = vector.shape_cast %114 : vector<8x16x128xf32> to vector<128x128xf32>
    %c7_83 = arith.constant 7 : index
    %c0_84 = arith.constant 0 : index
    %c0_85 = arith.constant 0 : index
    %116 = vector.load %arg5[%c7_83, %c0_84, %c0_85] : memref<9x128x128xf32, #tpu.memory_space<vmem>>, vector<1x128x128xf32>
    %117 = vector.shape_cast %116 : vector<1x128x128xf32> to vector<128x128xf32>
    %cst_86 = arith.constant dense<0.000000e+00> : vector<128x128xf32>
    %118 = tpu.matmul %115, %117, %cst_86 {dimension_numbers = #tpu.dot_dimension_numbers<[1], [0], [0], [1], [0, 0, 1, 1], [], []>} : vector<128x128xf32>, vector<128x128xf32>, vector<128x128xf32> -> vector<128x128xf32>
    %119 = arith.addf %113, %118 : vector<128x128xf32>
    %c0_87 = arith.constant 0 : index
    %c9_88 = arith.constant 9 : index
    %c0_89 = arith.constant 0 : index
    %120 = vector.load %arg9[%c0_87, %c9_88, %c0_89] : memref<10x32x128xf32, #tpu.memory_space<vmem>>, vector<10x16x128xf32>
    %121 = vector.extract_strided_slice %120 {offsets = [0, 0, 0], sizes = [8, 16, 128], strides = [1, 1, 1]} : vector<10x16x128xf32> to vector<8x16x128xf32>
    %122 = vector.shape_cast %121 : vector<8x16x128xf32> to vector<128x128xf32>
    %c2_90 = arith.constant 2 : index
    %c0_91 = arith.constant 0 : index
    %c0_92 = arith.constant 0 : index
    %123 = vector.load %arg5[%c2_90, %c0_91, %c0_92] : memref<9x128x128xf32, #tpu.memory_space<vmem>>, vector<1x128x128xf32>
    %124 = vector.shape_cast %123 : vector<1x128x128xf32> to vector<128x128xf32>
    %cst_93 = arith.constant dense<0.000000e+00> : vector<128x128xf32>
    %125 = tpu.matmul %122, %124, %cst_93 {dimension_numbers = #tpu.dot_dimension_numbers<[1], [0], [0], [1], [0, 0, 1, 1], [], []>} : vector<128x128xf32>, vector<128x128xf32>, vector<128x128xf32> -> vector<128x128xf32>
    %126 = arith.addf %119, %125 : vector<128x128xf32>
    %127 = vector.extract_strided_slice %120 {offsets = [1, 0, 0], sizes = [8, 16, 128], strides = [1, 1, 1]} : vector<10x16x128xf32> to vector<8x16x128xf32>
    %128 = vector.shape_cast %127 : vector<8x16x128xf32> to vector<128x128xf32>
    %c5_94 = arith.constant 5 : index
    %c0_95 = arith.constant 0 : index
    %c0_96 = arith.constant 0 : index
    %129 = vector.load %arg5[%c5_94, %c0_95, %c0_96] : memref<9x128x128xf32, #tpu.memory_space<vmem>>, vector<1x128x128xf32>
    %130 = vector.shape_cast %129 : vector<1x128x128xf32> to vector<128x128xf32>
    %cst_97 = arith.constant dense<0.000000e+00> : vector<128x128xf32>
    %131 = tpu.matmul %128, %130, %cst_97 {dimension_numbers = #tpu.dot_dimension_numbers<[1], [0], [0], [1], [0, 0, 1, 1], [], []>} : vector<128x128xf32>, vector<128x128xf32>, vector<128x128xf32> -> vector<128x128xf32>
    %132 = arith.addf %126, %131 : vector<128x128xf32>
    %133 = vector.extract_strided_slice %120 {offsets = [2, 0, 0], sizes = [8, 16, 128], strides = [1, 1, 1]} : vector<10x16x128xf32> to vector<8x16x128xf32>
    %134 = vector.shape_cast %133 : vector<8x16x128xf32> to vector<128x128xf32>
    %c8_98 = arith.constant 8 : index
    %c0_99 = arith.constant 0 : index
    %c0_100 = arith.constant 0 : index
    %135 = vector.load %arg5[%c8_98, %c0_99, %c0_100] : memref<9x128x128xf32, #tpu.memory_space<vmem>>, vector<1x128x128xf32>
    %136 = vector.shape_cast %135 : vector<1x128x128xf32> to vector<128x128xf32>
    %cst_101 = arith.constant dense<0.000000e+00> : vector<128x128xf32>
    %137 = tpu.matmul %134, %136, %cst_101 {dimension_numbers = #tpu.dot_dimension_numbers<[1], [0], [0], [1], [0, 0, 1, 1], [], []>} : vector<128x128xf32>, vector<128x128xf32>, vector<128x128xf32> -> vector<128x128xf32>
    %138 = arith.addf %132, %137 : vector<128x128xf32>
    %139 = vector.broadcast %6 : vector<1x128xf32> to vector<128x128xf32>
    %140 = arith.addf %138, %139 : vector<128x128xf32>
    %cst_102 = arith.constant 5.000000e-01 : f32
    %141 = vector.broadcast %cst_102 : f32 to vector<128x128xf32>
    %142 = arith.mulf %140, %141 : vector<128x128xf32>
    %c2_103 = arith.constant 2 : index
    %c8_104 = arith.constant 8 : index
    %c0_105 = arith.constant 0 : index
    %143 = vector.load %arg8[%c2_103, %c8_104, %c0_105] : memref<12x32x128xf32, #tpu.memory_space<vmem>>, vector<8x16x128xf32>
    %144 = vector.shape_cast %143 : vector<8x16x128xf32> to vector<128x128xf32>
    %145 = arith.addf %142, %144 : vector<128x128xf32>
    %146 = vector.shape_cast %145 : vector<128x128xf32> to vector<8x16x128xf32>
    %c0_106 = arith.constant 0 : index
    %c0_107 = arith.constant 0 : index
    %c0_108 = arith.constant 0 : index
    %c0_109 = arith.constant 0 : index
    %147 = vector.load %arg7[%c0_106, %c0_107, %c0_108, %c0_109] : memref<1x8x16x128xf32, #tpu.memory_space<vmem>>, vector<1x8x16x128xf32>
    %148 = vector.shape_cast %147 : vector<1x8x16x128xf32> to vector<8x16x128xf32>
    %149 = vector.shape_cast %146 : vector<8x16x128xf32> to vector<1x8x16x128xf32>
    tpu.vector_store %arg7[%c0_106, %c0_107, %c0_108, %c0_109], %149 {strides = array<i32>} : memref<1x8x16x128xf32, #tpu.memory_space<vmem>>, vector<1x8x16x128xf32>,
    return
  }
  func.func @transform_1(%arg0: i32, %arg1: i32) -> (i32, i32, i32) {
    %c0_i32 = arith.constant 0 : i32
    %c0_i32_0 = arith.constant 0 : i32
    %c0_i32_1 = arith.constant 0 : i32
    %c0_i32_2 = arith.constant 0 : i32
    return %c0_i32, %c0_i32_0, %c0_i32_1 : i32, i32, i32
  }
  func.func @transform_2(%arg0: i32, %arg1: i32) -> (i32, i32) {
    %c0_i32 = arith.constant 0 : i32
    %c0_i32_0 = arith.constant 0 : i32
    %c0_i32_1 = arith.constant 0 : i32
    return %c0_i32, %c0_i32_0 : i32, i32
  }
  func.func @transform_3(%arg0: i32, %arg1: i32) -> (i32, i32, i32) {
    %c0_i32 = arith.constant 0 : i32
    %c0_i32_0 = arith.constant 0 : i32
    %c0_i32_1 = arith.constant 0 : i32
    %c0_i32_2 = arith.constant 0 : i32
    return %c0_i32, %c0_i32_0, %c0_i32_1 : i32, i32, i32
  }
  func.func @transform_4(%arg0: i32, %arg1: i32) -> (i32, i32) {
    %c0_i32 = arith.constant 0 : i32
    %c0_i32_0 = arith.constant 0 : i32
    %c0_i32_1 = arith.constant 0 : i32
    return %c0_i32, %c0_i32_0 : i32, i32
  }
  func.func @transform_5(%arg0: i32, %arg1: i32) -> (i32, i32, i32, i32) {
    %c0_i32 = arith.constant 0 : i32
    %c0_i32_0 = arith.constant 0 : i32
    %c0_i32_1 = arith.constant 0 : i32
    return %arg0, %arg1, %c0_i32, %c0_i32_0 : i32, i32, i32, i32
  }
}

</mosaic_0001>

<llo_original>
// kernel: tpu_custom_call.1
$region0: #{tpu_custom_call.1}
  #allocation0 [shape = 'u32[]', space=smem, size = 0x4, offset = 0x4, fixed_abs, tag = 'smem constant byte address 0x4 - core index']
  #allocation1 [shape = 'u32[72,128]{1,0:T(1,128)}', space=vmem, size = 0x9000, scoped, tag = 'internal scratch']
  #allocation2 [shape = 'f32[12,32,128]{2,1,0:T(8,128)}', space=vmem, size = 0x30000, scoped, tag = 'scratch operand']
  #allocation3 [shape = 'f32[10,32,128]{2,1,0:T(8,128)}', space=vmem, size = 0x28000, scoped, tag = 'scratch operand']
  #allocation4 [shape = 's32[1]{0}', space=sflag, size = 0x4, scoped, tag = 'scratch operand']
  #allocation11 [shape = 's32[]', space=sflag, size = 0x4, offset = 0, fixed_abs, tag = 'sflag constant byte address 0x0 - dummy sync flag']
  #allocation12 [shape = 's32[]', space=sflag, size = 0x4, offset = 0, fixed_abs, tag = 'sflag constant byte address 0x0 - dummy sync flag']
  #allocation13 [shape = 'u32[]', space=smem, size = 0x4, offset = 0x44, fixed_abs, tag = 'smem constant byte address 0x44 - assertion arg 0']
  #allocation14 [shape = 'u32[]', space=smem, size = 0x4, offset = 0x48, fixed_abs, tag = 'smem constant byte address 0x48 - assertion arg 1']
  %s0 = inlined_call_operand.hbm [shape: f32[2,20,32,128], index: 0, kind: input, shape index: {}]
  %s1 = inlined_call_operand.hbm [shape: f32[9,128,128], index: 1, kind: input, shape index: {}]
  %s2 = inlined_call_operand.vmem [shape: f32[1,128], index: 2, kind: input, shape index: {}]
  %s3 = inlined_call_operand.hbm [shape: f32[9,128,128], index: 3, kind: input, shape index: {}]
  %s4 = inlined_call_operand.vmem [shape: f32[1,128], index: 4, kind: input, shape index: {}]
  %s5 = inlined_call_operand.hbm [shape: f32[2,16,16,128], index: 5, kind: output, shape index: {}]
  %s6 = sld [smem:[#allocation0]]
  $region69: #{tpu_custom_call.1} parent=0
    _
  %s8 = ssub.s32 1, %s6
  %s9 = scalar_select 0, %s8, %s6
  $region1: #{tpu_custom_call.1} parent=0
    #allocation5 [shape = 'u8[589824]{0}', space=vmem, size = 0x90000, scoped, tag = 'input window, operand 1, single buffered']
    #allocation6 [shape = 's32[2]{0}', space=sflag, size = 0x8, scoped, tag = 'scoped memory for tpu_custom_call.1']
    #allocation7 [shape = 's32[2]{0}', space=sflag, size = 0x8, scoped, tag = 'scoped memory for tpu_custom_call.1']
    #allocation8 [shape = 'u8[589824]{0}', space=vmem, size = 0x90000, scoped, tag = 'input window, operand 3, single buffered']
    #allocation9 [shape = 's32[1]{0}', space=sflag, size = 0x4, scoped, tag = 'scoped memory for tpu_custom_call.1']
    #allocation10 [shape = 'u8[131072]{0}', space=vmem, size = 0x20000, scoped, tag = 'output window, operand 0']
    %10 = vsyncpa [#allocation6], 0
    %11 = vsyncpa [#allocation9], 0
    %12 = vsyncpa [#allocation7], 0
    %s13 = scalar_lea.sflag [#allocation7], 1
    %14 = vsyncpa %s13, 0
    loop: start=0, step=1, limit=6
    $region2: #{tpu_custom_call.1} parent=1 // loop_pre_header
      _
    $region3: #{tpu_custom_call.1} parent=1 // loop_header
      %s16 = sphi 0, %s20
      %p17 = scmp.ge.s32.totalorder %s16, 6
      %s23 = sphi 0, %s35
      %s24 = sphi 0, %s31
      %s25 = sphi 0, %s23
      %s26 = sphi 0, %s24
      %s27 = sphi 0, %s25
      %s28 = sphi 0, %s26
      %s36 = sphi 0, %s36
      %s38 = sphi 0, %s36
      %s39 = sphi 0, %s38
      %s53 = sphi 0, %s39
      %s57 = sphi 0, %s57
      %s59 = sphi 0, %s57
      %s60 = sphi 0, %s59
      %s74 = sphi 0, %s60
      %s78 = sphi 0, %s78
      %s80 = sphi 0, %s78
      %s81 = sphi 0, %s80
      %s95 = sphi 0, %s81
      %s99 = sphi 0, %s99
      %s101 = sphi 0, %s99
      %s102 = sphi 0, %s101
      %s116 = sphi 0, %s102
      %s124 = sphi 0, %s126
      %s127 = sphi 0, %s124
      %s128 = sphi 0, %s127
      %s144 = sphi 0, %s128
    $region4: #{tpu_custom_call.1} parent=1 // loop_header_branch
      %19 = sbr.rel (%p17) target = $region8
    $region5: #{tpu_custom_call.1} parent=1 // loop_body
      %s21 = ssub.s32 %s16, 1
      %s22 = ssub.s32 %s16, 2
      %s29 = sadd.s32 1, %s24
      %p30 = scmp.ge.s32.totalorder %s29, 2
      %s31 = scalar_select %p30, 0, %s29
      %s32 = sadd.s32 1, %s23
      %s33 = scalar_select %p30, %s32, %s23
      %p34 = scmp.ge.s32.totalorder %s33, 2
      %s35 = scalar_select %p34, 0, %s33
      %s37 = sadd.s32 %s36, 1
      %p40 = scmp.eq.s32.totalorder %s16, 3
      %p41 = scmp.ne.s32.totalorder %s36, %s38
      %p42 = scmp.eq.s32.totalorder %s16, 0
      %p43 = por %p41, %p42
      %p44 = scmp.ne.s32.totalorder %s36, %s38
      %p45 = scmp.eq.s32.totalorder %s21, 3
      %p46 = por %p44, %p45
      %p47 = scmp.ne.s32.totalorder %s38, %s39
      %p48 = scmp.eq.s32.totalorder %s21, 0
      %p49 = por %p47, %p48
      %p50 = scmp.ne.s32.totalorder %s38, %s39
      %p51 = scmp.eq.s32.totalorder %s22, 3
      %p52 = por %p50, %p51
      %p54 = scmp.ne.s32.totalorder %s39, %s53
      %p55 = scmp.eq.s32.totalorder %s22, 0
      %p56 = por %p54, %p55
      %s58 = sadd.s32 %s57, 1
      %p61 = scmp.eq.s32.totalorder %s16, 3
      %p62 = scmp.ne.s32.totalorder %s57, %s59
      %p63 = scmp.eq.s32.totalorder %s16, 0
      %p64 = por %p62, %p63
      %p65 = scmp.ne.s32.totalorder %s57, %s59
      %p66 = scmp.eq.s32.totalorder %s21, 3
      %p67 = por %p65, %p66
      %p68 = scmp.ne.s32.totalorder %s59, %s60
      %p69 = scmp.eq.s32.totalorder %s21, 0
      %p70 = por %p68, %p69
      %p71 = scmp.ne.s32.totalorder %s59, %s60
      %p72 = scmp.eq.s32.totalorder %s22, 3
      %p73 = por %p71, %p72
      %p75 = scmp.ne.s32.totalorder %s60, %s74
      %p76 = scmp.eq.s32.totalorder %s22, 0
      %p77 = por %p75, %p76
      %s79 = sadd.s32 %s78, 1
      %p82 = scmp.eq.s32.totalorder %s16, 3
      %p83 = scmp.ne.s32.totalorder %s78, %s80
      %p84 = scmp.eq.s32.totalorder %s16, 0
      %p85 = por %p83, %p84
      %p86 = scmp.ne.s32.totalorder %s78, %s80
      %p87 = scmp.eq.s32.totalorder %s21, 3
      %p88 = por %p86, %p87
      %p89 = scmp.ne.s32.totalorder %s80, %s81
      %p90 = scmp.eq.s32.totalorder %s21, 0
      %p91 = por %p89, %p90
      %p92 = scmp.ne.s32.totalorder %s80, %s81
      %p93 = scmp.eq.s32.totalorder %s22, 3
      %p94 = por %p92, %p93
      %p96 = scmp.ne.s32.totalorder %s81, %s95
      %p97 = scmp.eq.s32.totalorder %s22, 0
      %p98 = por %p96, %p97
      %s100 = sadd.s32 %s99, 1
      %p103 = scmp.eq.s32.totalorder %s16, 3
      %p104 = scmp.ne.s32.totalorder %s99, %s101
      %p105 = scmp.eq.s32.totalorder %s16, 0
      %p106 = por %p104, %p105
      %p107 = scmp.ne.s32.totalorder %s99, %s101
      %p108 = scmp.eq.s32.totalorder %s21, 3
      %p109 = por %p107, %p108
      %p110 = scmp.ne.s32.totalorder %s101, %s102
      %p111 = scmp.eq.s32.totalorder %s21, 0
      %p112 = por %p110, %p111
      %p113 = scmp.ne.s32.totalorder %s101, %s102
      %p114 = scmp.eq.s32.totalorder %s22, 3
      %p115 = por %p113, %p114
      %p117 = scmp.ne.s32.totalorder %s102, %s116
      %p118 = scmp.eq.s32.totalorder %s22, 0
      %p119 = por %p117, %p118
      %s120 = ssub.s32 %s23, %s35
      %s121 = ssub.s32 %s24, %s31
      %s122 = sor.u32 %s120, %s121
      %p123 = scmp.eq.s32.totalorder %s122, 0
      %s125 = sadd.s32 %s124, 1
      %s126 = scalar_select %p123, %s124, %s125
      %p129 = pneg %p123
      %p130 = scmp.eq.s32.totalorder %s16, 3
      %p131 = por %p129, %p130
      %p132 = scmp.ne.s32.totalorder %s124, %s127
      %p133 = scmp.eq.s32.totalorder %s16, 0
      %p134 = por %p132, %p133
      %p135 = scmp.ne.s32.totalorder %s124, %s127
      %p136 = scmp.eq.s32.totalorder %s21, 3
      %p137 = por %p135, %p136
      %p138 = scmp.ne.s32.totalorder %s127, %s128
      %p139 = scmp.eq.s32.totalorder %s21, 0
      %p140 = por %p138, %p139
      %p141 = scmp.ne.s32.totalorder %s127, %s128
      %p142 = scmp.eq.s32.totalorder %s22, 3
      %p143 = por %p141, %p142
      %p145 = scmp.ne.s32.totalorder %s128, %s144
      %p146 = scmp.eq.s32.totalorder %s22, 0
      %p147 = por %p145, %p146
      %p148 = scmp.le.s32.totalorder 1, %s16
      %p149 = scmp.lt.s32.totalorder %s16, 5
      %p150 = pnand %p148, %p149
      %p151 = pneg %p150
      // Predicated region
      $region9: #{tpu_custom_call.1} parent=5 // pred_check
        _
      $region10: #{tpu_custom_call.1} parent=5 // pred_check_branch
        %153 = sbr.rel (%p150) target = $region12
      $region11: #{tpu_custom_call.1} parent=5 // pred_region
        %s154 = ssub.s32 %s16, 1
        // Predicated region
        $region13: #{tpu_custom_call.1} parent=11 // pred_check
          %p155 = pneg %p49
        $region14: #{tpu_custom_call.1} parent=11 // pred_check_branch
          %157 = sbr.rel (%p155) target = $region16
        $region15: #{tpu_custom_call.1} parent=11 // pred_region
          %159 = vsyncadd [#allocation6], 0
          %s160 = sshll.u32 %s1, 4
          %s161 = int_to_ptr.hbm [resolvable:$true] %s160
          %s162 = sshll.u32 [#allocation5], 4
          %s163 = int_to_ptr.vmem [resolvable:$true] %s162
          %168 = dma.hbm_to_vmem [thread:$0]  %s161, 18432, %s163, [#allocation6], 128, 128, 8
        $region16: #{tpu_custom_call.1} parent=11 // pred_fallthru
          _
        // Predicated region
        $region17: #{tpu_custom_call.1} parent=11 // pred_check
          %p169 = pneg %p70
        $region18: #{tpu_custom_call.1} parent=11 // pred_check_branch
          %171 = sbr.rel (%p169) target = $region20
        $region19: #{tpu_custom_call.1} parent=11 // pred_region
          _
        $region20: #{tpu_custom_call.1} parent=11 // pred_fallthru
          _
        // Predicated region
        $region21: #{tpu_custom_call.1} parent=11 // pred_check
          %p172 = pneg %p91
        $region22: #{tpu_custom_call.1} parent=11 // pred_check_branch
          %174 = sbr.rel (%p172) target = $region24
        $region23: #{tpu_custom_call.1} parent=11 // pred_region
          %176 = vsyncadd [#allocation9], 0
          %s177 = sshll.u32 %s3, 4
          %s178 = int_to_ptr.hbm [resolvable:$true] %s177
          %s179 = sshll.u32 [#allocation8], 4
          %s180 = int_to_ptr.vmem [resolvable:$true] %s179
          %185 = dma.hbm_to_vmem [thread:$0]  %s178, 18432, %s180, [#allocation9], 128, 128, 8
        $region24: #{tpu_custom_call.1} parent=11 // pred_fallthru
          _
        // Predicated region
        $region25: #{tpu_custom_call.1} parent=11 // pred_check
          %p186 = pneg %p112
        $region26: #{tpu_custom_call.1} parent=11 // pred_check_branch
          %188 = sbr.rel (%p186) target = $region28
        $region27: #{tpu_custom_call.1} parent=11 // pred_region
          _
        $region28: #{tpu_custom_call.1} parent=11 // pred_fallthru
          _
      $region12: #{tpu_custom_call.1} parent=5 // pred_fallthru
        _
      %p189 = scmp.lt.s32.totalorder %s16, 4
      // Predicated region
      $region29: #{tpu_custom_call.1} parent=5 // pred_check
        %p190 = pneg %p189
      $region30: #{tpu_custom_call.1} parent=5 // pred_check_branch
        %192 = sbr.rel (%p190) target = $region32
      $region31: #{tpu_custom_call.1} parent=5 // pred_region
        _
      $region32: #{tpu_custom_call.1} parent=5 // pred_fallthru
        _
      %p193 = scmp.le.s32.totalorder 1, %s16
      %p194 = scmp.lt.s32.totalorder %s16, 5
      %p195 = pnand %p193, %p194
      %p196 = pneg %p195
      // Predicated region
      $region33: #{tpu_custom_call.1} parent=5 // pred_check
        _
      $region34: #{tpu_custom_call.1} parent=5 // pred_check_branch
        %198 = sbr.rel (%p195) target = $region36
      $region35: #{tpu_custom_call.1} parent=5 // pred_region
        %s199 = ssub.s32 %s16, 1
        // Predicated region
        $region37: #{tpu_custom_call.1} parent=35 // pred_check
          %p200 = pneg %p49
        $region38: #{tpu_custom_call.1} parent=35 // pred_check_branch
          %202 = sbr.rel (%p200) target = $region40
        $region39: #{tpu_custom_call.1} parent=35 // pred_region
          %204 = dma.done [#allocation6], 18432
        $region40: #{tpu_custom_call.1} parent=35 // pred_fallthru
          _
        // Predicated region
        $region41: #{tpu_custom_call.1} parent=35 // pred_check
          %p205 = pneg %p91
        $region42: #{tpu_custom_call.1} parent=35 // pred_check_branch
          %207 = sbr.rel (%p205) target = $region44
        $region43: #{tpu_custom_call.1} parent=35 // pred_region
          %209 = dma.done [#allocation9], 18432
        $region44: #{tpu_custom_call.1} parent=35 // pred_fallthru
          _
        %p210 = pneg %p49
        %p211 = pneg %p46
        %p212 = pneg %p70
        %p213 = pneg %p67
        %p214 = pneg %p91
        %p215 = pneg %p88
        %p216 = pneg %p112
        %p217 = pneg %p109
        %p218 = pneg %p140
        %p219 = pneg %p137
        %s220 = sand.u32 %s127, 1
        %s221 = scalar_lea.sflag [#allocation7], %s220
        %s222 = sand.u32 %s127, 1
        %s223 = smul.addr %s222, 128
        %s224 = scalar_lea.vmem [#allocation10], %s223
        %s225 = smul.u32 8, %s26
        %s226 = smul.u32 %s26, 8
        %s227 = smul.u32 %s226, 32
        %s228 = smul.u32 %s25, 640
        %s229 = sadd.s32 %s227, %s228
        %s230 = scalar_lea.hbm %s0, %s229
        // Predicated region
        $region45: #{tpu_custom_call.1} parent=35 // pred_check
          _
        $region46: #{tpu_custom_call.1} parent=35 // pred_check_branch
          %232 = sbr.rel target = $region48
        $region47: #{tpu_custom_call.1} parent=35 // pred_region
          %233 = sst [smem:[#allocation13]] [#allocation12]
          %234 = sst [smem:[#allocation14]] [#allocation11]
        $region48: #{tpu_custom_call.1} parent=35 // pred_fallthru
          _
        %236 = shalt.err (0)
        %s238 = sshll.u32 %s230, 4
        %s239 = int_to_ptr.hbm [resolvable:$true] %s238
        %s240 = sshll.u32 [#allocation2], 4
        %s241 = int_to_ptr.vmem [resolvable:$true] %s240
        %243 = dma.hbm_to_vmem [thread:$0]  %s239, 6144, %s241, [#allocation4]
        %s244 = smul.u32 12, 32
        %s245 = smul.u32 %s244, 1
        %s246 = sshll.u32 %s245, 4
        %247 = dma.done [#allocation4], %s246
        %v248 = vld [vmem:[%s2] sm:$0x1]
        %v249 = vld [vmem:[%s4] sm:$0x1]
        %v250 = vld [vmem:[#allocation2 + $0x7] sm:$0xff]
        %v251 = vld [vmem:[#allocation2 + $0xf] sm:$0xff]
        %v252 = vld [vmem:[#allocation2 + $0x27] sm:$0xff]
        %v253 = vld [vmem:[#allocation2 + $0x2f] sm:$0xff]
        %v254 = vld [vmem:[#allocation2 + $0x47] sm:$0xff]
        %v255 = vld [vmem:[#allocation2 + $0x4f] sm:$0xff]
        %v256 = vld [vmem:[#allocation2 + $0x67] sm:$0xff]
        %v257 = vld [vmem:[#allocation2 + $0x6f] sm:$0xff]
        %v258 = vld [vmem:[#allocation2 + $0x87] sm:$0xff]
        %v259 = vld [vmem:[#allocation2 + $0x8f] sm:$0xff]
        %v260 = vld [vmem:[#allocation2 + $0xa7] sm:$0xff]
        %v261 = vld [vmem:[#allocation2 + $0xaf] sm:$0xff]
        %v262 = vld [vmem:[#allocation2 + $0xc7] sm:$0xff]
        %v263 = vld [vmem:[#allocation2 + $0xcf] sm:$0xff]
        %v264 = vld [vmem:[#allocation2 + $0xe7] sm:$0xff]
        %v265 = vld [vmem:[#allocation2 + $0xef] sm:$0xff]
        %v266 = vld [vmem:[#allocation2 + $0x107] sm:$0xff]
        %v267 = vld [vmem:[#allocation2 + $0x10f] sm:$0xff]
        %v268 = vld [vmem:[#allocation2 + $0x127] sm:$0xff]
        %v269 = vld [vmem:[#allocation2 + $0x12f] sm:$0xff]
        %v270 = vld [vmem:[#allocation2 + $0x147] sm:$0xff]
        %v271 = vld [vmem:[#allocation2 + $0x14f] sm:$0xff]
        %v272 = vld [vmem:[#allocation2 + $0x167] sm:$0xff]
        %v273 = vld [vmem:[#allocation2 + $0x16f] sm:$0xff]
        %v274 = vld [vmem:[#allocation5] sm:$0xff]
        %v275 = vld [vmem:[#allocation5 + $0x8] sm:$0xff]
        %v276 = vld [vmem:[#allocation5 + $0x10] sm:$0xff]
        %v277 = vld [vmem:[#allocation5 + $0x18] sm:$0xff]
        %v278 = vld [vmem:[#allocation5 + $0x20] sm:$0xff]
        %v279 = vld [vmem:[#allocation5 + $0x28] sm:$0xff]
        %v280 = vld [vmem:[#allocation5 + $0x30] sm:$0xff]
        %v281 = vld [vmem:[#allocation5 + $0x38] sm:$0xff]
        %v282 = vld [vmem:[#allocation5 + $0x40] sm:$0xff]
        %v283 = vld [vmem:[#allocation5 + $0x48] sm:$0xff]
        %v284 = vld [vmem:[#allocation5 + $0x50] sm:$0xff]
        %v285 = vld [vmem:[#allocation5 + $0x58] sm:$0xff]
        %v286 = vld [vmem:[#allocation5 + $0x60] sm:$0xff]
        %v287 = vld [vmem:[#allocation5 + $0x68] sm:$0xff]
        %v288 = vld [vmem:[#allocation5 + $0x70] sm:$0xff]
        %v289 = vld [vmem:[#allocation5 + $0x78] sm:$0xff]
        %s290 = scalar_lea.vmem [#allocation5], 384
        %v291 = vld [vmem:[%s290] sm:$0xff]
        %v292 = vld [vmem:[%s290 + $0x8] sm:$0xff]
        %v293 = vld [vmem:[%s290 + $0x10] sm:$0xff]
        %v294 = vld [vmem:[%s290 + $0x18] sm:$0xff]
        %v295 = vld [vmem:[%s290 + $0x20] sm:$0xff]
        %v296 = vld [vmem:[%s290 + $0x28] sm:$0xff]
        %v297 = vld [vmem:[%s290 + $0x30] sm:$0xff]
        %v298 = vld [vmem:[%s290 + $0x38] sm:$0xff]
        %v299 = vld [vmem:[%s290 + $0x40] sm:$0xff]
        %v300 = vld [vmem:[%s290 + $0x48] sm:$0xff]
        %v301 = vld [vmem:[%s290 + $0x50] sm:$0xff]
        %v302 = vld [vmem:[%s290 + $0x58] sm:$0xff]
        %v303 = vld [vmem:[%s290 + $0x60] sm:$0xff]
        %v304 = vld [vmem:[%s290 + $0x68] sm:$0xff]
        %v305 = vld [vmem:[%s290 + $0x70] sm:$0xff]
        %v306 = vld [vmem:[%s290 + $0x78] sm:$0xff]
        %307 = vmatpush.msra.mxu0 %v306
        %308 = vmatpush.msra.mxu0 %v305
        %309 = vmatpush.msra.mxu0 %v304
        %310 = vmatpush.msra.mxu0 %v303
        %311 = vmatpush.msra.mxu0 %v302
        %312 = vmatpush.msra.mxu0 %v301
        %313 = vmatpush.msra.mxu0 %v300
        %314 = vmatpush.msra.mxu0 %v299
        %315 = vmatpush.msra.mxu0 %v298
        %316 = vmatpush.msra.mxu0 %v297
        %317 = vmatpush.msra.mxu0 %v296
        %318 = vmatpush.msra.mxu0 %v295
        %319 = vmatpush.msra.mxu0 %v294
        %320 = vmatpush.msra.mxu0 %v293
        %321 = vmatpush.msra.mxu0 %v292
        %322 = vmatpush.msra.mxu0 %v291
        %323 = vmatmul.f32.gmra.mxu0 %v252
        %v324 = vpop.f32.mrf.mxu0
        %v325 = vadd.f32 0.0, %v324
        %326 = vmatmul.f32.gmra.mxu0 %v253
        %v327 = vpop.f32.mrf.mxu0
        %v328 = vadd.f32 0.0, %v327
        %329 = vmatmul.f32.gmra.mxu0 %v254
        %v330 = vpop.f32.mrf.mxu0
        %v331 = vadd.f32 0.0, %v330
        %332 = vmatmul.f32.gmra.mxu0 %v255
        %v333 = vpop.f32.mrf.mxu0
        %v334 = vadd.f32 0.0, %v333
        %335 = vmatmul.f32.gmra.mxu0 %v256
        %v336 = vpop.f32.mrf.mxu0
        %v337 = vadd.f32 0.0, %v336
        %338 = vmatmul.f32.gmra.mxu0 %v257
        %v339 = vpop.f32.mrf.mxu0
        %v340 = vadd.f32 0.0, %v339
        %341 = vmatmul.f32.gmra.mxu0 %v258
        %v342 = vpop.f32.mrf.mxu0
        %v343 = vadd.f32 0.0, %v342
        %344 = vmatmul.f32.gmra.mxu0 %v259
        %v345 = vpop.f32.mrf.mxu0
        %v346 = vadd.f32 0.0, %v345
        %347 = vmatmul.f32.gmra.mxu0 %v260
        %v348 = vpop.f32.mrf.mxu0
        %v349 = vadd.f32 0.0, %v348
        %350 = vmatmul.f32.gmra.mxu0 %v261
        %v351 = vpop.f32.mrf.mxu0
        %v352 = vadd.f32 0.0, %v351
        %353 = vmatmul.f32.gmra.mxu0 %v262
        %v354 = vpop.f32.mrf.mxu0
        %v355 = vadd.f32 0.0, %v354
        %356 = vmatmul.f32.gmra.mxu0 %v263
        %v357 = vpop.f32.mrf.mxu0
        %v358 = vadd.f32 0.0, %v357
        %359 = vmatmul.f32.gmra.mxu0 %v264
        %v360 = vpop.f32.mrf.mxu0
        %v361 = vadd.f32 0.0, %v360
        %362 = vmatmul.f32.gmra.mxu0 %v265
        %v363 = vpop.f32.mrf.mxu0
        %v364 = vadd.f32 0.0, %v363
        %365 = vmatmul.f32.gmra.mxu0 %v266
        %v366 = vpop.f32.mrf.mxu0
        %v367 = vadd.f32 0.0, %v366
        %368 = vmatmul.f32.gmra.mxu0 %v267
        %v369 = vpop.f32.mrf.mxu0
        %v370 = vadd.f32 0.0, %v369
        %371 = vmatmul.f32.gmra.mxu0 %v268
        %v372 = vpop.f32.mrf.mxu0
        %v373 = vadd.f32 0.0, %v372
        %374 = vmatmul.f32.gmra.mxu0 %v269
        %v375 = vpop.f32.mrf.mxu0
        %v376 = vadd.f32 0.0, %v375
        %377 = vmatmul.f32.gmra.mxu0 %v270
        %v378 = vpop.f32.mrf.mxu0
        %v379 = vadd.f32 0.0, %v378
        %380 = vmatmul.f32.gmra.mxu0 %v271
        %v381 = vpop.f32.mrf.mxu0
        %v382 = vadd.f32 0.0, %v381
        %383 = vdwg.mxu0
        %384 = vmatpush.msra.mxu0 %v289
        %385 = vmatpush.msra.mxu0 %v288
        %386 = vmatpush.msra.mxu0 %v287
        %387 = vmatpush.msra.mxu0 %v286
        %388 = vmatpush.msra.mxu0 %v285
        %389 = vmatpush.msra.mxu0 %v284
        %390 = vmatpush.msra.mxu0 %v283
        %391 = vmatpush.msra.mxu0 %v282
        %392 = vmatpush.msra.mxu0 %v281
        %393 = vmatpush.msra.mxu0 %v280
        %394 = vmatpush.msra.mxu0 %v279
        %395 = vmatpush.msra.mxu0 %v278
        %396 = vmatpush.msra.mxu0 %v277
        %397 = vmatpush.msra.mxu0 %v276
        %398 = vmatpush.msra.mxu0 %v275
        %399 = vmatpush.msra.mxu0 %v274
        %400 = vmatmul.f32.gmra.mxu0 %v250
        %v401 = vpop.f32.mrf.mxu0
        %v402 = vadd.f32 %v325, %v401
        %403 = vmatmul.f32.gmra.mxu0 %v251
        %v404 = vpop.f32.mrf.mxu0
        %v405 = vadd.f32 %v328, %v404
        %406 = vmatmul.f32.gmra.mxu0 %v252
        %v407 = vpop.f32.mrf.mxu0
        %v408 = vadd.f32 %v331, %v407
        %409 = vmatmul.f32.gmra.mxu0 %v253
        %v410 = vpop.f32.mrf.mxu0
        %v411 = vadd.f32 %v334, %v410
        %412 = vmatmul.f32.gmra.mxu0 %v254
        %v413 = vpop.f32.mrf.mxu0
        %v414 = vadd.f32 %v337, %v413
        %415 = vmatmul.f32.gmra.mxu0 %v255
        %v416 = vpop.f32.mrf.mxu0
        %v417 = vadd.f32 %v340, %v416
        %418 = vmatmul.f32.gmra.mxu0 %v256
        %v419 = vpop.f32.mrf.mxu0
        %v420 = vadd.f32 %v343, %v419
        %421 = vmatmul.f32.gmra.mxu0 %v257
        %v422 = vpop.f32.mrf.mxu0
        %v423 = vadd.f32 %v346, %v422
        %424 = vmatmul.f32.gmra.mxu0 %v258
        %v425 = vpop.f32.mrf.mxu0
        %v426 = vadd.f32 %v349, %v425
        %427 = vmatmul.f32.gmra.mxu0 %v259
        %v428 = vpop.f32.mrf.mxu0
        %v429 = vadd.f32 %v352, %v428
        %430 = vmatmul.f32.gmra.mxu0 %v260
        %v431 = vpop.f32.mrf.mxu0
        %v432 = vadd.f32 %v355, %v431
        %433 = vmatmul.f32.gmra.mxu0 %v261
        %v434 = vpop.f32.mrf.mxu0
        %v435 = vadd.f32 %v358, %v434
        %436 = vmatmul.f32.gmra.mxu0 %v262
        %v437 = vpop.f32.mrf.mxu0
        %v438 = vadd.f32 %v361, %v437
        %439 = vmatmul.f32.gmra.mxu0 %v263
        %v440 = vpop.f32.mrf.mxu0
        %v441 = vadd.f32 %v364, %v440
        %442 = vmatmul.f32.gmra.mxu0 %v264
        %v443 = vpop.f32.mrf.mxu0
        %v444 = vadd.f32 %v367, %v443
        %445 = vmatmul.f32.gmra.mxu0 %v265
        %v446 = vpop.f32.mrf.mxu0
        %v447 = vadd.f32 %v370, %v446
        %448 = vmatmul.f32.gmra.mxu0 %v266
        %v449 = vpop.f32.mrf.mxu0
        %v450 = vadd.f32 %v373, %v449
        %451 = vmatmul.f32.gmra.mxu0 %v267
        %v452 = vpop.f32.mrf.mxu0
        %v453 = vadd.f32 %v376, %v452
        %454 = vmatmul.f32.gmra.mxu0 %v268
        %v455 = vpop.f32.mrf.mxu0
        %v456 = vadd.f32 %v379, %v455
        %457 = vmatmul.f32.gmra.mxu0 %v269
        %v458 = vpop.f32.mrf.mxu0
        %v459 = vadd.f32 %v382, %v458
        %460 = vdwg.mxu0
        %s461 = scalar_lea.vmem [#allocation5], 768
        %v462 = vld [vmem:[%s461] sm:$0xff]
        %v463 = vld [vmem:[%s461 + $0x8] sm:$0xff]
        %v464 = vld [vmem:[%s461 + $0x10] sm:$0xff]
        %v465 = vld [vmem:[%s461 + $0x18] sm:$0xff]
        %v466 = vld [vmem:[%s461 + $0x20] sm:$0xff]
        %v467 = vld [vmem:[%s461 + $0x28] sm:$0xff]
        %v468 = vld [vmem:[%s461 + $0x30] sm:$0xff]
        %v469 = vld [vmem:[%s461 + $0x38] sm:$0xff]
        %v470 = vld [vmem:[%s461 + $0x40] sm:$0xff]
        %v471 = vld [vmem:[%s461 + $0x48] sm:$0xff]
        %v472 = vld [vmem:[%s461 + $0x50] sm:$0xff]
        %v473 = vld [vmem:[%s461 + $0x58] sm:$0xff]
        %v474 = vld [vmem:[%s461 + $0x60] sm:$0xff]
        %v475 = vld [vmem:[%s461 + $0x68] sm:$0xff]
        %v476 = vld [vmem:[%s461 + $0x70] sm:$0xff]
        %v477 = vld [vmem:[%s461 + $0x78] sm:$0xff]
        %478 = vmatpush.msra.mxu0 %v477
        %479 = vmatpush.msra.mxu0 %v476
        %480 = vmatpush.msra.mxu0 %v475
        %481 = vmatpush.msra.mxu0 %v474
        %482 = vmatpush.msra.mxu0 %v473
        %483 = vmatpush.msra.mxu0 %v472
        %484 = vmatpush.msra.mxu0 %v471
        %485 = vmatpush.msra.mxu0 %v470
        %486 = vmatpush.msra.mxu0 %v469
        %487 = vmatpush.msra.mxu0 %v468
        %488 = vmatpush.msra.mxu0 %v467
        %489 = vmatpush.msra.mxu0 %v466
        %490 = vmatpush.msra.mxu0 %v465
        %491 = vmatpush.msra.mxu0 %v464
        %492 = vmatpush.msra.mxu0 %v463
        %493 = vmatpush.msra.mxu0 %v462
        %494 = vmatmul.f32.gmra.mxu0 %v254
        %v495 = vpop.f32.mrf.mxu0
        %v496 = vadd.f32 0.0, %v495
        %497 = vmatmul.f32.gmra.mxu0 %v255
        %v498 = vpop.f32.mrf.mxu0
        %v499 = vadd.f32 0.0, %v498
        %500 = vmatmul.f32.gmra.mxu0 %v256
        %v501 = vpop.f32.mrf.mxu0
        %v502 = vadd.f32 0.0, %v501
        %503 = vmatmul.f32.gmra.mxu0 %v257
        %v504 = vpop.f32.mrf.mxu0
        %v505 = vadd.f32 0.0, %v504
        %506 = vmatmul.f32.gmra.mxu0 %v258
        %v507 = vpop.f32.mrf.mxu0
        %v508 = vadd.f32 0.0, %v507
        %509 = vmatmul.f32.gmra.mxu0 %v259
        %v510 = vpop.f32.mrf.mxu0
        %v511 = vadd.f32 0.0, %v510
        %512 = vmatmul.f32.gmra.mxu0 %v260
        %v513 = vpop.f32.mrf.mxu0
        %v514 = vadd.f32 0.0, %v513
        %515 = vmatmul.f32.gmra.mxu0 %v261
        %v516 = vpop.f32.mrf.mxu0
        %v517 = vadd.f32 0.0, %v516
        %518 = vmatmul.f32.gmra.mxu0 %v262
        %v519 = vpop.f32.mrf.mxu0
        %v520 = vadd.f32 0.0, %v519
        %521 = vmatmul.f32.gmra.mxu0 %v263
        %v522 = vpop.f32.mrf.mxu0
        %v523 = vadd.f32 0.0, %v522
        %524 = vmatmul.f32.gmra.mxu0 %v264
        %v525 = vpop.f32.mrf.mxu0
        %v526 = vadd.f32 0.0, %v525
        %527 = vmatmul.f32.gmra.mxu0 %v265
        %v528 = vpop.f32.mrf.mxu0
        %v529 = vadd.f32 0.0, %v528
        %530 = vmatmul.f32.gmra.mxu0 %v266
        %v531 = vpop.f32.mrf.mxu0
        %v532 = vadd.f32 0.0, %v531
        %533 = vmatmul.f32.gmra.mxu0 %v267
        %v534 = vpop.f32.mrf.mxu0
        %v535 = vadd.f32 0.0, %v534
        %536 = vmatmul.f32.gmra.mxu0 %v268
        %v537 = vpop.f32.mrf.mxu0
        %v538 = vadd.f32 0.0, %v537
        %539 = vmatmul.f32.gmra.mxu0 %v269
        %v540 = vpop.f32.mrf.mxu0
        %v541 = vadd.f32 0.0, %v540
        %542 = vmatmul.f32.gmra.mxu0 %v270
        %v543 = vpop.f32.mrf.mxu0
        %v544 = vadd.f32 0.0, %v543
        %545 = vmatmul.f32.gmra.mxu0 %v271
        %v546 = vpop.f32.mrf.mxu0
        %v547 = vadd.f32 0.0, %v546
        %548 = vmatmul.f32.gmra.mxu0 %v272
        %v549 = vpop.f32.mrf.mxu0
        %v550 = vadd.f32 0.0, %v549
        %551 = vmatmul.f32.gmra.mxu0 %v273
        %v552 = vpop.f32.mrf.mxu0
        %v553 = vadd.f32 0.0, %v552
        %554 = vdwg.mxu0
        %v555 = vadd.f32 %v402, %v496
        %v556 = vadd.f32 %v405, %v499
        %v557 = vadd.f32 %v408, %v502
        %v558 = vadd.f32 %v411, %v505
        %v559 = vadd.f32 %v414, %v508
        %v560 = vadd.f32 %v417, %v511
        %v561 = vadd.f32 %v420, %v514
        %v562 = vadd.f32 %v423, %v517
        %v563 = vadd.f32 %v426, %v520
        %v564 = vadd.f32 %v429, %v523
        %v565 = vadd.f32 %v432, %v526
        %v566 = vadd.f32 %v435, %v529
        %v567 = vadd.f32 %v438, %v532
        %v568 = vadd.f32 %v441, %v535
        %v569 = vadd.f32 %v444, %v538
        %v570 = vadd.f32 %v447, %v541
        %v571 = vadd.f32 %v450, %v544
        %v572 = vadd.f32 %v453, %v547
        %v573 = vadd.f32 %v456, %v550
        %v574 = vadd.f32 %v459, %v553
        %v575 = vld [vmem:[#allocation2 + $0x8] sm:$0xff]
        %v576 = vld [vmem:[#allocation2 + $0x10] sm:$0xff]
        %v577 = vld [vmem:[#allocation2 + $0x28] sm:$0xff]
        %v578 = vld [vmem:[#allocation2 + $0x30] sm:$0xff]
        %v579 = vld [vmem:[#allocation2 + $0x48] sm:$0xff]
        %v580 = vld [vmem:[#allocation2 + $0x50] sm:$0xff]
        %v581 = vld [vmem:[#allocation2 + $0x68] sm:$0xff]
        %v582 = vld [vmem:[#allocation2 + $0x70] sm:$0xff]
        %v583 = vld [vmem:[#allocation2 + $0x88] sm:$0xff]
        %v584 = vld [vmem:[#allocation2 + $0x90] sm:$0xff]
        %v585 = vld [vmem:[#allocation2 + $0xa8] sm:$0xff]
        %v586 = vld [vmem:[#allocation2 + $0xb0] sm:$0xff]
        %v587 = vld [vmem:[#allocation2 + $0xc8] sm:$0xff]
        %v588 = vld [vmem:[#allocation2 + $0xd0] sm:$0xff]
        %v589 = vld [vmem:[#allocation2 + $0xe8] sm:$0xff]
        %v590 = vld [vmem:[#allocation2 + $0xf0] sm:$0xff]
        %v591 = vld [vmem:[#allocation2 + $0x108] sm:$0xff]
        %v592 = vld [vmem:[#allocation2 + $0x110] sm:$0xff]
        %v593 = vld [vmem:[#allocation2 + $0x128] sm:$0xff]
        %v594 = vld [vmem:[#allocation2 + $0x130] sm:$0xff]
        %v595 = vld [vmem:[#allocation2 + $0x148] sm:$0xff]
        %v596 = vld [vmem:[#allocation2 + $0x150] sm:$0xff]
        %v597 = vld [vmem:[#allocation2 + $0x168] sm:$0xff]
        %v598 = vld [vmem:[#allocation2 + $0x170] sm:$0xff]
        %s599 = scalar_lea.vmem [#allocation5], 128
        %v600 = vld [vmem:[%s599] sm:$0xff]
        %v601 = vld [vmem:[%s599 + $0x8] sm:$0xff]
        %v602 = vld [vmem:[%s599 + $0x10] sm:$0xff]
        %v603 = vld [vmem:[%s599 + $0x18] sm:$0xff]
        %v604 = vld [vmem:[%s599 + $0x20] sm:$0xff]
        %v605 = vld [vmem:[%s599 + $0x28] sm:$0xff]
        %v606 = vld [vmem:[%s599 + $0x30] sm:$0xff]
        %v607 = vld [vmem:[%s599 + $0x38] sm:$0xff]
        %v608 = vld [vmem:[%s599 + $0x40] sm:$0xff]
        %v609 = vld [vmem:[%s599 + $0x48] sm:$0xff]
        %v610 = vld [vmem:[%s599 + $0x50] sm:$0xff]
        %v611 = vld [vmem:[%s599 + $0x58] sm:$0xff]
        %v612 = vld [vmem:[%s599 + $0x60] sm:$0xff]
        %v613 = vld [vmem:[%s599 + $0x68] sm:$0xff]
        %v614 = vld [vmem:[%s599 + $0x70] sm:$0xff]
        %v615 = vld [vmem:[%s599 + $0x78] sm:$0xff]
        %616 = vmatpush.msra.mxu0 %v615
        %617 = vmatpush.msra.mxu0 %v614
        %618 = vmatpush.msra.mxu0 %v613
        %619 = vmatpush.msra.mxu0 %v612
        %620 = vmatpush.msra.mxu0 %v611
        %621 = vmatpush.msra.mxu0 %v610
        %622 = vmatpush.msra.mxu0 %v609
        %623 = vmatpush.msra.mxu0 %v608
        %624 = vmatpush.msra.mxu0 %v607
        %625 = vmatpush.msra.mxu0 %v606
        %626 = vmatpush.msra.mxu0 %v605
        %627 = vmatpush.msra.mxu0 %v604
        %628 = vmatpush.msra.mxu0 %v603
        %629 = vmatpush.msra.mxu0 %v602
        %630 = vmatpush.msra.mxu0 %v601
        %631 = vmatpush.msra.mxu0 %v600
        %632 = vmatmul.f32.gmra.mxu0 %v575
        %v633 = vpop.f32.mrf.mxu0
        %v634 = vadd.f32 0.0, %v633
        %635 = vmatmul.f32.gmra.mxu0 %v576
        %v636 = vpop.f32.mrf.mxu0
        %v637 = vadd.f32 0.0, %v636
        %638 = vmatmul.f32.gmra.mxu0 %v577
        %v639 = vpop.f32.mrf.mxu0
        %v640 = vadd.f32 0.0, %v639
        %641 = vmatmul.f32.gmra.mxu0 %v578
        %v642 = vpop.f32.mrf.mxu0
        %v643 = vadd.f32 0.0, %v642
        %644 = vmatmul.f32.gmra.mxu0 %v579
        %v645 = vpop.f32.mrf.mxu0
        %v646 = vadd.f32 0.0, %v645
        %647 = vmatmul.f32.gmra.mxu0 %v580
        %v648 = vpop.f32.mrf.mxu0
        %v649 = vadd.f32 0.0, %v648
        %650 = vmatmul.f32.gmra.mxu0 %v581
        %v651 = vpop.f32.mrf.mxu0
        %v652 = vadd.f32 0.0, %v651
        %653 = vmatmul.f32.gmra.mxu0 %v582
        %v654 = vpop.f32.mrf.mxu0
        %v655 = vadd.f32 0.0, %v654
        %656 = vmatmul.f32.gmra.mxu0 %v583
        %v657 = vpop.f32.mrf.mxu0
        %v658 = vadd.f32 0.0, %v657
        %659 = vmatmul.f32.gmra.mxu0 %v584
        %v660 = vpop.f32.mrf.mxu0
        %v661 = vadd.f32 0.0, %v660
        %662 = vmatmul.f32.gmra.mxu0 %v585
        %v663 = vpop.f32.mrf.mxu0
        %v664 = vadd.f32 0.0, %v663
        %665 = vmatmul.f32.gmra.mxu0 %v586
        %v666 = vpop.f32.mrf.mxu0
        %v667 = vadd.f32 0.0, %v666
        %668 = vmatmul.f32.gmra.mxu0 %v587
        %v669 = vpop.f32.mrf.mxu0
        %v670 = vadd.f32 0.0, %v669
        %671 = vmatmul.f32.gmra.mxu0 %v588
        %v672 = vpop.f32.mrf.mxu0
        %v673 = vadd.f32 0.0, %v672
        %674 = vmatmul.f32.gmra.mxu0 %v589
        %v675 = vpop.f32.mrf.mxu0
        %v676 = vadd.f32 0.0, %v675
        %677 = vmatmul.f32.gmra.mxu0 %v590
        %v678 = vpop.f32.mrf.mxu0
        %v679 = vadd.f32 0.0, %v678
        %680 = vmatmul.f32.gmra.mxu0 %v591
        %v681 = vpop.f32.mrf.mxu0
        %v682 = vadd.f32 0.0, %v681
        %683 = vmatmul.f32.gmra.mxu0 %v592
        %v684 = vpop.f32.mrf.mxu0
        %v685 = vadd.f32 0.0, %v684
        %686 = vmatmul.f32.gmra.mxu0 %v593
        %v687 = vpop.f32.mrf.mxu0
        %v688 = vadd.f32 0.0, %v687
        %689 = vmatmul.f32.gmra.mxu0 %v594
        %v690 = vpop.f32.mrf.mxu0
        %v691 = vadd.f32 0.0, %v690
        %692 = vdwg.mxu0
        %v693 = vadd.f32 %v555, %v634
        %v694 = vadd.f32 %v556, %v637
        %v695 = vadd.f32 %v557, %v640
        %v696 = vadd.f32 %v558, %v643
        %v697 = vadd.f32 %v559, %v646
        %v698 = vadd.f32 %v560, %v649
        %v699 = vadd.f32 %v561, %v652
        %v700 = vadd.f32 %v562, %v655
        %v701 = vadd.f32 %v563, %v658
        %v702 = vadd.f32 %v564, %v661
        %v703 = vadd.f32 %v565, %v664
        %v704 = vadd.f32 %v566, %v667
        %v705 = vadd.f32 %v567, %v670
        %v706 = vadd.f32 %v568, %v673
        %v707 = vadd.f32 %v569, %v676
        %v708 = vadd.f32 %v570, %v679
        %v709 = vadd.f32 %v571, %v682
        %v710 = vadd.f32 %v572, %v685
        %v711 = vadd.f32 %v573, %v688
        %v712 = vadd.f32 %v574, %v691
        %s713 = scalar_lea.vmem [#allocation5], 512
        %v714 = vld [vmem:[%s713] sm:$0xff]
        %v715 = vld [vmem:[%s713 + $0x8] sm:$0xff]
        %v716 = vld [vmem:[%s713 + $0x10] sm:$0xff]
        %v717 = vld [vmem:[%s713 + $0x18] sm:$0xff]
        %v718 = vld [vmem:[%s713 + $0x20] sm:$0xff]
        %v719 = vld [vmem:[%s713 + $0x28] sm:$0xff]
        %v720 = vld [vmem:[%s713 + $0x30] sm:$0xff]
        %v721 = vld [vmem:[%s713 + $0x38] sm:$0xff]
        %v722 = vld [vmem:[%s713 + $0x40] sm:$0xff]
        %v723 = vld [vmem:[%s713 + $0x48] sm:$0xff]
        %v724 = vld [vmem:[%s713 + $0x50] sm:$0xff]
        %v725 = vld [vmem:[%s713 + $0x58] sm:$0xff]
        %v726 = vld [vmem:[%s713 + $0x60] sm:$0xff]
        %v727 = vld [vmem:[%s713 + $0x68] sm:$0xff]
        %v728 = vld [vmem:[%s713 + $0x70] sm:$0xff]
        %v729 = vld [vmem:[%s713 + $0x78] sm:$0xff]
        %730 = vmatpush.msra.mxu0 %v729
        %731 = vmatpush.msra.mxu0 %v728
        %732 = vmatpush.msra.mxu0 %v727
        %733 = vmatpush.msra.mxu0 %v726
        %734 = vmatpush.msra.mxu0 %v725
        %735 = vmatpush.msra.mxu0 %v724
        %736 = vmatpush.msra.mxu0 %v723
        %737 = vmatpush.msra.mxu0 %v722
        %738 = vmatpush.msra.mxu0 %v721
        %739 = vmatpush.msra.mxu0 %v720
        %740 = vmatpush.msra.mxu0 %v719
        %741 = vmatpush.msra.mxu0 %v718
        %742 = vmatpush.msra.mxu0 %v717
        %743 = vmatpush.msra.mxu0 %v716
        %744 = vmatpush.msra.mxu0 %v715
        %745 = vmatpush.msra.mxu0 %v714
        %746 = vmatmul.f32.gmra.mxu0 %v577
        %v747 = vpop.f32.mrf.mxu0
        %v748 = vadd.f32 0.0, %v747
        %749 = vmatmul.f32.gmra.mxu0 %v578
        %v750 = vpop.f32.mrf.mxu0
        %v751 = vadd.f32 0.0, %v750
        %752 = vmatmul.f32.gmra.mxu0 %v579
        %v753 = vpop.f32.mrf.mxu0
        %v754 = vadd.f32 0.0, %v753
        %755 = vmatmul.f32.gmra.mxu0 %v580
        %v756 = vpop.f32.mrf.mxu0
        %v757 = vadd.f32 0.0, %v756
        %758 = vmatmul.f32.gmra.mxu0 %v581
        %v759 = vpop.f32.mrf.mxu0
        %v760 = vadd.f32 0.0, %v759
        %761 = vmatmul.f32.gmra.mxu0 %v582
        %v762 = vpop.f32.mrf.mxu0
        %v763 = vadd.f32 0.0, %v762
        %764 = vmatmul.f32.gmra.mxu0 %v583
        %v765 = vpop.f32.mrf.mxu0
        %v766 = vadd.f32 0.0, %v765
        %767 = vmatmul.f32.gmra.mxu0 %v584
        %v768 = vpop.f32.mrf.mxu0
        %v769 = vadd.f32 0.0, %v768
        %770 = vmatmul.f32.gmra.mxu0 %v585
        %v771 = vpop.f32.mrf.mxu0
        %v772 = vadd.f32 0.0, %v771
        %773 = vmatmul.f32.gmra.mxu0 %v586
        %v774 = vpop.f32.mrf.mxu0
        %v775 = vadd.f32 0.0, %v774
        %776 = vmatmul.f32.gmra.mxu0 %v587
        %v777 = vpop.f32.mrf.mxu0
        %v778 = vadd.f32 0.0, %v777
        %779 = vmatmul.f32.gmra.mxu0 %v588
        %v780 = vpop.f32.mrf.mxu0
        %v781 = vadd.f32 0.0, %v780
        %782 = vmatmul.f32.gmra.mxu0 %v589
        %v783 = vpop.f32.mrf.mxu0
        %v784 = vadd.f32 0.0, %v783
        %785 = vmatmul.f32.gmra.mxu0 %v590
        %v786 = vpop.f32.mrf.mxu0
        %v787 = vadd.f32 0.0, %v786
        %788 = vmatmul.f32.gmra.mxu0 %v591
        %v789 = vpop.f32.mrf.mxu0
        %v790 = vadd.f32 0.0, %v789
        %791 = vmatmul.f32.gmra.mxu0 %v592
        %v792 = vpop.f32.mrf.mxu0
        %v793 = vadd.f32 0.0, %v792
        %794 = vmatmul.f32.gmra.mxu0 %v593
        %v795 = vpop.f32.mrf.mxu0
        %v796 = vadd.f32 0.0, %v795
        %797 = vmatmul.f32.gmra.mxu0 %v594
        %v798 = vpop.f32.mrf.mxu0
        %v799 = vadd.f32 0.0, %v798
        %800 = vmatmul.f32.gmra.mxu0 %v595
        %v801 = vpop.f32.mrf.mxu0
        %v802 = vadd.f32 0.0, %v801
        %803 = vmatmul.f32.gmra.mxu0 %v596
        %v804 = vpop.f32.mrf.mxu0
        %v805 = vadd.f32 0.0, %v804
        %806 = vdwg.mxu0
        %v807 = vadd.f32 %v693, %v748
        %v808 = vadd.f32 %v694, %v751
        %v809 = vadd.f32 %v695, %v754
        %v810 = vadd.f32 %v696, %v757
        %v811 = vadd.f32 %v697, %v760
        %v812 = vadd.f32 %v698, %v763
        %v813 = vadd.f32 %v699, %v766
        %v814 = vadd.f32 %v700, %v769
        %v815 = vadd.f32 %v701, %v772
        %v816 = vadd.f32 %v702, %v775
        %v817 = vadd.f32 %v703, %v778
        %v818 = vadd.f32 %v704, %v781
        %v819 = vadd.f32 %v705, %v784
        %v820 = vadd.f32 %v706, %v787
        %v821 = vadd.f32 %v707, %v790
        %v822 = vadd.f32 %v708, %v793
        %v823 = vadd.f32 %v709, %v796
        %v824 = vadd.f32 %v710, %v799
        %v825 = vadd.f32 %v711, %v802
        %v826 = vadd.f32 %v712, %v805
        %s827 = scalar_lea.vmem [#allocation5], 896
        %v828 = vld [vmem:[%s827] sm:$0xff]
        %v829 = vld [vmem:[%s827 + $0x8] sm:$0xff]
        %v830 = vld [vmem:[%s827 + $0x10] sm:$0xff]
        %v831 = vld [vmem:[%s827 + $0x18] sm:$0xff]
        %v832 = vld [vmem:[%s827 + $0x20] sm:$0xff]
        %v833 = vld [vmem:[%s827 + $0x28] sm:$0xff]
        %v834 = vld [vmem:[%s827 + $0x30] sm:$0xff]
        %v835 = vld [vmem:[%s827 + $0x38] sm:$0xff]
        %v836 = vld [vmem:[%s827 + $0x40] sm:$0xff]
        %v837 = vld [vmem:[%s827 + $0x48] sm:$0xff]
        %v838 = vld [vmem:[%s827 + $0x50] sm:$0xff]
        %v839 = vld [vmem:[%s827 + $0x58] sm:$0xff]
        %v840 = vld [vmem:[%s827 + $0x60] sm:$0xff]
        %v841 = vld [vmem:[%s827 + $0x68] sm:$0xff]
        %v842 = vld [vmem:[%s827 + $0x70] sm:$0xff]
        %v843 = vld [vmem:[%s827 + $0x78] sm:$0xff]
        %844 = vmatpush.msra.mxu0 %v843
        %845 = vmatpush.msra.mxu0 %v842
        %846 = vmatpush.msra.mxu0 %v841
        %847 = vmatpush.msra.mxu0 %v840
        %848 = vmatpush.msra.mxu0 %v839
        %849 = vmatpush.msra.mxu0 %v838
        %850 = vmatpush.msra.mxu0 %v837
        %851 = vmatpush.msra.mxu0 %v836
        %852 = vmatpush.msra.mxu0 %v835
        %853 = vmatpush.msra.mxu0 %v834
        %854 = vmatpush.msra.mxu0 %v833
        %855 = vmatpush.msra.mxu0 %v832
        %856 = vmatpush.msra.mxu0 %v831
        %857 = vmatpush.msra.mxu0 %v830
        %858 = vmatpush.msra.mxu0 %v829
        %859 = vmatpush.msra.mxu0 %v828
        %860 = vmatmul.f32.gmra.mxu0 %v579
        %v861 = vpop.f32.mrf.mxu0
        %v862 = vadd.f32 0.0, %v861
        %863 = vmatmul.f32.gmra.mxu0 %v580
        %v864 = vpop.f32.mrf.mxu0
        %v865 = vadd.f32 0.0, %v864
        %866 = vmatmul.f32.gmra.mxu0 %v581
        %v867 = vpop.f32.mrf.mxu0
        %v868 = vadd.f32 0.0, %v867
        %869 = vmatmul.f32.gmra.mxu0 %v582
        %v870 = vpop.f32.mrf.mxu0
        %v871 = vadd.f32 0.0, %v870
        %872 = vmatmul.f32.gmra.mxu0 %v583
        %v873 = vpop.f32.mrf.mxu0
        %v874 = vadd.f32 0.0, %v873
        %875 = vmatmul.f32.gmra.mxu0 %v584
        %v876 = vpop.f32.mrf.mxu0
        %v877 = vadd.f32 0.0, %v876
        %878 = vmatmul.f32.gmra.mxu0 %v585
        %v879 = vpop.f32.mrf.mxu0
        %v880 = vadd.f32 0.0, %v879
        %881 = vmatmul.f32.gmra.mxu0 %v586
        %v882 = vpop.f32.mrf.mxu0
        %v883 = vadd.f32 0.0, %v882
        %884 = vmatmul.f32.gmra.mxu0 %v587
        %v885 = vpop.f32.mrf.mxu0
        %v886 = vadd.f32 0.0, %v885
        %887 = vmatmul.f32.gmra.mxu0 %v588
        %v888 = vpop.f32.mrf.mxu0
        %v889 = vadd.f32 0.0, %v888
        %890 = vmatmul.f32.gmra.mxu0 %v589
        %v891 = vpop.f32.mrf.mxu0
        %v892 = vadd.f32 0.0, %v891
        %893 = vmatmul.f32.gmra.mxu0 %v590
        %v894 = vpop.f32.mrf.mxu0
        %v895 = vadd.f32 0.0, %v894
        %896 = vmatmul.f32.gmra.mxu0 %v591
        %v897 = vpop.f32.mrf.mxu0
        %v898 = vadd.f32 0.0, %v897
        %899 = vmatmul.f32.gmra.mxu0 %v592
        %v900 = vpop.f32.mrf.mxu0
        %v901 = vadd.f32 0.0, %v900
        %902 = vmatmul.f32.gmra.mxu0 %v593
        %v903 = vpop.f32.mrf.mxu0
        %v904 = vadd.f32 0.0, %v903
        %905 = vmatmul.f32.gmra.mxu0 %v594
        %v906 = vpop.f32.mrf.mxu0
        %v907 = vadd.f32 0.0, %v906
        %908 = vmatmul.f32.gmra.mxu0 %v595
        %v909 = vpop.f32.mrf.mxu0
        %v910 = vadd.f32 0.0, %v909
        %911 = vmatmul.f32.gmra.mxu0 %v596
        %v912 = vpop.f32.mrf.mxu0
        %v913 = vadd.f32 0.0, %v912
        %914 = vmatmul.f32.gmra.mxu0 %v597
        %v915 = vpop.f32.mrf.mxu0
        %v916 = vadd.f32 0.0, %v915
        %917 = vmatmul.f32.gmra.mxu0 %v598
        %v918 = vpop.f32.mrf.mxu0
        %v919 = vadd.f32 0.0, %v918
        %920 = vdwg.mxu0
        %v921 = vadd.f32 %v807, %v862
        %v922 = vadd.f32 %v808, %v865
        %v923 = vadd.f32 %v809, %v868
        %v924 = vadd.f32 %v810, %v871
        %v925 = vadd.f32 %v811, %v874
        %v926 = vadd.f32 %v812, %v877
        %v927 = vadd.f32 %v813, %v880
        %v928 = vadd.f32 %v814, %v883
        %v929 = vadd.f32 %v815, %v886
        %v930 = vadd.f32 %v816, %v889
        %v931 = vadd.f32 %v817, %v892
        %v932 = vadd.f32 %v818, %v895
        %v933 = vadd.f32 %v819, %v898
        %v934 = vadd.f32 %v820, %v901
        %v935 = vadd.f32 %v821, %v904
        %v936 = vadd.f32 %v822, %v907
        %v937 = vadd.f32 %v823, %v910
        %v938 = vadd.f32 %v824, %v913
        %v939 = vadd.f32 %v825, %v916
        %v940 = vadd.f32 %v826, %v919
        %v941 = vld [vmem:[#allocation2 + $0x9] sm:$0xff]
        %v942 = vld [vmem:[#allocation2 + $0x11] sm:$0xff]
        %v943 = vld [vmem:[#allocation2 + $0x29] sm:$0xff]
        %v944 = vld [vmem:[#allocation2 + $0x31] sm:$0xff]
        %v945 = vld [vmem:[#allocation2 + $0x49] sm:$0xff]
        %v946 = vld [vmem:[#allocation2 + $0x51] sm:$0xff]
        %v947 = vld [vmem:[#allocation2 + $0x69] sm:$0xff]
        %v948 = vld [vmem:[#allocation2 + $0x71] sm:$0xff]
        %v949 = vld [vmem:[#allocation2 + $0x89] sm:$0xff]
        %v950 = vld [vmem:[#allocation2 + $0x91] sm:$0xff]
        %v951 = vld [vmem:[#allocation2 + $0xa9] sm:$0xff]
        %v952 = vld [vmem:[#allocation2 + $0xb1] sm:$0xff]
        %v953 = vld [vmem:[#allocation2 + $0xc9] sm:$0xff]
        %v954 = vld [vmem:[#allocation2 + $0xd1] sm:$0xff]
        %v955 = vld [vmem:[#allocation2 + $0xe9] sm:$0xff]
        %v956 = vld [vmem:[#allocation2 + $0xf1] sm:$0xff]
        %v957 = vld [vmem:[#allocation2 + $0x109] sm:$0xff]
        %v958 = vld [vmem:[#allocation2 + $0x111] sm:$0xff]
        %v959 = vld [vmem:[#allocation2 + $0x129] sm:$0xff]
        %v960 = vld [vmem:[#allocation2 + $0x131] sm:$0xff]
        %v961 = vld [vmem:[#allocation2 + $0x149] sm:$0xff]
        %v962 = vld [vmem:[#allocation2 + $0x151] sm:$0xff]
        %v963 = vld [vmem:[#allocation2 + $0x169] sm:$0xff]
        %v964 = vld [vmem:[#allocation2 + $0x171] sm:$0xff]
        %s965 = scalar_lea.vmem [#allocation5], 256
        %v966 = vld [vmem:[%s965] sm:$0xff]
        %v967 = vld [vmem:[%s965 + $0x8] sm:$0xff]
        %v968 = vld [vmem:[%s965 + $0x10] sm:$0xff]
        %v969 = vld [vmem:[%s965 + $0x18] sm:$0xff]
        %v970 = vld [vmem:[%s965 + $0x20] sm:$0xff]
        %v971 = vld [vmem:[%s965 + $0x28] sm:$0xff]
        %v972 = vld [vmem:[%s965 + $0x30] sm:$0xff]
        %v973 = vld [vmem:[%s965 + $0x38] sm:$0xff]
        %v974 = vld [vmem:[%s965 + $0x40] sm:$0xff]
        %v975 = vld [vmem:[%s965 + $0x48] sm:$0xff]
        %v976 = vld [vmem:[%s965 + $0x50] sm:$0xff]
        %v977 = vld [vmem:[%s965 + $0x58] sm:$0xff]
        %v978 = vld [vmem:[%s965 + $0x60] sm:$0xff]
        %v979 = vld [vmem:[%s965 + $0x68] sm:$0xff]
        %v980 = vld [vmem:[%s965 + $0x70] sm:$0xff]
        %v981 = vld [vmem:[%s965 + $0x78] sm:$0xff]
        %982 = vmatpush.msra.mxu0 %v981
        %983 = vmatpush.msra.mxu0 %v980
        %984 = vmatpush.msra.mxu0 %v979
        %985 = vmatpush.msra.mxu0 %v978
        %986 = vmatpush.msra.mxu0 %v977
        %987 = vmatpush.msra.mxu0 %v976
        %988 = vmatpush.msra.mxu0 %v975
        %989 = vmatpush.msra.mxu0 %v974
        %990 = vmatpush.msra.mxu0 %v973
        %991 = vmatpush.msra.mxu0 %v972
        %992 = vmatpush.msra.mxu0 %v971
        %993 = vmatpush.msra.mxu0 %v970
        %994 = vmatpush.msra.mxu0 %v969
        %995 = vmatpush.msra.mxu0 %v968
        %996 = vmatpush.msra.mxu0 %v967
        %997 = vmatpush.msra.mxu0 %v966
        %998 = vmatmul.f32.gmra.mxu0 %v941
        %v999 = vpop.f32.mrf.mxu0
        %v1000 = vadd.f32 0.0, %v999
        %1001 = vmatmul.f32.gmra.mxu0 %v942
        %v1002 = vpop.f32.mrf.mxu0
        %v1003 = vadd.f32 0.0, %v1002
        %1004 = vmatmul.f32.gmra.mxu0 %v943
        %v1005 = vpop.f32.mrf.mxu0
        %v1006 = vadd.f32 0.0, %v1005
        %1007 = vmatmul.f32.gmra.mxu0 %v944
        %v1008 = vpop.f32.mrf.mxu0
        %v1009 = vadd.f32 0.0, %v1008
        %1010 = vmatmul.f32.gmra.mxu0 %v945
        %v1011 = vpop.f32.mrf.mxu0
        %v1012 = vadd.f32 0.0, %v1011
        %1013 = vmatmul.f32.gmra.mxu0 %v946
        %v1014 = vpop.f32.mrf.mxu0
        %v1015 = vadd.f32 0.0, %v1014
        %1016 = vmatmul.f32.gmra.mxu0 %v947
        %v1017 = vpop.f32.mrf.mxu0
        %v1018 = vadd.f32 0.0, %v1017
        %1019 = vmatmul.f32.gmra.mxu0 %v948
        %v1020 = vpop.f32.mrf.mxu0
        %v1021 = vadd.f32 0.0, %v1020
        %1022 = vmatmul.f32.gmra.mxu0 %v949
        %v1023 = vpop.f32.mrf.mxu0
        %v1024 = vadd.f32 0.0, %v1023
        %1025 = vmatmul.f32.gmra.mxu0 %v950
        %v1026 = vpop.f32.mrf.mxu0
        %v1027 = vadd.f32 0.0, %v1026
        %1028 = vmatmul.f32.gmra.mxu0 %v951
        %v1029 = vpop.f32.mrf.mxu0
        %v1030 = vadd.f32 0.0, %v1029
        %1031 = vmatmul.f32.gmra.mxu0 %v952
        %v1032 = vpop.f32.mrf.mxu0
        %v1033 = vadd.f32 0.0, %v1032
        %1034 = vmatmul.f32.gmra.mxu0 %v953
        %v1035 = vpop.f32.mrf.mxu0
        %v1036 = vadd.f32 0.0, %v1035
        %1037 = vmatmul.f32.gmra.mxu0 %v954
        %v1038 = vpop.f32.mrf.mxu0
        %v1039 = vadd.f32 0.0, %v1038
        %1040 = vmatmul.f32.gmra.mxu0 %v955
        %v1041 = vpop.f32.mrf.mxu0
        %v1042 = vadd.f32 0.0, %v1041
        %1043 = vmatmul.f32.gmra.mxu0 %v956
        %v1044 = vpop.f32.mrf.mxu0
        %v1045 = vadd.f32 0.0, %v1044
        %1046 = vmatmul.f32.gmra.mxu0 %v957
        %v1047 = vpop.f32.mrf.mxu0
        %v1048 = vadd.f32 0.0, %v1047
        %1049 = vmatmul.f32.gmra.mxu0 %v958
        %v1050 = vpop.f32.mrf.mxu0
        %v1051 = vadd.f32 0.0, %v1050
        %1052 = vmatmul.f32.gmra.mxu0 %v959
        %v1053 = vpop.f32.mrf.mxu0
        %v1054 = vadd.f32 0.0, %v1053
        %1055 = vmatmul.f32.gmra.mxu0 %v960
        %v1056 = vpop.f32.mrf.mxu0
        %v1057 = vadd.f32 0.0, %v1056
        %1058 = vdwg.mxu0
        %v1059 = vadd.f32 %v921, %v1000
        %v1060 = vadd.f32 %v922, %v1003
        %v1061 = vadd.f32 %v923, %v1006
        %v1062 = vadd.f32 %v924, %v1009
        %v1063 = vadd.f32 %v925, %v1012
        %v1064 = vadd.f32 %v926, %v1015
        %v1065 = vadd.f32 %v927, %v1018
        %v1066 = vadd.f32 %v928, %v1021
        %v1067 = vadd.f32 %v929, %v1024
        %v1068 = vadd.f32 %v930, %v1027
        %v1069 = vadd.f32 %v931, %v1030
        %v1070 = vadd.f32 %v932, %v1033
        %v1071 = vadd.f32 %v933, %v1036
        %v1072 = vadd.f32 %v934, %v1039
        %v1073 = vadd.f32 %v935, %v1042
        %v1074 = vadd.f32 %v936, %v1045
        %v1075 = vadd.f32 %v937, %v1048
        %v1076 = vadd.f32 %v938, %v1051
        %v1077 = vadd.f32 %v939, %v1054
        %v1078 = vadd.f32 %v940, %v1057
        %s1079 = scalar_lea.vmem [#allocation5], 640
        %v1080 = vld [vmem:[%s1079] sm:$0xff]
        %v1081 = vld [vmem:[%s1079 + $0x8] sm:$0xff]
        %v1082 = vld [vmem:[%s1079 + $0x10] sm:$0xff]
        %v1083 = vld [vmem:[%s1079 + $0x18] sm:$0xff]
        %v1084 = vld [vmem:[%s1079 + $0x20] sm:$0xff]
        %v1085 = vld [vmem:[%s1079 + $0x28] sm:$0xff]
        %v1086 = vld [vmem:[%s1079 + $0x30] sm:$0xff]
        %v1087 = vld [vmem:[%s1079 + $0x38] sm:$0xff]
        %v1088 = vld [vmem:[%s1079 + $0x40] sm:$0xff]
        %v1089 = vld [vmem:[%s1079 + $0x48] sm:$0xff]
        %v1090 = vld [vmem:[%s1079 + $0x50] sm:$0xff]
        %v1091 = vld [vmem:[%s1079 + $0x58] sm:$0xff]
        %v1092 = vld [vmem:[%s1079 + $0x60] sm:$0xff]
        %v1093 = vld [vmem:[%s1079 + $0x68] sm:$0xff]
        %v1094 = vld [vmem:[%s1079 + $0x70] sm:$0xff]
        %v1095 = vld [vmem:[%s1079 + $0x78] sm:$0xff]
        %1096 = vmatpush.msra.mxu0 %v1095
        %1097 = vmatpush.msra.mxu0 %v1094
        %1098 = vmatpush.msra.mxu0 %v1093
        %1099 = vmatpush.msra.mxu0 %v1092
        %1100 = vmatpush.msra.mxu0 %v1091
        %1101 = vmatpush.msra.mxu0 %v1090
        %1102 = vmatpush.msra.mxu0 %v1089
        %1103 = vmatpush.msra.mxu0 %v1088
        %1104 = vmatpush.msra.mxu0 %v1087
        %1105 = vmatpush.msra.mxu0 %v1086
        %1106 = vmatpush.msra.mxu0 %v1085
        %1107 = vmatpush.msra.mxu0 %v1084
        %1108 = vmatpush.msra.mxu0 %v1083
        %1109 = vmatpush.msra.mxu0 %v1082
        %1110 = vmatpush.msra.mxu0 %v1081
        %1111 = vmatpush.msra.mxu0 %v1080
        %1112 = vmatmul.f32.gmra.mxu0 %v943
        %v1113 = vpop.f32.mrf.mxu0
        %v1114 = vadd.f32 0.0, %v1113
        %1115 = vmatmul.f32.gmra.mxu0 %v944
        %v1116 = vpop.f32.mrf.mxu0
        %v1117 = vadd.f32 0.0, %v1116
        %1118 = vmatmul.f32.gmra.mxu0 %v945
        %v1119 = vpop.f32.mrf.mxu0
        %v1120 = vadd.f32 0.0, %v1119
        %1121 = vmatmul.f32.gmra.mxu0 %v946
        %v1122 = vpop.f32.mrf.mxu0
        %v1123 = vadd.f32 0.0, %v1122
        %1124 = vmatmul.f32.gmra.mxu0 %v947
        %v1125 = vpop.f32.mrf.mxu0
        %v1126 = vadd.f32 0.0, %v1125
        %1127 = vmatmul.f32.gmra.mxu0 %v948
        %v1128 = vpop.f32.mrf.mxu0
        %v1129 = vadd.f32 0.0, %v1128
        %1130 = vmatmul.f32.gmra.mxu0 %v949
        %v1131 = vpop.f32.mrf.mxu0
        %v1132 = vadd.f32 0.0, %v1131
        %1133 = vmatmul.f32.gmra.mxu0 %v950
        %v1134 = vpop.f32.mrf.mxu0
        %v1135 = vadd.f32 0.0, %v1134
        %1136 = vmatmul.f32.gmra.mxu0 %v951
        %v1137 = vpop.f32.mrf.mxu0
        %v1138 = vadd.f32 0.0, %v1137
        %1139 = vmatmul.f32.gmra.mxu0 %v952
        %v1140 = vpop.f32.mrf.mxu0
        %v1141 = vadd.f32 0.0, %v1140
        %1142 = vmatmul.f32.gmra.mxu0 %v953
        %v1143 = vpop.f32.mrf.mxu0
        %v1144 = vadd.f32 0.0, %v1143
        %1145 = vmatmul.f32.gmra.mxu0 %v954
        %v1146 = vpop.f32.mrf.mxu0
        %v1147 = vadd.f32 0.0, %v1146
        %1148 = vmatmul.f32.gmra.mxu0 %v955
        %v1149 = vpop.f32.mrf.mxu0
        %v1150 = vadd.f32 0.0, %v1149
        %1151 = vmatmul.f32.gmra.mxu0 %v956
        %v1152 = vpop.f32.mrf.mxu0
        %v1153 = vadd.f32 0.0, %v1152
        %1154 = vmatmul.f32.gmra.mxu0 %v957
        %v1155 = vpop.f32.mrf.mxu0
        %v1156 = vadd.f32 0.0, %v1155
        %1157 = vmatmul.f32.gmra.mxu0 %v958
        %v1158 = vpop.f32.mrf.mxu0
        %v1159 = vadd.f32 0.0, %v1158
        %1160 = vmatmul.f32.gmra.mxu0 %v959
        %v1161 = vpop.f32.mrf.mxu0
        %v1162 = vadd.f32 0.0, %v1161
        %1163 = vmatmul.f32.gmra.mxu0 %v960
        %v1164 = vpop.f32.mrf.mxu0
        %v1165 = vadd.f32 0.0, %v1164
        %1166 = vmatmul.f32.gmra.mxu0 %v961
        %v1167 = vpop.f32.mrf.mxu0
        %v1168 = vadd.f32 0.0, %v1167
        %1169 = vmatmul.f32.gmra.mxu0 %v962
        %v1170 = vpop.f32.mrf.mxu0
        %v1171 = vadd.f32 0.0, %v1170
        %1172 = vdwg.mxu0
        %v1173 = vadd.f32 %v1059, %v1114
        %v1174 = vadd.f32 %v1060, %v1117
        %v1175 = vadd.f32 %v1061, %v1120
        %v1176 = vadd.f32 %v1062, %v1123
        %v1177 = vadd.f32 %v1063, %v1126
        %v1178 = vadd.f32 %v1064, %v1129
        %v1179 = vadd.f32 %v1065, %v1132
        %v1180 = vadd.f32 %v1066, %v1135
        %v1181 = vadd.f32 %v1067, %v1138
        %v1182 = vadd.f32 %v1068, %v1141
        %v1183 = vadd.f32 %v1069, %v1144
        %v1184 = vadd.f32 %v1070, %v1147
        %v1185 = vadd.f32 %v1071, %v1150
        %v1186 = vadd.f32 %v1072, %v1153
        %v1187 = vadd.f32 %v1073, %v1156
        %v1188 = vadd.f32 %v1074, %v1159
        %v1189 = vadd.f32 %v1075, %v1162
        %v1190 = vadd.f32 %v1076, %v1165
        %v1191 = vadd.f32 %v1077, %v1168
        %v1192 = vadd.f32 %v1078, %v1171
        %s1193 = scalar_lea.vmem [#allocation5], 1024
        %v1194 = vld [vmem:[%s1193] sm:$0xff]
        %v1195 = vld [vmem:[%s1193 + $0x8] sm:$0xff]
        %v1196 = vld [vmem:[%s1193 + $0x10] sm:$0xff]
        %v1197 = vld [vmem:[%s1193 + $0x18] sm:$0xff]
        %v1198 = vld [vmem:[%s1193 + $0x20] sm:$0xff]
        %v1199 = vld [vmem:[%s1193 + $0x28] sm:$0xff]
        %v1200 = vld [vmem:[%s1193 + $0x30] sm:$0xff]
        %v1201 = vld [vmem:[%s1193 + $0x38] sm:$0xff]
        %v1202 = vld [vmem:[%s1193 + $0x40] sm:$0xff]
        %v1203 = vld [vmem:[%s1193 + $0x48] sm:$0xff]
        %v1204 = vld [vmem:[%s1193 + $0x50] sm:$0xff]
        %v1205 = vld [vmem:[%s1193 + $0x58] sm:$0xff]
        %v1206 = vld [vmem:[%s1193 + $0x60] sm:$0xff]
        %v1207 = vld [vmem:[%s1193 + $0x68] sm:$0xff]
        %v1208 = vld [vmem:[%s1193 + $0x70] sm:$0xff]
        %v1209 = vld [vmem:[%s1193 + $0x78] sm:$0xff]
        %1210 = vmatpush.msra.mxu0 %v1209
        %1211 = vmatpush.msra.mxu0 %v1208
        %1212 = vmatpush.msra.mxu0 %v1207
        %1213 = vmatpush.msra.mxu0 %v1206
        %1214 = vmatpush.msra.mxu0 %v1205
        %1215 = vmatpush.msra.mxu0 %v1204
        %1216 = vmatpush.msra.mxu0 %v1203
        %1217 = vmatpush.msra.mxu0 %v1202
        %1218 = vmatpush.msra.mxu0 %v1201
        %1219 = vmatpush.msra.mxu0 %v1200
        %1220 = vmatpush.msra.mxu0 %v1199
        %1221 = vmatpush.msra.mxu0 %v1198
        %1222 = vmatpush.msra.mxu0 %v1197
        %1223 = vmatpush.msra.mxu0 %v1196
        %1224 = vmatpush.msra.mxu0 %v1195
        %1225 = vmatpush.msra.mxu0 %v1194
        %1226 = vmatmul.f32.gmra.mxu0 %v945
        %v1227 = vpop.f32.mrf.mxu0
        %v1228 = vadd.f32 0.0, %v1227
        %1229 = vmatmul.f32.gmra.mxu0 %v946
        %v1230 = vpop.f32.mrf.mxu0
        %v1231 = vadd.f32 0.0, %v1230
        %1232 = vmatmul.f32.gmra.mxu0 %v947
        %v1233 = vpop.f32.mrf.mxu0
        %v1234 = vadd.f32 0.0, %v1233
        %1235 = vmatmul.f32.gmra.mxu0 %v948
        %v1236 = vpop.f32.mrf.mxu0
        %v1237 = vadd.f32 0.0, %v1236
        %1238 = vmatmul.f32.gmra.mxu0 %v949
        %v1239 = vpop.f32.mrf.mxu0
        %v1240 = vadd.f32 0.0, %v1239
        %1241 = vmatmul.f32.gmra.mxu0 %v950
        %v1242 = vpop.f32.mrf.mxu0
        %v1243 = vadd.f32 0.0, %v1242
        %1244 = vmatmul.f32.gmra.mxu0 %v951
        %v1245 = vpop.f32.mrf.mxu0
        %v1246 = vadd.f32 0.0, %v1245
        %1247 = vmatmul.f32.gmra.mxu0 %v952
        %v1248 = vpop.f32.mrf.mxu0
        %v1249 = vadd.f32 0.0, %v1248
        %1250 = vmatmul.f32.gmra.mxu0 %v953
        %v1251 = vpop.f32.mrf.mxu0
        %v1252 = vadd.f32 0.0, %v1251
        %1253 = vmatmul.f32.gmra.mxu0 %v954
        %v1254 = vpop.f32.mrf.mxu0
        %v1255 = vadd.f32 0.0, %v1254
        %1256 = vmatmul.f32.gmra.mxu0 %v955
        %v1257 = vpop.f32.mrf.mxu0
        %v1258 = vadd.f32 0.0, %v1257
        %1259 = vmatmul.f32.gmra.mxu0 %v956
        %v1260 = vpop.f32.mrf.mxu0
        %v1261 = vadd.f32 0.0, %v1260
        %1262 = vmatmul.f32.gmra.mxu0 %v957
        %v1263 = vpop.f32.mrf.mxu0
        %v1264 = vadd.f32 0.0, %v1263
        %1265 = vmatmul.f32.gmra.mxu0 %v958
        %v1266 = vpop.f32.mrf.mxu0
        %v1267 = vadd.f32 0.0, %v1266
        %1268 = vmatmul.f32.gmra.mxu0 %v959
        %v1269 = vpop.f32.mrf.mxu0
        %v1270 = vadd.f32 0.0, %v1269
        %1271 = vmatmul.f32.gmra.mxu0 %v960
        %v1272 = vpop.f32.mrf.mxu0
        %v1273 = vadd.f32 0.0, %v1272
        %1274 = vmatmul.f32.gmra.mxu0 %v961
        %v1275 = vpop.f32.mrf.mxu0
        %v1276 = vadd.f32 0.0, %v1275
        %1277 = vmatmul.f32.gmra.mxu0 %v962
        %v1278 = vpop.f32.mrf.mxu0
        %v1279 = vadd.f32 0.0, %v1278
        %1280 = vmatmul.f32.gmra.mxu0 %v963
        %v1281 = vpop.f32.mrf.mxu0
        %v1282 = vadd.f32 0.0, %v1281
        %1283 = vmatmul.f32.gmra.mxu0 %v964
        %v1284 = vpop.f32.mrf.mxu0
        %v1285 = vadd.f32 0.0, %v1284
        %1286 = vdwg.mxu0
        %v1287 = vadd.f32 %v1173, %v1228
        %v1288 = vadd.f32 %v1174, %v1231
        %v1289 = vadd.f32 %v1175, %v1234
        %v1290 = vadd.f32 %v1176, %v1237
        %v1291 = vadd.f32 %v1177, %v1240
        %v1292 = vadd.f32 %v1178, %v1243
        %v1293 = vadd.f32 %v1179, %v1246
        %v1294 = vadd.f32 %v1180, %v1249
        %v1295 = vadd.f32 %v1181, %v1252
        %v1296 = vadd.f32 %v1182, %v1255
        %v1297 = vadd.f32 %v1183, %v1258
        %v1298 = vadd.f32 %v1184, %v1261
        %v1299 = vadd.f32 %v1185, %v1264
        %v1300 = vadd.f32 %v1186, %v1267
        %v1301 = vadd.f32 %v1187, %v1270
        %v1302 = vadd.f32 %v1188, %v1273
        %v1303 = vadd.f32 %v1189, %v1276
        %v1304 = vadd.f32 %v1190, %v1279
        %v1305 = vadd.f32 %v1191, %v1282
        %v1306 = vadd.f32 %v1192, %v1285
        %v1308 = vperm.slane %v248, 0
        %v1310 = vadd.f32 %v1287, %v1308
        %v1311 = vadd.f32 %v1288, %v1308
        %v1312 = vadd.f32 %v1289, %v1308
        %v1313 = vadd.f32 %v1290, %v1308
        %v1314 = vadd.f32 %v1291, %v1308
        %v1315 = vadd.f32 %v1292, %v1308
        %v1316 = vadd.f32 %v1293, %v1308
        %v1317 = vadd.f32 %v1294, %v1308
        %v1318 = vadd.f32 %v1295, %v1308
        %v1319 = vadd.f32 %v1296, %v1308
        %v1320 = vadd.f32 %v1297, %v1308
        %v1321 = vadd.f32 %v1298, %v1308
        %v1322 = vadd.f32 %v1299, %v1308
        %v1323 = vadd.f32 %v1300, %v1308
        %v1324 = vadd.f32 %v1301, %v1308
        %v1325 = vadd.f32 %v1302, %v1308
        %v1326 = vadd.f32 %v1303, %v1308
        %v1327 = vadd.f32 %v1304, %v1308
        %v1328 = vadd.f32 %v1305, %v1308
        %v1329 = vadd.f32 %v1306, %v1308
        %v1330 = vmax.f32 %v1310, 0.0
        %v1331 = vmax.f32 %v1311, 0.0
        %v1332 = vmax.f32 %v1312, 0.0
        %v1333 = vmax.f32 %v1313, 0.0
        %v1334 = vmax.f32 %v1314, 0.0
        %v1335 = vmax.f32 %v1315, 0.0
        %v1336 = vmax.f32 %v1316, 0.0
        %v1337 = vmax.f32 %v1317, 0.0
        %v1338 = vmax.f32 %v1318, 0.0
        %v1339 = vmax.f32 %v1319, 0.0
        %v1340 = vmax.f32 %v1320, 0.0
        %v1341 = vmax.f32 %v1321, 0.0
        %v1342 = vmax.f32 %v1322, 0.0
        %v1343 = vmax.f32 %v1323, 0.0
        %v1344 = vmax.f32 %v1324, 0.0
        %v1345 = vmax.f32 %v1325, 0.0
        %v1346 = vmax.f32 %v1326, 0.0
        %v1347 = vmax.f32 %v1327, 0.0
        %v1348 = vmax.f32 %v1328, 0.0
        %v1349 = vmax.f32 %v1329, 0.0
        %1350 = vst [vmem:[#allocation3 + $0x8] sm:$0xff] %v1330
        %1351 = vst [vmem:[#allocation3 + $0x10] sm:$0xff] %v1331
        %1352 = vst [vmem:[#allocation3 + $0x28] sm:$0xff] %v1332
        %1353 = vst [vmem:[#allocation3 + $0x30] sm:$0xff] %v1333
        %1354 = vst [vmem:[#allocation3 + $0x48] sm:$0xff] %v1334
        %1355 = vst [vmem:[#allocation3 + $0x50] sm:$0xff] %v1335
        %1356 = vst [vmem:[#allocation3 + $0x68] sm:$0xff] %v1336
        %1357 = vst [vmem:[#allocation3 + $0x70] sm:$0xff] %v1337
        %1358 = vst [vmem:[#allocation3 + $0x88] sm:$0xff] %v1338
        %1359 = vst [vmem:[#allocation3 + $0x90] sm:$0xff] %v1339
        %1360 = vst [vmem:[#allocation3 + $0xa8] sm:$0xff] %v1340
        %1361 = vst [vmem:[#allocation3 + $0xb0] sm:$0xff] %v1341
        %1362 = vst [vmem:[#allocation3 + $0xc8] sm:$0xff] %v1342
        %1363 = vst [vmem:[#allocation3 + $0xd0] sm:$0xff] %v1343
        %1364 = vst [vmem:[#allocation3 + $0xe8] sm:$0xff] %v1344
        %1365 = vst [vmem:[#allocation3 + $0xf0] sm:$0xff] %v1345
        %1366 = vst [vmem:[#allocation3 + $0x108] sm:$0xff] %v1346
        %1367 = vst [vmem:[#allocation3 + $0x110] sm:$0xff] %v1347
        %1368 = vst [vmem:[#allocation3 + $0x128] sm:$0xff] %v1348
        %1369 = vst [vmem:[#allocation3 + $0x130] sm:$0xff] %v1349
        %1370 = vst [vmem:[#allocation3 + $0x7] sm:$0x1] 0.0
        %1371 = vst [vmem:[#allocation3 + $0x27] sm:$0x1] 0.0
        %1372 = vst [vmem:[#allocation3 + $0x47] sm:$0x1] 0.0
        %1373 = vst [vmem:[#allocation3 + $0x67] sm:$0x1] 0.0
        %1374 = vst [vmem:[#allocation3 + $0x87] sm:$0x1] 0.0
        %1375 = vst [vmem:[#allocation3 + $0xa7] sm:$0x1] 0.0
        %1376 = vst [vmem:[#allocation3 + $0xc7] sm:$0x1] 0.0
        %1377 = vst [vmem:[#allocation3 + $0xe7] sm:$0x1] 0.0
        %1378 = vst [vmem:[#allocation3 + $0x107] sm:$0x1] 0.0
        %1379 = vst [vmem:[#allocation3 + $0x127] sm:$0x1] 0.0
        %1380 = vst [vmem:[#allocation3 + $0x18] sm:$0x1] 0.0
        %1381 = vst [vmem:[#allocation3 + $0x38] sm:$0x1] 0.0
        %1382 = vst [vmem:[#allocation3 + $0x58] sm:$0x1] 0.0
        %1383 = vst [vmem:[#allocation3 + $0x78] sm:$0x1] 0.0
        %1384 = vst [vmem:[#allocation3 + $0x98] sm:$0x1] 0.0
        %1385 = vst [vmem:[#allocation3 + $0xb8] sm:$0x1] 0.0
        %1386 = vst [vmem:[#allocation3 + $0xd8] sm:$0x1] 0.0
        %1387 = vst [vmem:[#allocation3 + $0xf8] sm:$0x1] 0.0
        %1388 = vst [vmem:[#allocation3 + $0x118] sm:$0x1] 0.0
        %1389 = vst [vmem:[#allocation3 + $0x138] sm:$0x1] 0.0
        %p1390 = scmp.eq.s32.totalorder %s26, 0
        // Predicated region
        $region49: #{tpu_custom_call.1} parent=35 // pred_check
          %p1391 = pneg %p1390
        $region50: #{tpu_custom_call.1} parent=35 // pred_check_branch
          %1393 = sbr.rel (%p1391) target = $region52
        $region51: #{tpu_custom_call.1} parent=35 // pred_region
          %1394 = vst [vmem:[#allocation3] sm:$0xff] 0.0
          %1395 = vst [vmem:[#allocation3 + $0x8] sm:$0xff] 0.0
          %1396 = vst [vmem:[#allocation3 + $0x10] sm:$0xff] 0.0
          %1397 = vst [vmem:[#allocation3 + $0x18] sm:$0xff] 0.0
        $region52: #{tpu_custom_call.1} parent=35 // pred_fallthru
          _
        %p1398 = scmp.eq.s32.totalorder %s26, 1
        // Predicated region
        $region53: #{tpu_custom_call.1} parent=35 // pred_check
          %p1399 = pneg %p1398
        $region54: #{tpu_custom_call.1} parent=35 // pred_check_branch
          %1401 = sbr.rel (%p1399) target = $region56
        $region55: #{tpu_custom_call.1} parent=35 // pred_region
          %s1402 = scalar_lea.vmem [#allocation3], 288
          %1403 = vst [vmem:[%s1402] sm:$0xff] 0.0
          %1404 = vst [vmem:[%s1402 + $0x8] sm:$0xff] 0.0
          %1405 = vst [vmem:[%s1402 + $0x10] sm:$0xff] 0.0
          %1406 = vst [vmem:[%s1402 + $0x18] sm:$0xff] 0.0
        $region56: #{tpu_custom_call.1} parent=35 // pred_fallthru
          _
        %v1407 = vld [vmem:[#allocation3 + $0x7] sm:$0xff]
        %v1408 = vld [vmem:[#allocation3 + $0xf] sm:$0xff]
        %v1409 = vld [vmem:[#allocation3 + $0x27] sm:$0xff]
        %v1410 = vld [vmem:[#allocation3 + $0x2f] sm:$0xff]
        %v1411 = vld [vmem:[#allocation3 + $0x47] sm:$0xff]
        %v1412 = vld [vmem:[#allocation3 + $0x4f] sm:$0xff]
        %v1413 = vld [vmem:[#allocation3 + $0x67] sm:$0xff]
        %v1414 = vld [vmem:[#allocation3 + $0x6f] sm:$0xff]
        %v1415 = vld [vmem:[#allocation3 + $0x87] sm:$0xff]
        %v1416 = vld [vmem:[#allocation3 + $0x8f] sm:$0xff]
        %v1417 = vld [vmem:[#allocation3 + $0xa7] sm:$0xff]
        %v1418 = vld [vmem:[#allocation3 + $0xaf] sm:$0xff]
        %v1419 = vld [vmem:[#allocation3 + $0xc7] sm:$0xff]
        %v1420 = vld [vmem:[#allocation3 + $0xcf] sm:$0xff]
        %v1421 = vld [vmem:[#allocation3 + $0xe7] sm:$0xff]
        %v1422 = vld [vmem:[#allocation3 + $0xef] sm:$0xff]
        %v1423 = vld [vmem:[#allocation3 + $0x107] sm:$0xff]
        %v1424 = vld [vmem:[#allocation3 + $0x10f] sm:$0xff]
        %v1425 = vld [vmem:[#allocation3 + $0x127] sm:$0xff]
        %v1426 = vld [vmem:[#allocation3 + $0x12f] sm:$0xff]
        %v1427 = vld [vmem:[#allocation8] sm:$0xff]
        %v1428 = vld [vmem:[#allocation8 + $0x8] sm:$0xff]
        %v1429 = vld [vmem:[#allocation8 + $0x10] sm:$0xff]
        %v1430 = vld [vmem:[#allocation8 + $0x18] sm:$0xff]
        %v1431 = vld [vmem:[#allocation8 + $0x20] sm:$0xff]
        %v1432 = vld [vmem:[#allocation8 + $0x28] sm:$0xff]
        %v1433 = vld [vmem:[#allocation8 + $0x30] sm:$0xff]
        %v1434 = vld [vmem:[#allocation8 + $0x38] sm:$0xff]
        %v1435 = vld [vmem:[#allocation8 + $0x40] sm:$0xff]
        %v1436 = vld [vmem:[#allocation8 + $0x48] sm:$0xff]
        %v1437 = vld [vmem:[#allocation8 + $0x50] sm:$0xff]
        %v1438 = vld [vmem:[#allocation8 + $0x58] sm:$0xff]
        %v1439 = vld [vmem:[#allocation8 + $0x60] sm:$0xff]
        %v1440 = vld [vmem:[#allocation8 + $0x68] sm:$0xff]
        %v1441 = vld [vmem:[#allocation8 + $0x70] sm:$0xff]
        %v1442 = vld [vmem:[#allocation8 + $0x78] sm:$0xff]
        %s1443 = scalar_lea.vmem [#allocation8], 384
        %v1444 = vld [vmem:[%s1443] sm:$0xff]
        %v1445 = vld [vmem:[%s1443 + $0x8] sm:$0xff]
        %v1446 = vld [vmem:[%s1443 + $0x10] sm:$0xff]
        %v1447 = vld [vmem:[%s1443 + $0x18] sm:$0xff]
        %v1448 = vld [vmem:[%s1443 + $0x20] sm:$0xff]
        %v1449 = vld [vmem:[%s1443 + $0x28] sm:$0xff]
        %v1450 = vld [vmem:[%s1443 + $0x30] sm:$0xff]
        %v1451 = vld [vmem:[%s1443 + $0x38] sm:$0xff]
        %v1452 = vld [vmem:[%s1443 + $0x40] sm:$0xff]
        %v1453 = vld [vmem:[%s1443 + $0x48] sm:$0xff]
        %v1454 = vld [vmem:[%s1443 + $0x50] sm:$0xff]
        %v1455 = vld [vmem:[%s1443 + $0x58] sm:$0xff]
        %v1456 = vld [vmem:[%s1443 + $0x60] sm:$0xff]
        %v1457 = vld [vmem:[%s1443 + $0x68] sm:$0xff]
        %v1458 = vld [vmem:[%s1443 + $0x70] sm:$0xff]
        %v1459 = vld [vmem:[%s1443 + $0x78] sm:$0xff]
        %1460 = vmatpush.msra.mxu0 %v1459
        %1461 = vmatpush.msra.mxu0 %v1458
        %1462 = vmatpush.msra.mxu0 %v1457
        %1463 = vmatpush.msra.mxu0 %v1456
        %1464 = vmatpush.msra.mxu0 %v1455
        %1465 = vmatpush.msra.mxu0 %v1454
        %1466 = vmatpush.msra.mxu0 %v1453
        %1467 = vmatpush.msra.mxu0 %v1452
        %1468 = vmatpush.msra.mxu0 %v1451
        %1469 = vmatpush.msra.mxu0 %v1450
        %1470 = vmatpush.msra.mxu0 %v1449
        %1471 = vmatpush.msra.mxu0 %v1448
        %1472 = vmatpush.msra.mxu0 %v1447
        %1473 = vmatpush.msra.mxu0 %v1446
        %1474 = vmatpush.msra.mxu0 %v1445
        %1475 = vmatpush.msra.mxu0 %v1444
        %1476 = vmatmul.f32.gmra.mxu0 %v1409
        %v1477 = vpop.f32.mrf.mxu0
        %v1478 = vadd.f32 0.0, %v1477
        %1479 = vmatmul.f32.gmra.mxu0 %v1410
        %v1480 = vpop.f32.mrf.mxu0
        %v1481 = vadd.f32 0.0, %v1480
        %1482 = vmatmul.f32.gmra.mxu0 %v1411
        %v1483 = vpop.f32.mrf.mxu0
        %v1484 = vadd.f32 0.0, %v1483
        %1485 = vmatmul.f32.gmra.mxu0 %v1412
        %v1486 = vpop.f32.mrf.mxu0
        %v1487 = vadd.f32 0.0, %v1486
        %1488 = vmatmul.f32.gmra.mxu0 %v1413
        %v1489 = vpop.f32.mrf.mxu0
        %v1490 = vadd.f32 0.0, %v1489
        %1491 = vmatmul.f32.gmra.mxu0 %v1414
        %v1492 = vpop.f32.mrf.mxu0
        %v1493 = vadd.f32 0.0, %v1492
        %1494 = vmatmul.f32.gmra.mxu0 %v1415
        %v1495 = vpop.f32.mrf.mxu0
        %v1496 = vadd.f32 0.0, %v1495
        %1497 = vmatmul.f32.gmra.mxu0 %v1416
        %v1498 = vpop.f32.mrf.mxu0
        %v1499 = vadd.f32 0.0, %v1498
        %1500 = vmatmul.f32.gmra.mxu0 %v1417
        %v1501 = vpop.f32.mrf.mxu0
        %v1502 = vadd.f32 0.0, %v1501
        %1503 = vmatmul.f32.gmra.mxu0 %v1418
        %v1504 = vpop.f32.mrf.mxu0
        %v1505 = vadd.f32 0.0, %v1504
        %1506 = vmatmul.f32.gmra.mxu0 %v1419
        %v1507 = vpop.f32.mrf.mxu0
        %v1508 = vadd.f32 0.0, %v1507
        %1509 = vmatmul.f32.gmra.mxu0 %v1420
        %v1510 = vpop.f32.mrf.mxu0
        %v1511 = vadd.f32 0.0, %v1510
        %1512 = vmatmul.f32.gmra.mxu0 %v1421
        %v1513 = vpop.f32.mrf.mxu0
        %v1514 = vadd.f32 0.0, %v1513
        %1515 = vmatmul.f32.gmra.mxu0 %v1422
        %v1516 = vpop.f32.mrf.mxu0
        %v1517 = vadd.f32 0.0, %v1516
        %1518 = vmatmul.f32.gmra.mxu0 %v1423
        %v1519 = vpop.f32.mrf.mxu0
        %v1520 = vadd.f32 0.0, %v1519
        %1521 = vmatmul.f32.gmra.mxu0 %v1424
        %v1522 = vpop.f32.mrf.mxu0
        %v1523 = vadd.f32 0.0, %v1522
        %1524 = vdwg.mxu0
        %1525 = vmatpush.msra.mxu0 %v1442
        %1526 = vmatpush.msra.mxu0 %v1441
        %1527 = vmatpush.msra.mxu0 %v1440
        %1528 = vmatpush.msra.mxu0 %v1439
        %1529 = vmatpush.msra.mxu0 %v1438
        %1530 = vmatpush.msra.mxu0 %v1437
        %1531 = vmatpush.msra.mxu0 %v1436
        %1532 = vmatpush.msra.mxu0 %v1435
        %1533 = vmatpush.msra.mxu0 %v1434
        %1534 = vmatpush.msra.mxu0 %v1433
        %1535 = vmatpush.msra.mxu0 %v1432
        %1536 = vmatpush.msra.mxu0 %v1431
        %1537 = vmatpush.msra.mxu0 %v1430
        %1538 = vmatpush.msra.mxu0 %v1429
        %1539 = vmatpush.msra.mxu0 %v1428
        %1540 = vmatpush.msra.mxu0 %v1427
        %1541 = vmatmul.f32.gmra.mxu0 %v1407
        %v1542 = vpop.f32.mrf.mxu0
        %v1543 = vadd.f32 %v1478, %v1542
        %1544 = vmatmul.f32.gmra.mxu0 %v1408
        %v1545 = vpop.f32.mrf.mxu0
        %v1546 = vadd.f32 %v1481, %v1545
        %1547 = vmatmul.f32.gmra.mxu0 %v1409
        %v1548 = vpop.f32.mrf.mxu0
        %v1549 = vadd.f32 %v1484, %v1548
        %1550 = vmatmul.f32.gmra.mxu0 %v1410
        %v1551 = vpop.f32.mrf.mxu0
        %v1552 = vadd.f32 %v1487, %v1551
        %1553 = vmatmul.f32.gmra.mxu0 %v1411
        %v1554 = vpop.f32.mrf.mxu0
        %v1555 = vadd.f32 %v1490, %v1554
        %1556 = vmatmul.f32.gmra.mxu0 %v1412
        %v1557 = vpop.f32.mrf.mxu0
        %v1558 = vadd.f32 %v1493, %v1557
        %1559 = vmatmul.f32.gmra.mxu0 %v1413
        %v1560 = vpop.f32.mrf.mxu0
        %v1561 = vadd.f32 %v1496, %v1560
        %1562 = vmatmul.f32.gmra.mxu0 %v1414
        %v1563 = vpop.f32.mrf.mxu0
        %v1564 = vadd.f32 %v1499, %v1563
        %1565 = vmatmul.f32.gmra.mxu0 %v1415
        %v1566 = vpop.f32.mrf.mxu0
        %v1567 = vadd.f32 %v1502, %v1566
        %1568 = vmatmul.f32.gmra.mxu0 %v1416
        %v1569 = vpop.f32.mrf.mxu0
        %v1570 = vadd.f32 %v1505, %v1569
        %1571 = vmatmul.f32.gmra.mxu0 %v1417
        %v1572 = vpop.f32.mrf.mxu0
        %v1573 = vadd.f32 %v1508, %v1572
        %1574 = vmatmul.f32.gmra.mxu0 %v1418
        %v1575 = vpop.f32.mrf.mxu0
        %v1576 = vadd.f32 %v1511, %v1575
        %1577 = vmatmul.f32.gmra.mxu0 %v1419
        %v1578 = vpop.f32.mrf.mxu0
        %v1579 = vadd.f32 %v1514, %v1578
        %1580 = vmatmul.f32.gmra.mxu0 %v1420
        %v1581 = vpop.f32.mrf.mxu0
        %v1582 = vadd.f32 %v1517, %v1581
        %1583 = vmatmul.f32.gmra.mxu0 %v1421
        %v1584 = vpop.f32.mrf.mxu0
        %v1585 = vadd.f32 %v1520, %v1584
        %1586 = vmatmul.f32.gmra.mxu0 %v1422
        %v1587 = vpop.f32.mrf.mxu0
        %v1588 = vadd.f32 %v1523, %v1587
        %1589 = vdwg.mxu0
        %s1590 = scalar_lea.vmem [#allocation8], 768
        %v1591 = vld [vmem:[%s1590] sm:$0xff]
        %v1592 = vld [vmem:[%s1590 + $0x8] sm:$0xff]
        %v1593 = vld [vmem:[%s1590 + $0x10] sm:$0xff]
        %v1594 = vld [vmem:[%s1590 + $0x18] sm:$0xff]
        %v1595 = vld [vmem:[%s1590 + $0x20] sm:$0xff]
        %v1596 = vld [vmem:[%s1590 + $0x28] sm:$0xff]
        %v1597 = vld [vmem:[%s1590 + $0x30] sm:$0xff]
        %v1598 = vld [vmem:[%s1590 + $0x38] sm:$0xff]
        %v1599 = vld [vmem:[%s1590 + $0x40] sm:$0xff]
        %v1600 = vld [vmem:[%s1590 + $0x48] sm:$0xff]
        %v1601 = vld [vmem:[%s1590 + $0x50] sm:$0xff]
        %v1602 = vld [vmem:[%s1590 + $0x58] sm:$0xff]
        %v1603 = vld [vmem:[%s1590 + $0x60] sm:$0xff]
        %v1604 = vld [vmem:[%s1590 + $0x68] sm:$0xff]
        %v1605 = vld [vmem:[%s1590 + $0x70] sm:$0xff]
        %v1606 = vld [vmem:[%s1590 + $0x78] sm:$0xff]
        %1607 = vmatpush.msra.mxu0 %v1606
        %1608 = vmatpush.msra.mxu0 %v1605
        %1609 = vmatpush.msra.mxu0 %v1604
        %1610 = vmatpush.msra.mxu0 %v1603
        %1611 = vmatpush.msra.mxu0 %v1602
        %1612 = vmatpush.msra.mxu0 %v1601
        %1613 = vmatpush.msra.mxu0 %v1600
        %1614 = vmatpush.msra.mxu0 %v1599
        %1615 = vmatpush.msra.mxu0 %v1598
        %1616 = vmatpush.msra.mxu0 %v1597
        %1617 = vmatpush.msra.mxu0 %v1596
        %1618 = vmatpush.msra.mxu0 %v1595
        %1619 = vmatpush.msra.mxu0 %v1594
        %1620 = vmatpush.msra.mxu0 %v1593
        %1621 = vmatpush.msra.mxu0 %v1592
        %1622 = vmatpush.msra.mxu0 %v1591
        %1623 = vmatmul.f32.gmra.mxu0 %v1411
        %v1624 = vpop.f32.mrf.mxu0
        %v1625 = vadd.f32 0.0, %v1624
        %1626 = vmatmul.f32.gmra.mxu0 %v1412
        %v1627 = vpop.f32.mrf.mxu0
        %v1628 = vadd.f32 0.0, %v1627
        %1629 = vmatmul.f32.gmra.mxu0 %v1413
        %v1630 = vpop.f32.mrf.mxu0
        %v1631 = vadd.f32 0.0, %v1630
        %1632 = vmatmul.f32.gmra.mxu0 %v1414
        %v1633 = vpop.f32.mrf.mxu0
        %v1634 = vadd.f32 0.0, %v1633
        %1635 = vmatmul.f32.gmra.mxu0 %v1415
        %v1636 = vpop.f32.mrf.mxu0
        %v1637 = vadd.f32 0.0, %v1636
        %1638 = vmatmul.f32.gmra.mxu0 %v1416
        %v1639 = vpop.f32.mrf.mxu0
        %v1640 = vadd.f32 0.0, %v1639
        %1641 = vmatmul.f32.gmra.mxu0 %v1417
        %v1642 = vpop.f32.mrf.mxu0
        %v1643 = vadd.f32 0.0, %v1642
        %1644 = vmatmul.f32.gmra.mxu0 %v1418
        %v1645 = vpop.f32.mrf.mxu0
        %v1646 = vadd.f32 0.0, %v1645
        %1647 = vmatmul.f32.gmra.mxu0 %v1419
        %v1648 = vpop.f32.mrf.mxu0
        %v1649 = vadd.f32 0.0, %v1648
        %1650 = vmatmul.f32.gmra.mxu0 %v1420
        %v1651 = vpop.f32.mrf.mxu0
        %v1652 = vadd.f32 0.0, %v1651
        %1653 = vmatmul.f32.gmra.mxu0 %v1421
        %v1654 = vpop.f32.mrf.mxu0
        %v1655 = vadd.f32 0.0, %v1654
        %1656 = vmatmul.f32.gmra.mxu0 %v1422
        %v1657 = vpop.f32.mrf.mxu0
        %v1658 = vadd.f32 0.0, %v1657
        %1659 = vmatmul.f32.gmra.mxu0 %v1423
        %v1660 = vpop.f32.mrf.mxu0
        %v1661 = vadd.f32 0.0, %v1660
        %1662 = vmatmul.f32.gmra.mxu0 %v1424
        %v1663 = vpop.f32.mrf.mxu0
        %v1664 = vadd.f32 0.0, %v1663
        %1665 = vmatmul.f32.gmra.mxu0 %v1425
        %v1666 = vpop.f32.mrf.mxu0
        %v1667 = vadd.f32 0.0, %v1666
        %1668 = vmatmul.f32.gmra.mxu0 %v1426
        %v1669 = vpop.f32.mrf.mxu0
        %v1670 = vadd.f32 0.0, %v1669
        %1671 = vdwg.mxu0
        %v1672 = vadd.f32 %v1543, %v1625
        %v1673 = vadd.f32 %v1546, %v1628
        %v1674 = vadd.f32 %v1549, %v1631
        %v1675 = vadd.f32 %v1552, %v1634
        %v1676 = vadd.f32 %v1555, %v1637
        %v1677 = vadd.f32 %v1558, %v1640
        %v1678 = vadd.f32 %v1561, %v1643
        %v1679 = vadd.f32 %v1564, %v1646
        %v1680 = vadd.f32 %v1567, %v1649
        %v1681 = vadd.f32 %v1570, %v1652
        %v1682 = vadd.f32 %v1573, %v1655
        %v1683 = vadd.f32 %v1576, %v1658
        %v1684 = vadd.f32 %v1579, %v1661
        %v1685 = vadd.f32 %v1582, %v1664
        %v1686 = vadd.f32 %v1585, %v1667
        %v1687 = vadd.f32 %v1588, %v1670
        %v1688 = vld [vmem:[#allocation3 + $0x8] sm:$0xff]
        %v1689 = vld [vmem:[#allocation3 + $0x10] sm:$0xff]
        %v1690 = vld [vmem:[#allocation3 + $0x28] sm:$0xff]
        %v1691 = vld [vmem:[#allocation3 + $0x30] sm:$0xff]
        %v1692 = vld [vmem:[#allocation3 + $0x48] sm:$0xff]
        %v1693 = vld [vmem:[#allocation3 + $0x50] sm:$0xff]
        %v1694 = vld [vmem:[#allocation3 + $0x68] sm:$0xff]
        %v1695 = vld [vmem:[#allocation3 + $0x70] sm:$0xff]
        %v1696 = vld [vmem:[#allocation3 + $0x88] sm:$0xff]
        %v1697 = vld [vmem:[#allocation3 + $0x90] sm:$0xff]
        %v1698 = vld [vmem:[#allocation3 + $0xa8] sm:$0xff]
        %v1699 = vld [vmem:[#allocation3 + $0xb0] sm:$0xff]
        %v1700 = vld [vmem:[#allocation3 + $0xc8] sm:$0xff]
        %v1701 = vld [vmem:[#allocation3 + $0xd0] sm:$0xff]
        %v1702 = vld [vmem:[#allocation3 + $0xe8] sm:$0xff]
        %v1703 = vld [vmem:[#allocation3 + $0xf0] sm:$0xff]
        %v1704 = vld [vmem:[#allocation3 + $0x108] sm:$0xff]
        %v1705 = vld [vmem:[#allocation3 + $0x110] sm:$0xff]
        %v1706 = vld [vmem:[#allocation3 + $0x128] sm:$0xff]
        %v1707 = vld [vmem:[#allocation3 + $0x130] sm:$0xff]
        %s1708 = scalar_lea.vmem [#allocation8], 128
        %v1709 = vld [vmem:[%s1708] sm:$0xff]
        %v1710 = vld [vmem:[%s1708 + $0x8] sm:$0xff]
        %v1711 = vld [vmem:[%s1708 + $0x10] sm:$0xff]
        %v1712 = vld [vmem:[%s1708 + $0x18] sm:$0xff]
        %v1713 = vld [vmem:[%s1708 + $0x20] sm:$0xff]
        %v1714 = vld [vmem:[%s1708 + $0x28] sm:$0xff]
        %v1715 = vld [vmem:[%s1708 + $0x30] sm:$0xff]
        %v1716 = vld [vmem:[%s1708 + $0x38] sm:$0xff]
        %v1717 = vld [vmem:[%s1708 + $0x40] sm:$0xff]
        %v1718 = vld [vmem:[%s1708 + $0x48] sm:$0xff]
        %v1719 = vld [vmem:[%s1708 + $0x50] sm:$0xff]
        %v1720 = vld [vmem:[%s1708 + $0x58] sm:$0xff]
        %v1721 = vld [vmem:[%s1708 + $0x60] sm:$0xff]
        %v1722 = vld [vmem:[%s1708 + $0x68] sm:$0xff]
        %v1723 = vld [vmem:[%s1708 + $0x70] sm:$0xff]
        %v1724 = vld [vmem:[%s1708 + $0x78] sm:$0xff]
        %1725 = vmatpush.msra.mxu0 %v1724
        %1726 = vmatpush.msra.mxu0 %v1723
        %1727 = vmatpush.msra.mxu0 %v1722
        %1728 = vmatpush.msra.mxu0 %v1721
        %1729 = vmatpush.msra.mxu0 %v1720
        %1730 = vmatpush.msra.mxu0 %v1719
        %1731 = vmatpush.msra.mxu0 %v1718
        %1732 = vmatpush.msra.mxu0 %v1717
        %1733 = vmatpush.msra.mxu0 %v1716
        %1734 = vmatpush.msra.mxu0 %v1715
        %1735 = vmatpush.msra.mxu0 %v1714
        %1736 = vmatpush.msra.mxu0 %v1713
        %1737 = vmatpush.msra.mxu0 %v1712
        %1738 = vmatpush.msra.mxu0 %v1711
        %1739 = vmatpush.msra.mxu0 %v1710
        %1740 = vmatpush.msra.mxu0 %v1709
        %1741 = vmatmul.f32.gmra.mxu0 %v1688
        %v1742 = vpop.f32.mrf.mxu0
        %v1743 = vadd.f32 0.0, %v1742
        %1744 = vmatmul.f32.gmra.mxu0 %v1689
        %v1745 = vpop.f32.mrf.mxu0
        %v1746 = vadd.f32 0.0, %v1745
        %1747 = vmatmul.f32.gmra.mxu0 %v1690
        %v1748 = vpop.f32.mrf.mxu0
        %v1749 = vadd.f32 0.0, %v1748
        %1750 = vmatmul.f32.gmra.mxu0 %v1691
        %v1751 = vpop.f32.mrf.mxu0
        %v1752 = vadd.f32 0.0, %v1751
        %1753 = vmatmul.f32.gmra.mxu0 %v1692
        %v1754 = vpop.f32.mrf.mxu0
        %v1755 = vadd.f32 0.0, %v1754
        %1756 = vmatmul.f32.gmra.mxu0 %v1693
        %v1757 = vpop.f32.mrf.mxu0
        %v1758 = vadd.f32 0.0, %v1757
        %1759 = vmatmul.f32.gmra.mxu0 %v1694
        %v1760 = vpop.f32.mrf.mxu0
        %v1761 = vadd.f32 0.0, %v1760
        %1762 = vmatmul.f32.gmra.mxu0 %v1695
        %v1763 = vpop.f32.mrf.mxu0
        %v1764 = vadd.f32 0.0, %v1763
        %1765 = vmatmul.f32.gmra.mxu0 %v1696
        %v1766 = vpop.f32.mrf.mxu0
        %v1767 = vadd.f32 0.0, %v1766
        %1768 = vmatmul.f32.gmra.mxu0 %v1697
        %v1769 = vpop.f32.mrf.mxu0
        %v1770 = vadd.f32 0.0, %v1769
        %1771 = vmatmul.f32.gmra.mxu0 %v1698
        %v1772 = vpop.f32.mrf.mxu0
        %v1773 = vadd.f32 0.0, %v1772
        %1774 = vmatmul.f32.gmra.mxu0 %v1699
        %v1775 = vpop.f32.mrf.mxu0
        %v1776 = vadd.f32 0.0, %v1775
        %1777 = vmatmul.f32.gmra.mxu0 %v1700
        %v1778 = vpop.f32.mrf.mxu0
        %v1779 = vadd.f32 0.0, %v1778
        %1780 = vmatmul.f32.gmra.mxu0 %v1701
        %v1781 = vpop.f32.mrf.mxu0
        %v1782 = vadd.f32 0.0, %v1781
        %1783 = vmatmul.f32.gmra.mxu0 %v1702
        %v1784 = vpop.f32.mrf.mxu0
        %v1785 = vadd.f32 0.0, %v1784
        %1786 = vmatmul.f32.gmra.mxu0 %v1703
        %v1787 = vpop.f32.mrf.mxu0
        %v1788 = vadd.f32 0.0, %v1787
        %1789 = vdwg.mxu0
        %v1790 = vadd.f32 %v1672, %v1743
        %v1791 = vadd.f32 %v1673, %v1746
        %v1792 = vadd.f32 %v1674, %v1749
        %v1793 = vadd.f32 %v1675, %v1752
        %v1794 = vadd.f32 %v1676, %v1755
        %v1795 = vadd.f32 %v1677, %v1758
        %v1796 = vadd.f32 %v1678, %v1761
        %v1797 = vadd.f32 %v1679, %v1764
        %v1798 = vadd.f32 %v1680, %v1767
        %v1799 = vadd.f32 %v1681, %v1770
        %v1800 = vadd.f32 %v1682, %v1773
        %v1801 = vadd.f32 %v1683, %v1776
        %v1802 = vadd.f32 %v1684, %v1779
        %v1803 = vadd.f32 %v1685, %v1782
        %v1804 = vadd.f32 %v1686, %v1785
        %v1805 = vadd.f32 %v1687, %v1788
        %s1806 = scalar_lea.vmem [#allocation8], 512
        %v1807 = vld [vmem:[%s1806] sm:$0xff]
        %v1808 = vld [vmem:[%s1806 + $0x8] sm:$0xff]
        %v1809 = vld [vmem:[%s1806 + $0x10] sm:$0xff]
        %v1810 = vld [vmem:[%s1806 + $0x18] sm:$0xff]
        %v1811 = vld [vmem:[%s1806 + $0x20] sm:$0xff]
        %v1812 = vld [vmem:[%s1806 + $0x28] sm:$0xff]
        %v1813 = vld [vmem:[%s1806 + $0x30] sm:$0xff]
        %v1814 = vld [vmem:[%s1806 + $0x38] sm:$0xff]
        %v1815 = vld [vmem:[%s1806 + $0x40] sm:$0xff]
        %v1816 = vld [vmem:[%s1806 + $0x48] sm:$0xff]
        %v1817 = vld [vmem:[%s1806 + $0x50] sm:$0xff]
        %v1818 = vld [vmem:[%s1806 + $0x58] sm:$0xff]
        %v1819 = vld [vmem:[%s1806 + $0x60] sm:$0xff]
        %v1820 = vld [vmem:[%s1806 + $0x68] sm:$0xff]
        %v1821 = vld [vmem:[%s1806 + $0x70] sm:$0xff]
        %v1822 = vld [vmem:[%s1806 + $0x78] sm:$0xff]
        %1823 = vmatpush.msra.mxu0 %v1822
        %1824 = vmatpush.msra.mxu0 %v1821
        %1825 = vmatpush.msra.mxu0 %v1820
        %1826 = vmatpush.msra.mxu0 %v1819
        %1827 = vmatpush.msra.mxu0 %v1818
        %1828 = vmatpush.msra.mxu0 %v1817
        %1829 = vmatpush.msra.mxu0 %v1816
        %1830 = vmatpush.msra.mxu0 %v1815
        %1831 = vmatpush.msra.mxu0 %v1814
        %1832 = vmatpush.msra.mxu0 %v1813
        %1833 = vmatpush.msra.mxu0 %v1812
        %1834 = vmatpush.msra.mxu0 %v1811
        %1835 = vmatpush.msra.mxu0 %v1810
        %1836 = vmatpush.msra.mxu0 %v1809
        %1837 = vmatpush.msra.mxu0 %v1808
        %1838 = vmatpush.msra.mxu0 %v1807
        %1839 = vmatmul.f32.gmra.mxu0 %v1690
        %v1840 = vpop.f32.mrf.mxu0
        %v1841 = vadd.f32 0.0, %v1840
        %1842 = vmatmul.f32.gmra.mxu0 %v1691
        %v1843 = vpop.f32.mrf.mxu0
        %v1844 = vadd.f32 0.0, %v1843
        %1845 = vmatmul.f32.gmra.mxu0 %v1692
        %v1846 = vpop.f32.mrf.mxu0
        %v1847 = vadd.f32 0.0, %v1846
        %1848 = vmatmul.f32.gmra.mxu0 %v1693
        %v1849 = vpop.f32.mrf.mxu0
        %v1850 = vadd.f32 0.0, %v1849
        %1851 = vmatmul.f32.gmra.mxu0 %v1694
        %v1852 = vpop.f32.mrf.mxu0
        %v1853 = vadd.f32 0.0, %v1852
        %1854 = vmatmul.f32.gmra.mxu0 %v1695
        %v1855 = vpop.f32.mrf.mxu0
        %v1856 = vadd.f32 0.0, %v1855
        %1857 = vmatmul.f32.gmra.mxu0 %v1696
        %v1858 = vpop.f32.mrf.mxu0
        %v1859 = vadd.f32 0.0, %v1858
        %1860 = vmatmul.f32.gmra.mxu0 %v1697
        %v1861 = vpop.f32.mrf.mxu0
        %v1862 = vadd.f32 0.0, %v1861
        %1863 = vmatmul.f32.gmra.mxu0 %v1698
        %v1864 = vpop.f32.mrf.mxu0
        %v1865 = vadd.f32 0.0, %v1864
        %1866 = vmatmul.f32.gmra.mxu0 %v1699
        %v1867 = vpop.f32.mrf.mxu0
        %v1868 = vadd.f32 0.0, %v1867
        %1869 = vmatmul.f32.gmra.mxu0 %v1700
        %v1870 = vpop.f32.mrf.mxu0
        %v1871 = vadd.f32 0.0, %v1870
        %1872 = vmatmul.f32.gmra.mxu0 %v1701
        %v1873 = vpop.f32.mrf.mxu0
        %v1874 = vadd.f32 0.0, %v1873
        %1875 = vmatmul.f32.gmra.mxu0 %v1702
        %v1876 = vpop.f32.mrf.mxu0
        %v1877 = vadd.f32 0.0, %v1876
        %1878 = vmatmul.f32.gmra.mxu0 %v1703
        %v1879 = vpop.f32.mrf.mxu0
        %v1880 = vadd.f32 0.0, %v1879
        %1881 = vmatmul.f32.gmra.mxu0 %v1704
        %v1882 = vpop.f32.mrf.mxu0
        %v1883 = vadd.f32 0.0, %v1882
        %1884 = vmatmul.f32.gmra.mxu0 %v1705
        %v1885 = vpop.f32.mrf.mxu0
        %v1886 = vadd.f32 0.0, %v1885
        %1887 = vdwg.mxu0
        %v1888 = vadd.f32 %v1790, %v1841
        %v1889 = vadd.f32 %v1791, %v1844
        %v1890 = vadd.f32 %v1792, %v1847
        %v1891 = vadd.f32 %v1793, %v1850
        %v1892 = vadd.f32 %v1794, %v1853
        %v1893 = vadd.f32 %v1795, %v1856
        %v1894 = vadd.f32 %v1796, %v1859
        %v1895 = vadd.f32 %v1797, %v1862
        %v1896 = vadd.f32 %v1798, %v1865
        %v1897 = vadd.f32 %v1799, %v1868
        %v1898 = vadd.f32 %v1800, %v1871
        %v1899 = vadd.f32 %v1801, %v1874
        %v1900 = vadd.f32 %v1802, %v1877
        %v1901 = vadd.f32 %v1803, %v1880
        %v1902 = vadd.f32 %v1804, %v1883
        %v1903 = vadd.f32 %v1805, %v1886
        %s1904 = scalar_lea.vmem [#allocation8], 896
        %v1905 = vld [vmem:[%s1904] sm:$0xff]
        %v1906 = vld [vmem:[%s1904 + $0x8] sm:$0xff]
        %v1907 = vld [vmem:[%s1904 + $0x10] sm:$0xff]
        %v1908 = vld [vmem:[%s1904 + $0x18] sm:$0xff]
        %v1909 = vld [vmem:[%s1904 + $0x20] sm:$0xff]
        %v1910 = vld [vmem:[%s1904 + $0x28] sm:$0xff]
        %v1911 = vld [vmem:[%s1904 + $0x30] sm:$0xff]
        %v1912 = vld [vmem:[%s1904 + $0x38] sm:$0xff]
        %v1913 = vld [vmem:[%s1904 + $0x40] sm:$0xff]
        %v1914 = vld [vmem:[%s1904 + $0x48] sm:$0xff]
        %v1915 = vld [vmem:[%s1904 + $0x50] sm:$0xff]
        %v1916 = vld [vmem:[%s1904 + $0x58] sm:$0xff]
        %v1917 = vld [vmem:[%s1904 + $0x60] sm:$0xff]
        %v1918 = vld [vmem:[%s1904 + $0x68] sm:$0xff]
        %v1919 = vld [vmem:[%s1904 + $0x70] sm:$0xff]
        %v1920 = vld [vmem:[%s1904 + $0x78] sm:$0xff]
        %1921 = vmatpush.msra.mxu0 %v1920
        %1922 = vmatpush.msra.mxu0 %v1919
        %1923 = vmatpush.msra.mxu0 %v1918
        %1924 = vmatpush.msra.mxu0 %v1917
        %1925 = vmatpush.msra.mxu0 %v1916
        %1926 = vmatpush.msra.mxu0 %v1915
        %1927 = vmatpush.msra.mxu0 %v1914
        %1928 = vmatpush.msra.mxu0 %v1913
        %1929 = vmatpush.msra.mxu0 %v1912
        %1930 = vmatpush.msra.mxu0 %v1911
        %1931 = vmatpush.msra.mxu0 %v1910
        %1932 = vmatpush.msra.mxu0 %v1909
        %1933 = vmatpush.msra.mxu0 %v1908
        %1934 = vmatpush.msra.mxu0 %v1907
        %1935 = vmatpush.msra.mxu0 %v1906
        %1936 = vmatpush.msra.mxu0 %v1905
        %1937 = vmatmul.f32.gmra.mxu0 %v1692
        %v1938 = vpop.f32.mrf.mxu0
        %v1939 = vadd.f32 0.0, %v1938
        %1940 = vmatmul.f32.gmra.mxu0 %v1693
        %v1941 = vpop.f32.mrf.mxu0
        %v1942 = vadd.f32 0.0, %v1941
        %1943 = vmatmul.f32.gmra.mxu0 %v1694
        %v1944 = vpop.f32.mrf.mxu0
        %v1945 = vadd.f32 0.0, %v1944
        %1946 = vmatmul.f32.gmra.mxu0 %v1695
        %v1947 = vpop.f32.mrf.mxu0
        %v1948 = vadd.f32 0.0, %v1947
        %1949 = vmatmul.f32.gmra.mxu0 %v1696
        %v1950 = vpop.f32.mrf.mxu0
        %v1951 = vadd.f32 0.0, %v1950
        %1952 = vmatmul.f32.gmra.mxu0 %v1697
        %v1953 = vpop.f32.mrf.mxu0
        %v1954 = vadd.f32 0.0, %v1953
        %1955 = vmatmul.f32.gmra.mxu0 %v1698
        %v1956 = vpop.f32.mrf.mxu0
        %v1957 = vadd.f32 0.0, %v1956
        %1958 = vmatmul.f32.gmra.mxu0 %v1699
        %v1959 = vpop.f32.mrf.mxu0
        %v1960 = vadd.f32 0.0, %v1959
        %1961 = vmatmul.f32.gmra.mxu0 %v1700
        %v1962 = vpop.f32.mrf.mxu0
        %v1963 = vadd.f32 0.0, %v1962
        %1964 = vmatmul.f32.gmra.mxu0 %v1701
        %v1965 = vpop.f32.mrf.mxu0
        %v1966 = vadd.f32 0.0, %v1965
        %1967 = vmatmul.f32.gmra.mxu0 %v1702
        %v1968 = vpop.f32.mrf.mxu0
        %v1969 = vadd.f32 0.0, %v1968
        %1970 = vmatmul.f32.gmra.mxu0 %v1703
        %v1971 = vpop.f32.mrf.mxu0
        %v1972 = vadd.f32 0.0, %v1971
        %1973 = vmatmul.f32.gmra.mxu0 %v1704
        %v1974 = vpop.f32.mrf.mxu0
        %v1975 = vadd.f32 0.0, %v1974
        %1976 = vmatmul.f32.gmra.mxu0 %v1705
        %v1977 = vpop.f32.mrf.mxu0
        %v1978 = vadd.f32 0.0, %v1977
        %1979 = vmatmul.f32.gmra.mxu0 %v1706
        %v1980 = vpop.f32.mrf.mxu0
        %v1981 = vadd.f32 0.0, %v1980
        %1982 = vmatmul.f32.gmra.mxu0 %v1707
        %v1983 = vpop.f32.mrf.mxu0
        %v1984 = vadd.f32 0.0, %v1983
        %1985 = vdwg.mxu0
        %v1986 = vadd.f32 %v1888, %v1939
        %v1987 = vadd.f32 %v1889, %v1942
        %v1988 = vadd.f32 %v1890, %v1945
        %v1989 = vadd.f32 %v1891, %v1948
        %v1990 = vadd.f32 %v1892, %v1951
        %v1991 = vadd.f32 %v1893, %v1954
        %v1992 = vadd.f32 %v1894, %v1957
        %v1993 = vadd.f32 %v1895, %v1960
        %v1994 = vadd.f32 %v1896, %v1963
        %v1995 = vadd.f32 %v1897, %v1966
        %v1996 = vadd.f32 %v1898, %v1969
        %v1997 = vadd.f32 %v1899, %v1972
        %v1998 = vadd.f32 %v1900, %v1975
        %v1999 = vadd.f32 %v1901, %v1978
        %v2000 = vadd.f32 %v1902, %v1981
        %v2001 = vadd.f32 %v1903, %v1984
        %v2002 = vld [vmem:[#allocation3 + $0x9] sm:$0xff]
        %v2003 = vld [vmem:[#allocation3 + $0x11] sm:$0xff]
        %v2004 = vld [vmem:[#allocation3 + $0x29] sm:$0xff]
        %v2005 = vld [vmem:[#allocation3 + $0x31] sm:$0xff]
        %v2006 = vld [vmem:[#allocation3 + $0x49] sm:$0xff]
        %v2007 = vld [vmem:[#allocation3 + $0x51] sm:$0xff]
        %v2008 = vld [vmem:[#allocation3 + $0x69] sm:$0xff]
        %v2009 = vld [vmem:[#allocation3 + $0x71] sm:$0xff]
        %v2010 = vld [vmem:[#allocation3 + $0x89] sm:$0xff]
        %v2011 = vld [vmem:[#allocation3 + $0x91] sm:$0xff]
        %v2012 = vld [vmem:[#allocation3 + $0xa9] sm:$0xff]
        %v2013 = vld [vmem:[#allocation3 + $0xb1] sm:$0xff]
        %v2014 = vld [vmem:[#allocation3 + $0xc9] sm:$0xff]
        %v2015 = vld [vmem:[#allocation3 + $0xd1] sm:$0xff]
        %v2016 = vld [vmem:[#allocation3 + $0xe9] sm:$0xff]
        %v2017 = vld [vmem:[#allocation3 + $0xf1] sm:$0xff]
        %v2018 = vld [vmem:[#allocation3 + $0x109] sm:$0xff]
        %v2019 = vld [vmem:[#allocation3 + $0x111] sm:$0xff]
        %v2020 = vld [vmem:[#allocation3 + $0x129] sm:$0xff]
        %v2021 = vld [vmem:[#allocation3 + $0x131] sm:$0xff]
        %s2022 = scalar_lea.vmem [#allocation8], 256
        %v2023 = vld [vmem:[%s2022] sm:$0xff]
        %v2024 = vld [vmem:[%s2022 + $0x8] sm:$0xff]
        %v2025 = vld [vmem:[%s2022 + $0x10] sm:$0xff]
        %v2026 = vld [vmem:[%s2022 + $0x18] sm:$0xff]
        %v2027 = vld [vmem:[%s2022 + $0x20] sm:$0xff]
        %v2028 = vld [vmem:[%s2022 + $0x28] sm:$0xff]
        %v2029 = vld [vmem:[%s2022 + $0x30] sm:$0xff]
        %v2030 = vld [vmem:[%s2022 + $0x38] sm:$0xff]
        %v2031 = vld [vmem:[%s2022 + $0x40] sm:$0xff]
        %v2032 = vld [vmem:[%s2022 + $0x48] sm:$0xff]
        %v2033 = vld [vmem:[%s2022 + $0x50] sm:$0xff]
        %v2034 = vld [vmem:[%s2022 + $0x58] sm:$0xff]
        %v2035 = vld [vmem:[%s2022 + $0x60] sm:$0xff]
        %v2036 = vld [vmem:[%s2022 + $0x68] sm:$0xff]
        %v2037 = vld [vmem:[%s2022 + $0x70] sm:$0xff]
        %v2038 = vld [vmem:[%s2022 + $0x78] sm:$0xff]
        %2039 = vmatpush.msra.mxu0 %v2038
        %2040 = vmatpush.msra.mxu0 %v2037
        %2041 = vmatpush.msra.mxu0 %v2036
        %2042 = vmatpush.msra.mxu0 %v2035
        %2043 = vmatpush.msra.mxu0 %v2034
        %2044 = vmatpush.msra.mxu0 %v2033
        %2045 = vmatpush.msra.mxu0 %v2032
        %2046 = vmatpush.msra.mxu0 %v2031
        %2047 = vmatpush.msra.mxu0 %v2030
        %2048 = vmatpush.msra.mxu0 %v2029
        %2049 = vmatpush.msra.mxu0 %v2028
        %2050 = vmatpush.msra.mxu0 %v2027
        %2051 = vmatpush.msra.mxu0 %v2026
        %2052 = vmatpush.msra.mxu0 %v2025
        %2053 = vmatpush.msra.mxu0 %v2024
        %2054 = vmatpush.msra.mxu0 %v2023
        %2055 = vmatmul.f32.gmra.mxu0 %v2002
        %v2056 = vpop.f32.mrf.mxu0
        %v2057 = vadd.f32 0.0, %v2056
        %2058 = vmatmul.f32.gmra.mxu0 %v2003
        %v2059 = vpop.f32.mrf.mxu0
        %v2060 = vadd.f32 0.0, %v2059
        %2061 = vmatmul.f32.gmra.mxu0 %v2004
        %v2062 = vpop.f32.mrf.mxu0
        %v2063 = vadd.f32 0.0, %v2062
        %2064 = vmatmul.f32.gmra.mxu0 %v2005
        %v2065 = vpop.f32.mrf.mxu0
        %v2066 = vadd.f32 0.0, %v2065
        %2067 = vmatmul.f32.gmra.mxu0 %v2006
        %v2068 = vpop.f32.mrf.mxu0
        %v2069 = vadd.f32 0.0, %v2068
        %2070 = vmatmul.f32.gmra.mxu0 %v2007
        %v2071 = vpop.f32.mrf.mxu0
        %v2072 = vadd.f32 0.0, %v2071
        %2073 = vmatmul.f32.gmra.mxu0 %v2008
        %v2074 = vpop.f32.mrf.mxu0
        %v2075 = vadd.f32 0.0, %v2074
        %2076 = vmatmul.f32.gmra.mxu0 %v2009
        %v2077 = vpop.f32.mrf.mxu0
        %v2078 = vadd.f32 0.0, %v2077
        %2079 = vmatmul.f32.gmra.mxu0 %v2010
        %v2080 = vpop.f32.mrf.mxu0
        %v2081 = vadd.f32 0.0, %v2080
        %2082 = vmatmul.f32.gmra.mxu0 %v2011
        %v2083 = vpop.f32.mrf.mxu0
        %v2084 = vadd.f32 0.0, %v2083
        %2085 = vmatmul.f32.gmra.mxu0 %v2012
        %v2086 = vpop.f32.mrf.mxu0
        %v2087 = vadd.f32 0.0, %v2086
        %2088 = vmatmul.f32.gmra.mxu0 %v2013
        %v2089 = vpop.f32.mrf.mxu0
        %v2090 = vadd.f32 0.0, %v2089
        %2091 = vmatmul.f32.gmra.mxu0 %v2014
        %v2092 = vpop.f32.mrf.mxu0
        %v2093 = vadd.f32 0.0, %v2092
        %2094 = vmatmul.f32.gmra.mxu0 %v2015
        %v2095 = vpop.f32.mrf.mxu0
        %v2096 = vadd.f32 0.0, %v2095
        %2097 = vmatmul.f32.gmra.mxu0 %v2016
        %v2098 = vpop.f32.mrf.mxu0
        %v2099 = vadd.f32 0.0, %v2098
        %2100 = vmatmul.f32.gmra.mxu0 %v2017
        %v2101 = vpop.f32.mrf.mxu0
        %v2102 = vadd.f32 0.0, %v2101
        %2103 = vdwg.mxu0
        %v2104 = vadd.f32 %v1986, %v2057
        %v2105 = vadd.f32 %v1987, %v2060
        %v2106 = vadd.f32 %v1988, %v2063
        %v2107 = vadd.f32 %v1989, %v2066
        %v2108 = vadd.f32 %v1990, %v2069
        %v2109 = vadd.f32 %v1991, %v2072
        %v2110 = vadd.f32 %v1992, %v2075
        %v2111 = vadd.f32 %v1993, %v2078
        %v2112 = vadd.f32 %v1994, %v2081
        %v2113 = vadd.f32 %v1995, %v2084
        %v2114 = vadd.f32 %v1996, %v2087
        %v2115 = vadd.f32 %v1997, %v2090
        %v2116 = vadd.f32 %v1998, %v2093
        %v2117 = vadd.f32 %v1999, %v2096
        %v2118 = vadd.f32 %v2000, %v2099
        %v2119 = vadd.f32 %v2001, %v2102
        %s2120 = scalar_lea.vmem [#allocation8], 640
        %v2121 = vld [vmem:[%s2120] sm:$0xff]
        %v2122 = vld [vmem:[%s2120 + $0x8] sm:$0xff]
        %v2123 = vld [vmem:[%s2120 + $0x10] sm:$0xff]
        %v2124 = vld [vmem:[%s2120 + $0x18] sm:$0xff]
        %v2125 = vld [vmem:[%s2120 + $0x20] sm:$0xff]
        %v2126 = vld [vmem:[%s2120 + $0x28] sm:$0xff]
        %v2127 = vld [vmem:[%s2120 + $0x30] sm:$0xff]
        %v2128 = vld [vmem:[%s2120 + $0x38] sm:$0xff]
        %v2129 = vld [vmem:[%s2120 + $0x40] sm:$0xff]
        %v2130 = vld [vmem:[%s2120 + $0x48] sm:$0xff]
        %v2131 = vld [vmem:[%s2120 + $0x50] sm:$0xff]
        %v2132 = vld [vmem:[%s2120 + $0x58] sm:$0xff]
        %v2133 = vld [vmem:[%s2120 + $0x60] sm:$0xff]
        %v2134 = vld [vmem:[%s2120 + $0x68] sm:$0xff]
        %v2135 = vld [vmem:[%s2120 + $0x70] sm:$0xff]
        %v2136 = vld [vmem:[%s2120 + $0x78] sm:$0xff]
        %2137 = vmatpush.msra.mxu0 %v2136
        %2138 = vmatpush.msra.mxu0 %v2135
        %2139 = vmatpush.msra.mxu0 %v2134
        %2140 = vmatpush.msra.mxu0 %v2133
        %2141 = vmatpush.msra.mxu0 %v2132
        %2142 = vmatpush.msra.mxu0 %v2131
        %2143 = vmatpush.msra.mxu0 %v2130
        %2144 = vmatpush.msra.mxu0 %v2129
        %2145 = vmatpush.msra.mxu0 %v2128
        %2146 = vmatpush.msra.mxu0 %v2127
        %2147 = vmatpush.msra.mxu0 %v2126
        %2148 = vmatpush.msra.mxu0 %v2125
        %2149 = vmatpush.msra.mxu0 %v2124
        %2150 = vmatpush.msra.mxu0 %v2123
        %2151 = vmatpush.msra.mxu0 %v2122
        %2152 = vmatpush.msra.mxu0 %v2121
        %2153 = vmatmul.f32.gmra.mxu0 %v2004
        %v2154 = vpop.f32.mrf.mxu0
        %v2155 = vadd.f32 0.0, %v2154
        %2156 = vmatmul.f32.gmra.mxu0 %v2005
        %v2157 = vpop.f32.mrf.mxu0
        %v2158 = vadd.f32 0.0, %v2157
        %2159 = vmatmul.f32.gmra.mxu0 %v2006
        %v2160 = vpop.f32.mrf.mxu0
        %v2161 = vadd.f32 0.0, %v2160
        %2162 = vmatmul.f32.gmra.mxu0 %v2007
        %v2163 = vpop.f32.mrf.mxu0
        %v2164 = vadd.f32 0.0, %v2163
        %2165 = vmatmul.f32.gmra.mxu0 %v2008
        %v2166 = vpop.f32.mrf.mxu0
        %v2167 = vadd.f32 0.0, %v2166
        %2168 = vmatmul.f32.gmra.mxu0 %v2009
        %v2169 = vpop.f32.mrf.mxu0
        %v2170 = vadd.f32 0.0, %v2169
        %2171 = vmatmul.f32.gmra.mxu0 %v2010
        %v2172 = vpop.f32.mrf.mxu0
        %v2173 = vadd.f32 0.0, %v2172
        %2174 = vmatmul.f32.gmra.mxu0 %v2011
        %v2175 = vpop.f32.mrf.mxu0
        %v2176 = vadd.f32 0.0, %v2175
        %2177 = vmatmul.f32.gmra.mxu0 %v2012
        %v2178 = vpop.f32.mrf.mxu0
        %v2179 = vadd.f32 0.0, %v2178
        %2180 = vmatmul.f32.gmra.mxu0 %v2013
        %v2181 = vpop.f32.mrf.mxu0
        %v2182 = vadd.f32 0.0, %v2181
        %2183 = vmatmul.f32.gmra.mxu0 %v2014
        %v2184 = vpop.f32.mrf.mxu0
        %v2185 = vadd.f32 0.0, %v2184
        %2186 = vmatmul.f32.gmra.mxu0 %v2015
        %v2187 = vpop.f32.mrf.mxu0
        %v2188 = vadd.f32 0.0, %v2187
        %2189 = vmatmul.f32.gmra.mxu0 %v2016
        %v2190 = vpop.f32.mrf.mxu0
        %v2191 = vadd.f32 0.0, %v2190
        %2192 = vmatmul.f32.gmra.mxu0 %v2017
        %v2193 = vpop.f32.mrf.mxu0
        %v2194 = vadd.f32 0.0, %v2193
        %2195 = vmatmul.f32.gmra.mxu0 %v2018
        %v2196 = vpop.f32.mrf.mxu0
        %v2197 = vadd.f32 0.0, %v2196
        %2198 = vmatmul.f32.gmra.mxu0 %v2019
        %v2199 = vpop.f32.mrf.mxu0
        %v2200 = vadd.f32 0.0, %v2199
        %2201 = vdwg.mxu0
        %v2202 = vadd.f32 %v2104, %v2155
        %v2203 = vadd.f32 %v2105, %v2158
        %v2204 = vadd.f32 %v2106, %v2161
        %v2205 = vadd.f32 %v2107, %v2164
        %v2206 = vadd.f32 %v2108, %v2167
        %v2207 = vadd.f32 %v2109, %v2170
        %v2208 = vadd.f32 %v2110, %v2173
        %v2209 = vadd.f32 %v2111, %v2176
        %v2210 = vadd.f32 %v2112, %v2179
        %v2211 = vadd.f32 %v2113, %v2182
        %v2212 = vadd.f32 %v2114, %v2185
        %v2213 = vadd.f32 %v2115, %v2188
        %v2214 = vadd.f32 %v2116, %v2191
        %v2215 = vadd.f32 %v2117, %v2194
        %v2216 = vadd.f32 %v2118, %v2197
        %v2217 = vadd.f32 %v2119, %v2200
        %s2218 = scalar_lea.vmem [#allocation8], 1024
        %v2219 = vld [vmem:[%s2218] sm:$0xff]
        %v2220 = vld [vmem:[%s2218 + $0x8] sm:$0xff]
        %v2221 = vld [vmem:[%s2218 + $0x10] sm:$0xff]
        %v2222 = vld [vmem:[%s2218 + $0x18] sm:$0xff]
        %v2223 = vld [vmem:[%s2218 + $0x20] sm:$0xff]
        %v2224 = vld [vmem:[%s2218 + $0x28] sm:$0xff]
        %v2225 = vld [vmem:[%s2218 + $0x30] sm:$0xff]
        %v2226 = vld [vmem:[%s2218 + $0x38] sm:$0xff]
        %v2227 = vld [vmem:[%s2218 + $0x40] sm:$0xff]
        %v2228 = vld [vmem:[%s2218 + $0x48] sm:$0xff]
        %v2229 = vld [vmem:[%s2218 + $0x50] sm:$0xff]
        %v2230 = vld [vmem:[%s2218 + $0x58] sm:$0xff]
        %v2231 = vld [vmem:[%s2218 + $0x60] sm:$0xff]
        %v2232 = vld [vmem:[%s2218 + $0x68] sm:$0xff]
        %v2233 = vld [vmem:[%s2218 + $0x70] sm:$0xff]
        %v2234 = vld [vmem:[%s2218 + $0x78] sm:$0xff]
        %2235 = vmatpush.msra.mxu0 %v2234
        %2236 = vmatpush.msra.mxu0 %v2233
        %2237 = vmatpush.msra.mxu0 %v2232
        %2238 = vmatpush.msra.mxu0 %v2231
        %2239 = vmatpush.msra.mxu0 %v2230
        %2240 = vmatpush.msra.mxu0 %v2229
        %2241 = vmatpush.msra.mxu0 %v2228
        %2242 = vmatpush.msra.mxu0 %v2227
        %2243 = vmatpush.msra.mxu0 %v2226
        %2244 = vmatpush.msra.mxu0 %v2225
        %2245 = vmatpush.msra.mxu0 %v2224
        %2246 = vmatpush.msra.mxu0 %v2223
        %2247 = vmatpush.msra.mxu0 %v2222
        %2248 = vmatpush.msra.mxu0 %v2221
        %2249 = vmatpush.msra.mxu0 %v2220
        %2250 = vmatpush.msra.mxu0 %v2219
        %2251 = vmatmul.f32.gmra.mxu0 %v2006
        %v2252 = vpop.f32.mrf.mxu0
        %v2253 = vadd.f32 0.0, %v2252
        %2254 = vmatmul.f32.gmra.mxu0 %v2007
        %v2255 = vpop.f32.mrf.mxu0
        %v2256 = vadd.f32 0.0, %v2255
        %2257 = vmatmul.f32.gmra.mxu0 %v2008
        %v2258 = vpop.f32.mrf.mxu0
        %v2259 = vadd.f32 0.0, %v2258
        %2260 = vmatmul.f32.gmra.mxu0 %v2009
        %v2261 = vpop.f32.mrf.mxu0
        %v2262 = vadd.f32 0.0, %v2261
        %2263 = vmatmul.f32.gmra.mxu0 %v2010
        %v2264 = vpop.f32.mrf.mxu0
        %v2265 = vadd.f32 0.0, %v2264
        %2266 = vmatmul.f32.gmra.mxu0 %v2011
        %v2267 = vpop.f32.mrf.mxu0
        %v2268 = vadd.f32 0.0, %v2267
        %2269 = vmatmul.f32.gmra.mxu0 %v2012
        %v2270 = vpop.f32.mrf.mxu0
        %v2271 = vadd.f32 0.0, %v2270
        %2272 = vmatmul.f32.gmra.mxu0 %v2013
        %v2273 = vpop.f32.mrf.mxu0
        %v2274 = vadd.f32 0.0, %v2273
        %2275 = vmatmul.f32.gmra.mxu0 %v2014
        %v2276 = vpop.f32.mrf.mxu0
        %v2277 = vadd.f32 0.0, %v2276
        %2278 = vmatmul.f32.gmra.mxu0 %v2015
        %v2279 = vpop.f32.mrf.mxu0
        %v2280 = vadd.f32 0.0, %v2279
        %2281 = vmatmul.f32.gmra.mxu0 %v2016
        %v2282 = vpop.f32.mrf.mxu0
        %v2283 = vadd.f32 0.0, %v2282
        %2284 = vmatmul.f32.gmra.mxu0 %v2017
        %v2285 = vpop.f32.mrf.mxu0
        %v2286 = vadd.f32 0.0, %v2285
        %2287 = vmatmul.f32.gmra.mxu0 %v2018
        %v2288 = vpop.f32.mrf.mxu0
        %v2289 = vadd.f32 0.0, %v2288
        %2290 = vmatmul.f32.gmra.mxu0 %v2019
        %v2291 = vpop.f32.mrf.mxu0
        %v2292 = vadd.f32 0.0, %v2291
        %2293 = vmatmul.f32.gmra.mxu0 %v2020
        %v2294 = vpop.f32.mrf.mxu0
        %v2295 = vadd.f32 0.0, %v2294
        %2296 = vmatmul.f32.gmra.mxu0 %v2021
        %v2297 = vpop.f32.mrf.mxu0
        %v2298 = vadd.f32 0.0, %v2297
        %2299 = vdwg.mxu0
        %v2300 = vadd.f32 %v2202, %v2253
        %v2301 = vadd.f32 %v2203, %v2256
        %v2302 = vadd.f32 %v2204, %v2259
        %v2303 = vadd.f32 %v2205, %v2262
        %v2304 = vadd.f32 %v2206, %v2265
        %v2305 = vadd.f32 %v2207, %v2268
        %v2306 = vadd.f32 %v2208, %v2271
        %v2307 = vadd.f32 %v2209, %v2274
        %v2308 = vadd.f32 %v2210, %v2277
        %v2309 = vadd.f32 %v2211, %v2280
        %v2310 = vadd.f32 %v2212, %v2283
        %v2311 = vadd.f32 %v2213, %v2286
        %v2312 = vadd.f32 %v2214, %v2289
        %v2313 = vadd.f32 %v2215, %v2292
        %v2314 = vadd.f32 %v2216, %v2295
        %v2315 = vadd.f32 %v2217, %v2298
        %v2317 = vperm.slane %v249, 0
        %v2319 = vadd.f32 %v2300, %v2317
        %v2320 = vadd.f32 %v2301, %v2317
        %v2321 = vadd.f32 %v2302, %v2317
        %v2322 = vadd.f32 %v2303, %v2317
        %v2323 = vadd.f32 %v2304, %v2317
        %v2324 = vadd.f32 %v2305, %v2317
        %v2325 = vadd.f32 %v2306, %v2317
        %v2326 = vadd.f32 %v2307, %v2317
        %v2327 = vadd.f32 %v2308, %v2317
        %v2328 = vadd.f32 %v2309, %v2317
        %v2329 = vadd.f32 %v2310, %v2317
        %v2330 = vadd.f32 %v2311, %v2317
        %v2331 = vadd.f32 %v2312, %v2317
        %v2332 = vadd.f32 %v2313, %v2317
        %v2333 = vadd.f32 %v2314, %v2317
        %v2334 = vadd.f32 %v2315, %v2317
        %v2335 = vmul.f32 %v2319, 0.5
        %v2336 = vmul.f32 %v2320, 0.5
        %v2337 = vmul.f32 %v2321, 0.5
        %v2338 = vmul.f32 %v2322, 0.5
        %v2339 = vmul.f32 %v2323, 0.5
        %v2340 = vmul.f32 %v2324, 0.5
        %v2341 = vmul.f32 %v2325, 0.5
        %v2342 = vmul.f32 %v2326, 0.5
        %v2343 = vmul.f32 %v2327, 0.5
        %v2344 = vmul.f32 %v2328, 0.5
        %v2345 = vmul.f32 %v2329, 0.5
        %v2346 = vmul.f32 %v2330, 0.5
        %v2347 = vmul.f32 %v2331, 0.5
        %v2348 = vmul.f32 %v2332, 0.5
        %v2349 = vmul.f32 %v2333, 0.5
        %v2350 = vmul.f32 %v2334, 0.5
        %s2351 = scalar_lea.vmem [#allocation2], 64
        %v2352 = vld [vmem:[%s2351 + $0x8] sm:$0xff]
        %v2353 = vld [vmem:[%s2351 + $0x10] sm:$0xff]
        %v2354 = vld [vmem:[%s2351 + $0x28] sm:$0xff]
        %v2355 = vld [vmem:[%s2351 + $0x30] sm:$0xff]
        %v2356 = vld [vmem:[%s2351 + $0x48] sm:$0xff]
        %v2357 = vld [vmem:[%s2351 + $0x50] sm:$0xff]
        %v2358 = vld [vmem:[%s2351 + $0x68] sm:$0xff]
        %v2359 = vld [vmem:[%s2351 + $0x70] sm:$0xff]
        %v2360 = vld [vmem:[%s2351 + $0x88] sm:$0xff]
        %v2361 = vld [vmem:[%s2351 + $0x90] sm:$0xff]
        %v2362 = vld [vmem:[%s2351 + $0xa8] sm:$0xff]
        %v2363 = vld [vmem:[%s2351 + $0xb0] sm:$0xff]
        %v2364 = vld [vmem:[%s2351 + $0xc8] sm:$0xff]
        %v2365 = vld [vmem:[%s2351 + $0xd0] sm:$0xff]
        %v2366 = vld [vmem:[%s2351 + $0xe8] sm:$0xff]
        %v2367 = vld [vmem:[%s2351 + $0xf0] sm:$0xff]
        %v2368 = vadd.f32 %v2335, %v2352
        %v2369 = vadd.f32 %v2336, %v2353
        %v2370 = vadd.f32 %v2337, %v2354
        %v2371 = vadd.f32 %v2338, %v2355
        %v2372 = vadd.f32 %v2339, %v2356
        %v2373 = vadd.f32 %v2340, %v2357
        %v2374 = vadd.f32 %v2341, %v2358
        %v2375 = vadd.f32 %v2342, %v2359
        %v2376 = vadd.f32 %v2343, %v2360
        %v2377 = vadd.f32 %v2344, %v2361
        %v2378 = vadd.f32 %v2345, %v2362
        %v2379 = vadd.f32 %v2346, %v2363
        %v2380 = vadd.f32 %v2347, %v2364
        %v2381 = vadd.f32 %v2348, %v2365
        %v2382 = vadd.f32 %v2349, %v2366
        %v2383 = vadd.f32 %v2350, %v2367
        %2384 = vst [vmem:[%s224] sm:$0xff] %v2368
        %2385 = vst [vmem:[%s224 + $0x8] sm:$0xff] %v2369
        %2386 = vst [vmem:[%s224 + $0x10] sm:$0xff] %v2370
        %2387 = vst [vmem:[%s224 + $0x18] sm:$0xff] %v2371
        %2388 = vst [vmem:[%s224 + $0x20] sm:$0xff] %v2372
        %2389 = vst [vmem:[%s224 + $0x28] sm:$0xff] %v2373
        %2390 = vst [vmem:[%s224 + $0x30] sm:$0xff] %v2374
        %2391 = vst [vmem:[%s224 + $0x38] sm:$0xff] %v2375
        %2392 = vst [vmem:[%s224 + $0x40] sm:$0xff] %v2376
        %2393 = vst [vmem:[%s224 + $0x48] sm:$0xff] %v2377
        %2394 = vst [vmem:[%s224 + $0x50] sm:$0xff] %v2378
        %2395 = vst [vmem:[%s224 + $0x58] sm:$0xff] %v2379
        %2396 = vst [vmem:[%s224 + $0x60] sm:$0xff] %v2380
        %2397 = vst [vmem:[%s224 + $0x68] sm:$0xff] %v2381
        %2398 = vst [vmem:[%s224 + $0x70] sm:$0xff] %v2382
        %2399 = vst [vmem:[%s224 + $0x78] sm:$0xff] %v2383
        %s2400 = sand.u32 %s127, 1
        %s2401 = scalar_lea.sflag [#allocation7], %s2400
        %s2402 = sand.u32 %s127, 1
        %s2403 = smul.addr %s2402, 128
        %s2404 = scalar_lea.vmem [#allocation10], %s2403
        // Predicated region
        $region57: #{tpu_custom_call.1} parent=35 // pred_check
          %p2405 = pneg %p137
        $region58: #{tpu_custom_call.1} parent=35 // pred_check_branch
          %2407 = sbr.rel (%p2405) target = $region60
        $region59: #{tpu_custom_call.1} parent=35 // pred_region
          %s2408 = smul.u32 8, %s26
          %2410 = vsyncadd %s2401, 0
          %s2411 = smul.addr %s2408, 2
          %s2412 = smul.addr %s25, 32
          %s2413 = sadd.s32 %s2411, %s2412
          %s2414 = smul.addr %s2413, 8
          %s2415 = scalar_lea.hbm %s5, %s2414
          %s2416 = sshll.u32 %s2404, 4
          %s2417 = int_to_ptr.vmem [resolvable:$true] %s2416
          %s2418 = sshll.u32 %s2415, 4
          %s2419 = int_to_ptr.hbm [resolvable:$true] %s2418
          %2424 = dma.vmem_to_hbm [thread:$0]  %s2417, 2048, %s2419, %s2401, 128, 128, 8
        $region60: #{tpu_custom_call.1} parent=35 // pred_fallthru
          _
      $region36: #{tpu_custom_call.1} parent=5 // pred_fallthru
        _
      %p2425 = scmp.le.s32.totalorder 2, %s16
      // Predicated region
      $region61: #{tpu_custom_call.1} parent=5 // pred_check
        %p2426 = pneg %p2425
      $region62: #{tpu_custom_call.1} parent=5 // pred_check_branch
        %2428 = sbr.rel (%p2426) target = $region64
      $region63: #{tpu_custom_call.1} parent=5 // pred_region
        %s2429 = ssub.s32 %s16, 2
        // Predicated region
        $region65: #{tpu_custom_call.1} parent=63 // pred_check
          %p2430 = pneg %p143
        $region66: #{tpu_custom_call.1} parent=63 // pred_check_branch
          %2432 = sbr.rel (%p2430) target = $region68
        $region67: #{tpu_custom_call.1} parent=63 // pred_region
          %s2433 = sand.u32 %s128, 1
          %s2434 = scalar_lea.sflag [#allocation7], %s2433
          %s2435 = sand.u32 %s128, 1
          %s2436 = smul.addr %s2435, 128
          %s2437 = scalar_lea.vmem [#allocation10], %s2436
          %2439 = dma.done %s2434, 2048
        $region68: #{tpu_custom_call.1} parent=63 // pred_fallthru
          _
      $region64: #{tpu_custom_call.1} parent=5 // pred_fallthru
        _
    $region6: #{tpu_custom_call.1} parent=1 // loop_footer
      %s20 = sadd.s32 1, %s16
    $region7: #{tpu_custom_call.1} parent=1 // loop_footer_branch
      %15 = sbr.rel target = $region3
    $region8: #{tpu_custom_call.1} parent=1 // loop_exit
      _
    %2440 = vsyncpa [#allocation6], 1
    %s2441 = scalar_lea.sflag [#allocation6], 1
    %2442 = vsyncpa %s2441, 1
    %2443 = vsyncpa [#allocation9], 1
    %2444 = vsyncpa [#allocation7], 1
    %s2445 = scalar_lea.sflag [#allocation7], 1
    %2446 = vsyncpa %s2445, 1
  %2447 = vsyncmov [#allocation4]
  %s2448 = vpop.sfrf %2447
  %p2449 = scmp.eq.s32.totalorder %s2448, 0
  %p2450 = pneg %p2449
  %2452 = shalt.err (%p2450)

</llo_original>
